<compile_context>
chip_gen: v7x
topology: tpu7x:2x2x1
jax: 0.10.0
libtpu: 0.0.40
codegen_flags: <defaults>
</compile_context>

<pallas_src>
import math

import jax
import jax.numpy as jnp
from jax.experimental import pallas as pl
from jax.experimental.pallas import tpu as pltpu


# ----------------------------- model hyper-params (small demo sizes) ----------
B = 2          # batch
S = 8          # sequence length
H = 32         # hidden size          (bert_hidden_size, scaled down from 768)
NH = 4         # attention heads
DH = H // NH   # head dim
I = 4 * H      # FFN intermediate size
L = 2          # number of transformer layers
V = 100        # vocab size
P = 16         # max position embeddings
T = 2          # token type vocab
LN_EPS = 1e-12


# ----------------------------- in-kernel helpers --------------------------------
def _mm(a, b):
    """MXU matmul: bf16 operands, f32 accumulation (native on v5e/v6e/v7x)."""
    return jnp.dot(a.astype(jnp.bfloat16), b.astype(jnp.bfloat16),
                   preferred_element_type=jnp.float32)


def _mm_kt(q, k):
    """q @ k^T without materializing a transpose (contract last dims)."""
    return jnp.einsum('qd,kd->qk', q.astype(jnp.bfloat16), k.astype(jnp.bfloat16),
                      preferred_element_type=jnp.float32)


def _layernorm(x, g, b, eps=LN_EPS):
    """Row-wise LayerNorm over the hidden axis, all in f32 (VPU/EUP)."""
    mu = jnp.mean(x, axis=-1, keepdims=True)
    var = jnp.mean(jnp.square(x - mu), axis=-1, keepdims=True)
    return (x - mu) * jax.lax.rsqrt(var + eps) * g + b


def _gelu_tanh(x):
    # tanh approximation of GELU (EUP tanh); kept in f32.
    c = math.sqrt(2.0 / math.pi)
    return 0.5 * x * (1.0 + jnp.tanh(c * (x + 0.044715 * x * x * x)))


# ----------------------------- the fused encoder kernel -------------------------
def _encoder_kernel(x_ref, kbias_ref, eg_ref, eb_ref,
                    wqkv_ref, bqkv_ref, wo_ref, bo_ref,
                    ln1g_ref, ln1b_ref, w1_ref, b1_ref, w2_ref, b2_ref,
                    ln2g_ref, ln2b_ref, pw_ref, pb_ref, o_ref):
    """One batch element per grid step: full BERT encoder + pooler in VMEM."""
    scale = 1.0 / math.sqrt(DH)

    x = x_ref[0]          # (S, H)  summed embeddings for this batch element
    kbias = kbias_ref[0]  # (1, S)  HF-style additive key mask bias

    # --- embedding LayerNorm ---
    x = _layernorm(x, eg_ref[...], eb_ref[...])

    # --- transformer layers (static unroll; all weights already VMEM-resident) ---
    for l in range(L):
        # Multi-head self-attention, fully fused.  Heads are handled as per-head
        # weight blocks (ref indexing on leading dims) so the kernel needs no
        # concat / transpose / unaligned lane slicing.
        attn = jnp.zeros(x.shape, jnp.float32)
        for h in range(NH):
            q_h = _mm(x, wqkv_ref[l, h]) + bqkv_ref[l, h]                    # (S, DH)
            k_h = _mm(x, wqkv_ref[l, NH + h]) + bqkv_ref[l, NH + h]          # (S, DH)
            v_h = _mm(x, wqkv_ref[l, 2 * NH + h]) + bqkv_ref[l, 2 * NH + h]  # (S, DH)

            s = _mm_kt(q_h, k_h) * scale + kbias                             # (S, S) f32
            s_max = jnp.max(s, axis=-1, keepdims=True)
            p = jnp.exp(s - s_max)
            p = p * pl.reciprocal(jnp.sum(p, axis=-1, keepdims=True), approx=True)

            ctx_h = _mm(p, v_h)                                              # (S, DH)
            # fold output projection into the same kernel: sum_h ctx_h @ Wo[h]
            attn = attn + _mm(ctx_h, wo_ref[l, h])                           # (S, H)
        attn = attn + bo_ref[l]
        x = _layernorm(x + attn, ln1g_ref[l], ln1b_ref[l])

        # Feed-forward (GELU) + residual + LayerNorm.
        ff = _gelu_tanh(_mm(x, w1_ref[l]) + b1_ref[l])                       # (S, I)
        ff = _mm(ff, w2_ref[l]) + b2_ref[l]                                  # (S, H)
        x = _layernorm(x + ff, ln2g_ref[l], ln2b_ref[l])

    # --- pooler: tanh(dense(CLS token)) ---
    cls = x[0:1, :]                                                          # (1, H)
    pooled = jnp.tanh(_mm(cls, pw_ref[...]) + pb_ref[...])                   # (1, H)
    o_ref[0] = pooled.astype(o_ref.dtype)


# ----------------------------- parameter construction ---------------------------
def init_params(key):
    std = 0.02
    ks = iter(jax.random.split(key, 32))

    def w(shape):
        return jax.random.normal(next(ks), shape, jnp.float32) * std

    return {
        'word_emb': w((V, H)),
        'pos_emb': w((P, H)),
        'type_emb': w((T, H)),
        'emb_ln_g': jnp.ones((1, H), jnp.float32),
        'emb_ln_b': jnp.zeros((1, H), jnp.float32),
        # fused QKV weights, per-head blocks: [q heads | k heads | v heads]
        'wqkv': w((L, 3 * NH, H, DH)),
        'bqkv': jnp.zeros((L, 3 * NH, 1, DH), jnp.float32),
        'wo':   w((L, NH, DH, H)),          # attention output proj, per-head rows
        'bo':   jnp.zeros((L, 1, H), jnp.float32),
        'ln1_g': jnp.ones((L, 1, H), jnp.float32),
        'ln1_b': jnp.zeros((L, 1, H), jnp.float32),
        'w1':   w((L, H, I)),
        'b1':   jnp.zeros((L, 1, I), jnp.float32),
        'w2':   w((L, I, H)),
        'b2':   jnp.zeros((L, 1, H), jnp.float32),
        'ln2_g': jnp.ones((L, 1, H), jnp.float32),
        'ln2_b': jnp.zeros((L, 1, H), jnp.float32),
        'pool_w': w((H, H)),
        'pool_b': jnp.zeros((1, H), jnp.float32),
    }


# ----------------------------- TextEncoder forward ------------------------------
def text_encoder_forward(params, input_ids, attention_mask, token_type_ids=None):
    """Returns BERT pooler_output: tanh(W @ CLS + b), shape (B, H)."""
    Bb, Ss = input_ids.shape
    if token_type_ids is None:
        token_type_ids = jnp.zeros_like(input_ids)

    # Embedding gathers stay in XLA (glue); everything else runs in the kernel.
    pos_ids = jnp.arange(Ss)
    x = (params['word_emb'][input_ids]
         + params['pos_emb'][pos_ids][None, :, :]
         + params['type_emb'][token_type_ids]).astype(jnp.float32)           # (B, S, H)

    # HF-style additive attention mask bias: (1 - m) * -10000, precomputed once.
    kbias = ((1.0 - attention_mask.astype(jnp.float32)) * (-10000.0)
             ).reshape(Bb, 1, Ss)                                            # (B, 1, S)

    def full(shape):
        # whole-array block, constant index map -> single DMA, stays VMEM-resident
        return pl.BlockSpec(shape, lambda b, _s=shape: (0,) * len(_s))

    pooled = pl.pallas_call(
        _encoder_kernel,
        out_shape=jax.ShapeDtypeStruct((Bb, 1, H), jnp.float32),
        grid=(Bb,),
        in_specs=[
            pl.BlockSpec((1, Ss, H), lambda b: (b, 0, 0)),     # activations
            pl.BlockSpec((1, 1, Ss), lambda b: (b, 0, 0)),     # mask bias
            full((1, H)), full((1, H)),                        # embedding LN
            full((L, 3 * NH, H, DH)), full((L, 3 * NH, 1, DH)),  # fused QKV
            full((L, NH, DH, H)), full((L, 1, H)),             # attn out proj
            full((L, 1, H)), full((L, 1, H)),                  # LN1
            full((L, H, I)), full((L, 1, I)),                  # FFN in
            full((L, I, H)), full((L, 1, H)),                  # FFN out
            full((L, 1, H)), full((L, 1, H)),                  # LN2
            full((H, H)), full((1, H)),                        # pooler
        ],
        out_specs=pl.BlockSpec((1, 1, H), lambda b: (b, 0, 0)),
        compiler_params=pltpu.CompilerParams(
            dimension_semantics=("parallel",)),   # batch shards across v7x's 2 TCs
    )(x, kbias,
      params['emb_ln_g'], params['emb_ln_b'],
      params['wqkv'], params['bqkv'], params['wo'], params['bo'],
      params['ln1_g'], params['ln1_b'], params['w1'], params['b1'],
      params['w2'], params['b2'], params['ln2_g'], params['ln2_b'],
      params['pool_w'], params['pool_b'])

    return pooled.reshape(Bb, H)


# ----------------------------- demo ---------------------------------------------
if __name__ == "__main__":
    key = jax.random.PRNGKey(0)
    k_param, k_ids = jax.random.split(key)

    params = init_params(k_param)

    input_ids = jax.random.randint(k_ids, (B, S), 0, V, dtype=jnp.int32)
    attention_mask = jnp.ones((B, S), dtype=jnp.int32)
    attention_mask = attention_mask.at[1, -2:].set(0)   # ragged example

    fwd = jax.jit(text_encoder_forward)
    pooled = jax.block_until_ready(fwd(params, input_ids, attention_mask))

    assert pooled.shape == (B, H), pooled.shape
    assert bool(jnp.all(jnp.isfinite(pooled)))
    print("KERNEL_OK")
</pallas_src>

<mosaic_0001>
module attributes {stable_mosaic.version = 11 : i64} {
  func.func @_encoder_kernel(%arg0: i32, %arg1: memref<1x8x32xf32, #tpu.memory_space<vmem>>, %arg2: memref<1x1x8xf32, #tpu.memory_space<vmem>>, %arg3: memref<1x32xf32, #tpu.memory_space<vmem>>, %arg4: memref<1x32xf32, #tpu.memory_space<vmem>>, %arg5: memref<2x12x32x8xf32, #tpu.memory_space<vmem>>, %arg6: memref<2x12x1x8xf32, #tpu.memory_space<vmem>>, %arg7: memref<2x4x8x32xf32, #tpu.memory_space<vmem>>, %arg8: memref<2x1x32xf32, #tpu.memory_space<vmem>>, %arg9: memref<2x1x32xf32, #tpu.memory_space<vmem>>, %arg10: memref<2x1x32xf32, #tpu.memory_space<vmem>>, %arg11: memref<2x32x128xf32, #tpu.memory_space<vmem>>, %arg12: memref<2x1x128xf32, #tpu.memory_space<vmem>>, %arg13: memref<2x128x32xf32, #tpu.memory_space<vmem>>, %arg14: memref<2x1x32xf32, #tpu.memory_space<vmem>>, %arg15: memref<2x1x32xf32, #tpu.memory_space<vmem>>, %arg16: memref<2x1x32xf32, #tpu.memory_space<vmem>>, %arg17: memref<32x32xf32, #tpu.memory_space<vmem>>, %arg18: memref<1x32xf32, #tpu.memory_space<vmem>>, %arg19: memref<1x1x32xf32, #tpu.memory_space<vmem>>) attributes {dimension_semantics = [#tpu.dimension_semantics<parallel>], iteration_bounds = array<i64: 2>, scalar_prefetch = 0 : i64, scratch_operands = 0 : i64, tpu.core_type = #tpu.core_type<tc>, window_params = [{transform_indices = @transform_0, window_bounds = array<i64: 1, 8, 32>}, {transform_indices = @transform_1, window_bounds = array<i64: 1, 1, 8>}, {pipeline_mode = #tpu.pipeline_mode<synchronous>, transform_indices = @transform_2, window_bounds = array<i64: 1, 32>}, {pipeline_mode = #tpu.pipeline_mode<synchronous>, transform_indices = @transform_3, window_bounds = array<i64: 1, 32>}, {pipeline_mode = #tpu.pipeline_mode<synchronous>, transform_indices = @transform_4, window_bounds = array<i64: 2, 12, 32, 8>}, {pipeline_mode = #tpu.pipeline_mode<synchronous>, transform_indices = @transform_5, window_bounds = array<i64: 2, 12, 1, 8>}, {pipeline_mode = #tpu.pipeline_mode<synchronous>, transform_indices = @transform_6, window_bounds = array<i64: 2, 4, 8, 32>}, {pipeline_mode = #tpu.pipeline_mode<synchronous>, transform_indices = @transform_7, window_bounds = array<i64: 2, 1, 32>}, {pipeline_mode = #tpu.pipeline_mode<synchronous>, transform_indices = @transform_8, window_bounds = array<i64: 2, 1, 32>}, {pipeline_mode = #tpu.pipeline_mode<synchronous>, transform_indices = @transform_9, window_bounds = array<i64: 2, 1, 32>}, {pipeline_mode = #tpu.pipeline_mode<synchronous>, transform_indices = @transform_10, window_bounds = array<i64: 2, 32, 128>}, {pipeline_mode = #tpu.pipeline_mode<synchronous>, transform_indices = @transform_11, window_bounds = array<i64: 2, 1, 128>}, {pipeline_mode = #tpu.pipeline_mode<synchronous>, transform_indices = @transform_12, window_bounds = array<i64: 2, 128, 32>}, {pipeline_mode = #tpu.pipeline_mode<synchronous>, transform_indices = @transform_13, window_bounds = array<i64: 2, 1, 32>}, {pipeline_mode = #tpu.pipeline_mode<synchronous>, transform_indices = @transform_14, window_bounds = array<i64: 2, 1, 32>}, {pipeline_mode = #tpu.pipeline_mode<synchronous>, transform_indices = @transform_15, window_bounds = array<i64: 2, 1, 32>}, {pipeline_mode = #tpu.pipeline_mode<synchronous>, transform_indices = @transform_16, window_bounds = array<i64: 32, 32>}, {pipeline_mode = #tpu.pipeline_mode<synchronous>, transform_indices = @transform_17, window_bounds = array<i64: 1, 32>}, {transform_indices = @transform_18, window_bounds = array<i64: 1, 1, 32>}]} {
    %c0 = arith.constant 0 : index
    %c0_0 = arith.constant 0 : index
    %c0_1 = arith.constant 0 : index
    %0 = vector.load %arg1[%c0, %c0_0, %c0_1] : memref<1x8x32xf32, #tpu.memory_space<vmem>>, vector<1x8x32xf32>
    %1 = vector.shape_cast %0 : vector<1x8x32xf32> to vector<8x32xf32>
    %c0_2 = arith.constant 0 : index
    %c0_3 = arith.constant 0 : index
    %c0_4 = arith.constant 0 : index
    %2 = vector.load %arg2[%c0_2, %c0_3, %c0_4] : memref<1x1x8xf32, #tpu.memory_space<vmem>>, vector<1x1x8xf32>
    %3 = vector.shape_cast %2 : vector<1x1x8xf32> to vector<1x8xf32>
    %c0_5 = arith.constant 0 : index
    %c0_6 = arith.constant 0 : index
    %4 = vector.load %arg3[%c0_5, %c0_6] : memref<1x32xf32, #tpu.memory_space<vmem>>, vector<1x32xf32>
    %c0_7 = arith.constant 0 : index
    %c0_8 = arith.constant 0 : index
    %5 = vector.load %arg4[%c0_7, %c0_8] : memref<1x32xf32, #tpu.memory_space<vmem>>, vector<1x32xf32>
    %cst = arith.constant dense<0.000000e+00> : vector<8xf32>
    %6 = vector.multi_reduction <add>, %1, %cst [1] : vector<8x32xf32> to vector<8xf32>
    %7 = vector.shape_cast %6 : vector<8xf32> to vector<8x1xf32>
    %cst_9 = arith.constant 3.200000e+01 : f32
    %8 = vector.broadcast %cst_9 : f32 to vector<8x1xf32>
    %9 = arith.divf %7, %8 : vector<8x1xf32>
    %10 = vector.broadcast %9 : vector<8x1xf32> to vector<8x32xf32>
    %11 = arith.subf %1, %10 : vector<8x32xf32>
    %12 = arith.mulf %11, %11 : vector<8x32xf32>
    %cst_10 = arith.constant dense<0.000000e+00> : vector<8xf32>
    %13 = vector.multi_reduction <add>, %12, %cst_10 [1] : vector<8x32xf32> to vector<8xf32>
    %14 = vector.shape_cast %13 : vector<8xf32> to vector<8x1xf32>
    %cst_11 = arith.constant 3.200000e+01 : f32
    %15 = vector.broadcast %cst_11 : f32 to vector<8x1xf32>
    %16 = arith.divf %14, %15 : vector<8x1xf32>
    %17 = vector.broadcast %9 : vector<8x1xf32> to vector<8x32xf32>
    %18 = arith.subf %1, %17 : vector<8x32xf32>
    %cst_12 = arith.constant 9.99999996E-13 : f32
    %19 = vector.broadcast %cst_12 : f32 to vector<8x1xf32>
    %20 = arith.addf %16, %19 : vector<8x1xf32>
    %21 = math.rsqrt %20 : vector<8x1xf32>
    %22 = vector.broadcast %21 : vector<8x1xf32> to vector<8x32xf32>
    %23 = arith.mulf %18, %22 : vector<8x32xf32>
    %24 = vector.broadcast %4 : vector<1x32xf32> to vector<8x32xf32>
    %25 = arith.mulf %23, %24 : vector<8x32xf32>
    %26 = vector.broadcast %5 : vector<1x32xf32> to vector<8x32xf32>
    %27 = arith.addf %25, %26 : vector<8x32xf32>
    %cst_13 = arith.constant 0.000000e+00 : f32
    %28 = vector.broadcast %cst_13 : f32 to vector<8x32xf32>
    %c0_14 = arith.constant 0 : index
    %c0_15 = arith.constant 0 : index
    %c0_16 = arith.constant 0 : index
    %c0_17 = arith.constant 0 : index
    %29 = vector.load %arg5[%c0_14, %c0_15, %c0_16, %c0_17] : memref<2x12x32x8xf32, #tpu.memory_space<vmem>>, vector<1x1x32x8xf32>
    %30 = vector.shape_cast %29 : vector<1x1x32x8xf32> to vector<32x8xf32>
    %31 = arith.truncf %27 : vector<8x32xf32> to vector<8x32xbf16>
    %32 = arith.truncf %30 : vector<32x8xf32> to vector<32x8xbf16>
    %cst_18 = arith.constant dense<0.000000e+00> : vector<8x8xf32>
    %33 = tpu.matmul %31, %32, %cst_18 {dimension_numbers = #tpu.dot_dimension_numbers<[1], [0], [0], [1], [0, 0, 1, 1], [], []>} : vector<8x32xbf16>, vector<32x8xbf16>, vector<8x8xf32> -> vector<8x8xf32>
    %c0_19 = arith.constant 0 : index
    %c0_20 = arith.constant 0 : index
    %c0_21 = arith.constant 0 : index
    %c0_22 = arith.constant 0 : index
    %34 = vector.load %arg6[%c0_19, %c0_20, %c0_21, %c0_22] : memref<2x12x1x8xf32, #tpu.memory_space<vmem>>, vector<1x1x1x8xf32>
    %35 = vector.shape_cast %34 : vector<1x1x1x8xf32> to vector<1x8xf32>
    %36 = vector.broadcast %35 : vector<1x8xf32> to vector<8x8xf32>
    %37 = arith.addf %33, %36 : vector<8x8xf32>
    %c0_23 = arith.constant 0 : index
    %c4 = arith.constant 4 : index
    %c0_24 = arith.constant 0 : index
    %c0_25 = arith.constant 0 : index
    %38 = vector.load %arg5[%c0_23, %c4, %c0_24, %c0_25] : memref<2x12x32x8xf32, #tpu.memory_space<vmem>>, vector<1x1x32x8xf32>
    %39 = vector.shape_cast %38 : vector<1x1x32x8xf32> to vector<32x8xf32>
    %40 = arith.truncf %27 : vector<8x32xf32> to vector<8x32xbf16>
    %41 = arith.truncf %39 : vector<32x8xf32> to vector<32x8xbf16>
    %cst_26 = arith.constant dense<0.000000e+00> : vector<8x8xf32>
    %42 = tpu.matmul %40, %41, %cst_26 {dimension_numbers = #tpu.dot_dimension_numbers<[1], [0], [0], [1], [0, 0, 1, 1], [], []>} : vector<8x32xbf16>, vector<32x8xbf16>, vector<8x8xf32> -> vector<8x8xf32>
    %c0_27 = arith.constant 0 : index
    %c4_28 = arith.constant 4 : index
    %c0_29 = arith.constant 0 : index
    %c0_30 = arith.constant 0 : index
    %43 = vector.load %arg6[%c0_27, %c4_28, %c0_29, %c0_30] : memref<2x12x1x8xf32, #tpu.memory_space<vmem>>, vector<1x1x1x8xf32>
    %44 = vector.shape_cast %43 : vector<1x1x1x8xf32> to vector<1x8xf32>
    %45 = vector.broadcast %44 : vector<1x8xf32> to vector<8x8xf32>
    %46 = arith.addf %42, %45 : vector<8x8xf32>
    %c0_31 = arith.constant 0 : index
    %c8 = arith.constant 8 : index
    %c0_32 = arith.constant 0 : index
    %c0_33 = arith.constant 0 : index
    %47 = vector.load %arg5[%c0_31, %c8, %c0_32, %c0_33] : memref<2x12x32x8xf32, #tpu.memory_space<vmem>>, vector<1x1x32x8xf32>
    %48 = vector.shape_cast %47 : vector<1x1x32x8xf32> to vector<32x8xf32>
    %49 = arith.truncf %27 : vector<8x32xf32> to vector<8x32xbf16>
    %50 = arith.truncf %48 : vector<32x8xf32> to vector<32x8xbf16>
    %cst_34 = arith.constant dense<0.000000e+00> : vector<8x8xf32>
    %51 = tpu.matmul %49, %50, %cst_34 {dimension_numbers = #tpu.dot_dimension_numbers<[1], [0], [0], [1], [0, 0, 1, 1], [], []>} : vector<8x32xbf16>, vector<32x8xbf16>, vector<8x8xf32> -> vector<8x8xf32>
    %c0_35 = arith.constant 0 : index
    %c8_36 = arith.constant 8 : index
    %c0_37 = arith.constant 0 : index
    %c0_38 = arith.constant 0 : index
    %52 = vector.load %arg6[%c0_35, %c8_36, %c0_37, %c0_38] : memref<2x12x1x8xf32, #tpu.memory_space<vmem>>, vector<1x1x1x8xf32>
    %53 = vector.shape_cast %52 : vector<1x1x1x8xf32> to vector<1x8xf32>
    %54 = vector.broadcast %53 : vector<1x8xf32> to vector<8x8xf32>
    %55 = arith.addf %51, %54 : vector<8x8xf32>
    %56 = arith.truncf %37 : vector<8x8xf32> to vector<8x8xbf16>
    %57 = arith.truncf %46 : vector<8x8xf32> to vector<8x8xbf16>
    "tpu.trace_start"() <{level = 10 : i32, message = "qd,kd->qk"}> : () -> ()
    %cst_39 = arith.constant dense<0.000000e+00> : vector<8x8xf32>
    %58 = tpu.matmul %56, %57, %cst_39 {dimension_numbers = #tpu.dot_dimension_numbers<[1], [1], [0], [0], [0, 0, 1, 0], [], []>} : vector<8x8xbf16>, vector<8x8xbf16>, vector<8x8xf32> -> vector<8x8xf32>
    "tpu.trace_stop"() : () -> ()
    %cst_40 = arith.constant 0.353553385 : f32
    %59 = vector.broadcast %cst_40 : f32 to vector<8x8xf32>
    %60 = arith.mulf %58, %59 : vector<8x8xf32>
    %61 = vector.broadcast %3 : vector<1x8xf32> to vector<8x8xf32>
    %62 = arith.addf %60, %61 : vector<8x8xf32>
    %cst_41 = arith.constant dense<0xFF800000> : vector<8xf32>
    %63 = vector.multi_reduction <maximumf>, %62, %cst_41 [1] : vector<8x8xf32> to vector<8xf32>
    %64 = vector.shape_cast %63 : vector<8xf32> to vector<8x1xf32>
    %65 = vector.broadcast %64 : vector<8x1xf32> to vector<8x8xf32>
    %66 = arith.subf %62, %65 : vector<8x8xf32>
    %67 = math.exp %66 : vector<8x8xf32>
    %cst_42 = arith.constant dense<0.000000e+00> : vector<8xf32>
    %68 = vector.multi_reduction <add>, %67, %cst_42 [1] : vector<8x8xf32> to vector<8xf32>
    %69 = vector.shape_cast %68 : vector<8xf32> to vector<8x1xf32>
    %70 = tpu.reciprocal %69 {approx = true} : vector<8x1xf32> -> vector<8x1xf32>
    %71 = vector.broadcast %70 : vector<8x1xf32> to vector<8x8xf32>
    %72 = arith.mulf %67, %71 : vector<8x8xf32>
    %73 = arith.truncf %72 : vector<8x8xf32> to vector<8x8xbf16>
    %74 = arith.truncf %55 : vector<8x8xf32> to vector<8x8xbf16>
    %cst_43 = arith.constant dense<0.000000e+00> : vector<8x8xf32>
    %75 = tpu.matmul %73, %74, %cst_43 {dimension_numbers = #tpu.dot_dimension_numbers<[1], [0], [0], [1], [0, 0, 1, 1], [], []>} : vector<8x8xbf16>, vector<8x8xbf16>, vector<8x8xf32> -> vector<8x8xf32>
    %c0_44 = arith.constant 0 : index
    %c0_45 = arith.constant 0 : index
    %c0_46 = arith.constant 0 : index
    %c0_47 = arith.constant 0 : index
    %76 = vector.load %arg7[%c0_44, %c0_45, %c0_46, %c0_47] : memref<2x4x8x32xf32, #tpu.memory_space<vmem>>, vector<1x1x8x32xf32>
    %77 = vector.shape_cast %76 : vector<1x1x8x32xf32> to vector<8x32xf32>
    %78 = arith.truncf %75 : vector<8x8xf32> to vector<8x8xbf16>
    %79 = arith.truncf %77 : vector<8x32xf32> to vector<8x32xbf16>
    %cst_48 = arith.constant dense<0.000000e+00> : vector<8x32xf32>
    %80 = tpu.matmul %78, %79, %cst_48 {dimension_numbers = #tpu.dot_dimension_numbers<[1], [0], [0], [1], [0, 0, 1, 1], [], []>} : vector<8x8xbf16>, vector<8x32xbf16>, vector<8x32xf32> -> vector<8x32xf32>
    %81 = arith.addf %28, %80 : vector<8x32xf32>
    %c0_49 = arith.constant 0 : index
    %c1 = arith.constant 1 : index
    %c0_50 = arith.constant 0 : index
    %c0_51 = arith.constant 0 : index
    %82 = vector.load %arg5[%c0_49, %c1, %c0_50, %c0_51] : memref<2x12x32x8xf32, #tpu.memory_space<vmem>>, vector<1x1x32x8xf32>
    %83 = vector.shape_cast %82 : vector<1x1x32x8xf32> to vector<32x8xf32>
    %84 = arith.truncf %27 : vector<8x32xf32> to vector<8x32xbf16>
    %85 = arith.truncf %83 : vector<32x8xf32> to vector<32x8xbf16>
    %cst_52 = arith.constant dense<0.000000e+00> : vector<8x8xf32>
    %86 = tpu.matmul %84, %85, %cst_52 {dimension_numbers = #tpu.dot_dimension_numbers<[1], [0], [0], [1], [0, 0, 1, 1], [], []>} : vector<8x32xbf16>, vector<32x8xbf16>, vector<8x8xf32> -> vector<8x8xf32>
    %c0_53 = arith.constant 0 : index
    %c1_54 = arith.constant 1 : index
    %c0_55 = arith.constant 0 : index
    %c0_56 = arith.constant 0 : index
    %87 = vector.load %arg6[%c0_53, %c1_54, %c0_55, %c0_56] : memref<2x12x1x8xf32, #tpu.memory_space<vmem>>, vector<1x1x1x8xf32>
    %88 = vector.shape_cast %87 : vector<1x1x1x8xf32> to vector<1x8xf32>
    %89 = vector.broadcast %88 : vector<1x8xf32> to vector<8x8xf32>
    %90 = arith.addf %86, %89 : vector<8x8xf32>
    %c0_57 = arith.constant 0 : index
    %c5 = arith.constant 5 : index
    %c0_58 = arith.constant 0 : index
    %c0_59 = arith.constant 0 : index
    %91 = vector.load %arg5[%c0_57, %c5, %c0_58, %c0_59] : memref<2x12x32x8xf32, #tpu.memory_space<vmem>>, vector<1x1x32x8xf32>
    %92 = vector.shape_cast %91 : vector<1x1x32x8xf32> to vector<32x8xf32>
    %93 = arith.truncf %27 : vector<8x32xf32> to vector<8x32xbf16>
    %94 = arith.truncf %92 : vector<32x8xf32> to vector<32x8xbf16>
    %cst_60 = arith.constant dense<0.000000e+00> : vector<8x8xf32>
    %95 = tpu.matmul %93, %94, %cst_60 {dimension_numbers = #tpu.dot_dimension_numbers<[1], [0], [0], [1], [0, 0, 1, 1], [], []>} : vector<8x32xbf16>, vector<32x8xbf16>, vector<8x8xf32> -> vector<8x8xf32>
    %c0_61 = arith.constant 0 : index
    %c5_62 = arith.constant 5 : index
    %c0_63 = arith.constant 0 : index
    %c0_64 = arith.constant 0 : index
    %96 = vector.load %arg6[%c0_61, %c5_62, %c0_63, %c0_64] : memref<2x12x1x8xf32, #tpu.memory_space<vmem>>, vector<1x1x1x8xf32>
    %97 = vector.shape_cast %96 : vector<1x1x1x8xf32> to vector<1x8xf32>
    %98 = vector.broadcast %97 : vector<1x8xf32> to vector<8x8xf32>
    %99 = arith.addf %95, %98 : vector<8x8xf32>
    %c0_65 = arith.constant 0 : index
    %c9 = arith.constant 9 : index
    %c0_66 = arith.constant 0 : index
    %c0_67 = arith.constant 0 : index
    %100 = vector.load %arg5[%c0_65, %c9, %c0_66, %c0_67] : memref<2x12x32x8xf32, #tpu.memory_space<vmem>>, vector<1x1x32x8xf32>
    %101 = vector.shape_cast %100 : vector<1x1x32x8xf32> to vector<32x8xf32>
    %102 = arith.truncf %27 : vector<8x32xf32> to vector<8x32xbf16>
    %103 = arith.truncf %101 : vector<32x8xf32> to vector<32x8xbf16>
    %cst_68 = arith.constant dense<0.000000e+00> : vector<8x8xf32>
    %104 = tpu.matmul %102, %103, %cst_68 {dimension_numbers = #tpu.dot_dimension_numbers<[1], [0], [0], [1], [0, 0, 1, 1], [], []>} : vector<8x32xbf16>, vector<32x8xbf16>, vector<8x8xf32> -> vector<8x8xf32>
    %c0_69 = arith.constant 0 : index
    %c9_70 = arith.constant 9 : index
    %c0_71 = arith.constant 0 : index
    %c0_72 = arith.constant 0 : index
    %105 = vector.load %arg6[%c0_69, %c9_70, %c0_71, %c0_72] : memref<2x12x1x8xf32, #tpu.memory_space<vmem>>, vector<1x1x1x8xf32>
    %106 = vector.shape_cast %105 : vector<1x1x1x8xf32> to vector<1x8xf32>
    %107 = vector.broadcast %106 : vector<1x8xf32> to vector<8x8xf32>
    %108 = arith.addf %104, %107 : vector<8x8xf32>
    %109 = arith.truncf %90 : vector<8x8xf32> to vector<8x8xbf16>
    %110 = arith.truncf %99 : vector<8x8xf32> to vector<8x8xbf16>
    "tpu.trace_start"() <{level = 10 : i32, message = "qd,kd->qk"}> : () -> ()
    %cst_73 = arith.constant dense<0.000000e+00> : vector<8x8xf32>
    %111 = tpu.matmul %109, %110, %cst_73 {dimension_numbers = #tpu.dot_dimension_numbers<[1], [1], [0], [0], [0, 0, 1, 0], [], []>} : vector<8x8xbf16>, vector<8x8xbf16>, vector<8x8xf32> -> vector<8x8xf32>
    "tpu.trace_stop"() : () -> ()
    %cst_74 = arith.constant 0.353553385 : f32
    %112 = vector.broadcast %cst_74 : f32 to vector<8x8xf32>
    %113 = arith.mulf %111, %112 : vector<8x8xf32>
    %114 = vector.broadcast %3 : vector<1x8xf32> to vector<8x8xf32>
    %115 = arith.addf %113, %114 : vector<8x8xf32>
    %cst_75 = arith.constant dense<0xFF800000> : vector<8xf32>
    %116 = vector.multi_reduction <maximumf>, %115, %cst_75 [1] : vector<8x8xf32> to vector<8xf32>
    %117 = vector.shape_cast %116 : vector<8xf32> to vector<8x1xf32>
    %118 = vector.broadcast %117 : vector<8x1xf32> to vector<8x8xf32>
    %119 = arith.subf %115, %118 : vector<8x8xf32>
    %120 = math.exp %119 : vector<8x8xf32>
    %cst_76 = arith.constant dense<0.000000e+00> : vector<8xf32>
    %121 = vector.multi_reduction <add>, %120, %cst_76 [1] : vector<8x8xf32> to vector<8xf32>
    %122 = vector.shape_cast %121 : vector<8xf32> to vector<8x1xf32>
    %123 = tpu.reciprocal %122 {approx = true} : vector<8x1xf32> -> vector<8x1xf32>
    %124 = vector.broadcast %123 : vector<8x1xf32> to vector<8x8xf32>
    %125 = arith.mulf %120, %124 : vector<8x8xf32>
    %126 = arith.truncf %125 : vector<8x8xf32> to vector<8x8xbf16>
    %127 = arith.truncf %108 : vector<8x8xf32> to vector<8x8xbf16>
    %cst_77 = arith.constant dense<0.000000e+00> : vector<8x8xf32>
    %128 = tpu.matmul %126, %127, %cst_77 {dimension_numbers = #tpu.dot_dimension_numbers<[1], [0], [0], [1], [0, 0, 1, 1], [], []>} : vector<8x8xbf16>, vector<8x8xbf16>, vector<8x8xf32> -> vector<8x8xf32>
    %c0_78 = arith.constant 0 : index
    %c1_79 = arith.constant 1 : index
    %c0_80 = arith.constant 0 : index
    %c0_81 = arith.constant 0 : index
    %129 = vector.load %arg7[%c0_78, %c1_79, %c0_80, %c0_81] : memref<2x4x8x32xf32, #tpu.memory_space<vmem>>, vector<1x1x8x32xf32>
    %130 = vector.shape_cast %129 : vector<1x1x8x32xf32> to vector<8x32xf32>
    %131 = arith.truncf %128 : vector<8x8xf32> to vector<8x8xbf16>
    %132 = arith.truncf %130 : vector<8x32xf32> to vector<8x32xbf16>
    %cst_82 = arith.constant dense<0.000000e+00> : vector<8x32xf32>
    %133 = tpu.matmul %131, %132, %cst_82 {dimension_numbers = #tpu.dot_dimension_numbers<[1], [0], [0], [1], [0, 0, 1, 1], [], []>} : vector<8x8xbf16>, vector<8x32xbf16>, vector<8x32xf32> -> vector<8x32xf32>
    %134 = arith.addf %81, %133 : vector<8x32xf32>
    %c0_83 = arith.constant 0 : index
    %c2 = arith.constant 2 : index
    %c0_84 = arith.constant 0 : index
    %c0_85 = arith.constant 0 : index
    %135 = vector.load %arg5[%c0_83, %c2, %c0_84, %c0_85] : memref<2x12x32x8xf32, #tpu.memory_space<vmem>>, vector<1x1x32x8xf32>
    %136 = vector.shape_cast %135 : vector<1x1x32x8xf32> to vector<32x8xf32>
    %137 = arith.truncf %27 : vector<8x32xf32> to vector<8x32xbf16>
    %138 = arith.truncf %136 : vector<32x8xf32> to vector<32x8xbf16>
    %cst_86 = arith.constant dense<0.000000e+00> : vector<8x8xf32>
    %139 = tpu.matmul %137, %138, %cst_86 {dimension_numbers = #tpu.dot_dimension_numbers<[1], [0], [0], [1], [0, 0, 1, 1], [], []>} : vector<8x32xbf16>, vector<32x8xbf16>, vector<8x8xf32> -> vector<8x8xf32>
    %c0_87 = arith.constant 0 : index
    %c2_88 = arith.constant 2 : index
    %c0_89 = arith.constant 0 : index
    %c0_90 = arith.constant 0 : index
    %140 = vector.load %arg6[%c0_87, %c2_88, %c0_89, %c0_90] : memref<2x12x1x8xf32, #tpu.memory_space<vmem>>, vector<1x1x1x8xf32>
    %141 = vector.shape_cast %140 : vector<1x1x1x8xf32> to vector<1x8xf32>
    %142 = vector.broadcast %141 : vector<1x8xf32> to vector<8x8xf32>
    %143 = arith.addf %139, %142 : vector<8x8xf32>
    %c0_91 = arith.constant 0 : index
    %c6 = arith.constant 6 : index
    %c0_92 = arith.constant 0 : index
    %c0_93 = arith.constant 0 : index
    %144 = vector.load %arg5[%c0_91, %c6, %c0_92, %c0_93] : memref<2x12x32x8xf32, #tpu.memory_space<vmem>>, vector<1x1x32x8xf32>
    %145 = vector.shape_cast %144 : vector<1x1x32x8xf32> to vector<32x8xf32>
    %146 = arith.truncf %27 : vector<8x32xf32> to vector<8x32xbf16>
    %147 = arith.truncf %145 : vector<32x8xf32> to vector<32x8xbf16>
    %cst_94 = arith.constant dense<0.000000e+00> : vector<8x8xf32>
    %148 = tpu.matmul %146, %147, %cst_94 {dimension_numbers = #tpu.dot_dimension_numbers<[1], [0], [0], [1], [0, 0, 1, 1], [], []>} : vector<8x32xbf16>, vector<32x8xbf16>, vector<8x8xf32> -> vector<8x8xf32>
    %c0_95 = arith.constant 0 : index
    %c6_96 = arith.constant 6 : index
    %c0_97 = arith.constant 0 : index
    %c0_98 = arith.constant 0 : index
    %149 = vector.load %arg6[%c0_95, %c6_96, %c0_97, %c0_98] : memref<2x12x1x8xf32, #tpu.memory_space<vmem>>, vector<1x1x1x8xf32>
    %150 = vector.shape_cast %149 : vector<1x1x1x8xf32> to vector<1x8xf32>
    %151 = vector.broadcast %150 : vector<1x8xf32> to vector<8x8xf32>
    %152 = arith.addf %148, %151 : vector<8x8xf32>
    %c0_99 = arith.constant 0 : index
    %c10 = arith.constant 10 : index
    %c0_100 = arith.constant 0 : index
    %c0_101 = arith.constant 0 : index
    %153 = vector.load %arg5[%c0_99, %c10, %c0_100, %c0_101] : memref<2x12x32x8xf32, #tpu.memory_space<vmem>>, vector<1x1x32x8xf32>
    %154 = vector.shape_cast %153 : vector<1x1x32x8xf32> to vector<32x8xf32>
    %155 = arith.truncf %27 : vector<8x32xf32> to vector<8x32xbf16>
    %156 = arith.truncf %154 : vector<32x8xf32> to vector<32x8xbf16>
    %cst_102 = arith.constant dense<0.000000e+00> : vector<8x8xf32>
    %157 = tpu.matmul %155, %156, %cst_102 {dimension_numbers = #tpu.dot_dimension_numbers<[1], [0], [0], [1], [0, 0, 1, 1], [], []>} : vector<8x32xbf16>, vector<32x8xbf16>, vector<8x8xf32> -> vector<8x8xf32>
    %c0_103 = arith.constant 0 : index
    %c10_104 = arith.constant 10 : index
    %c0_105 = arith.constant 0 : index
    %c0_106 = arith.constant 0 : index
    %158 = vector.load %arg6[%c0_103, %c10_104, %c0_105, %c0_106] : memref<2x12x1x8xf32, #tpu.memory_space<vmem>>, vector<1x1x1x8xf32>
    %159 = vector.shape_cast %158 : vector<1x1x1x8xf32> to vector<1x8xf32>
    %160 = vector.broadcast %159 : vector<1x8xf32> to vector<8x8xf32>
    %161 = arith.addf %157, %160 : vector<8x8xf32>
    %162 = arith.truncf %143 : vector<8x8xf32> to vector<8x8xbf16>
    %163 = arith.truncf %152 : vector<8x8xf32> to vector<8x8xbf16>
    "tpu.trace_start"() <{level = 10 : i32, message = "qd,kd->qk"}> : () -> ()
    %cst_107 = arith.constant dense<0.000000e+00> : vector<8x8xf32>
    %164 = tpu.matmul %162, %163, %cst_107 {dimension_numbers = #tpu.dot_dimension_numbers<[1], [1], [0], [0], [0, 0, 1, 0], [], []>} : vector<8x8xbf16>, vector<8x8xbf16>, vector<8x8xf32> -> vector<8x8xf32>
    "tpu.trace_stop"() : () -> ()
    %cst_108 = arith.constant 0.353553385 : f32
    %165 = vector.broadcast %cst_108 : f32 to vector<8x8xf32>
    %166 = arith.mulf %164, %165 : vector<8x8xf32>
    %167 = vector.broadcast %3 : vector<1x8xf32> to vector<8x8xf32>
    %168 = arith.addf %166, %167 : vector<8x8xf32>
    %cst_109 = arith.constant dense<0xFF800000> : vector<8xf32>
    %169 = vector.multi_reduction <maximumf>, %168, %cst_109 [1] : vector<8x8xf32> to vector<8xf32>
    %170 = vector.shape_cast %169 : vector<8xf32> to vector<8x1xf32>
    %171 = vector.broadcast %170 : vector<8x1xf32> to vector<8x8xf32>
    %172 = arith.subf %168, %171 : vector<8x8xf32>
    %173 = math.exp %172 : vector<8x8xf32>
    %cst_110 = arith.constant dense<0.000000e+00> : vector<8xf32>
    %174 = vector.multi_reduction <add>, %173, %cst_110 [1] : vector<8x8xf32> to vector<8xf32>
    %175 = vector.shape_cast %174 : vector<8xf32> to vector<8x1xf32>
    %176 = tpu.reciprocal %175 {approx = true} : vector<8x1xf32> -> vector<8x1xf32>
    %177 = vector.broadcast %176 : vector<8x1xf32> to vector<8x8xf32>
    %178 = arith.mulf %173, %177 : vector<8x8xf32>
    %179 = arith.truncf %178 : vector<8x8xf32> to vector<8x8xbf16>
    %180 = arith.truncf %161 : vector<8x8xf32> to vector<8x8xbf16>
    %cst_111 = arith.constant dense<0.000000e+00> : vector<8x8xf32>
    %181 = tpu.matmul %179, %180, %cst_111 {dimension_numbers = #tpu.dot_dimension_numbers<[1], [0], [0], [1], [0, 0, 1, 1], [], []>} : vector<8x8xbf16>, vector<8x8xbf16>, vector<8x8xf32> -> vector<8x8xf32>
    %c0_112 = arith.constant 0 : index
    %c2_113 = arith.constant 2 : index
    %c0_114 = arith.constant 0 : index
    %c0_115 = arith.constant 0 : index
    %182 = vector.load %arg7[%c0_112, %c2_113, %c0_114, %c0_115] : memref<2x4x8x32xf32, #tpu.memory_space<vmem>>, vector<1x1x8x32xf32>
    %183 = vector.shape_cast %182 : vector<1x1x8x32xf32> to vector<8x32xf32>
    %184 = arith.truncf %181 : vector<8x8xf32> to vector<8x8xbf16>
    %185 = arith.truncf %183 : vector<8x32xf32> to vector<8x32xbf16>
    %cst_116 = arith.constant dense<0.000000e+00> : vector<8x32xf32>
    %186 = tpu.matmul %184, %185, %cst_116 {dimension_numbers = #tpu.dot_dimension_numbers<[1], [0], [0], [1], [0, 0, 1, 1], [], []>} : vector<8x8xbf16>, vector<8x32xbf16>, vector<8x32xf32> -> vector<8x32xf32>
    %187 = arith.addf %134, %186 : vector<8x32xf32>
    %c0_117 = arith.constant 0 : index
    %c3 = arith.constant 3 : index
    %c0_118 = arith.constant 0 : index
    %c0_119 = arith.constant 0 : index
    %188 = vector.load %arg5[%c0_117, %c3, %c0_118, %c0_119] : memref<2x12x32x8xf32, #tpu.memory_space<vmem>>, vector<1x1x32x8xf32>
    %189 = vector.shape_cast %188 : vector<1x1x32x8xf32> to vector<32x8xf32>
    %190 = arith.truncf %27 : vector<8x32xf32> to vector<8x32xbf16>
    %191 = arith.truncf %189 : vector<32x8xf32> to vector<32x8xbf16>
    %cst_120 = arith.constant dense<0.000000e+00> : vector<8x8xf32>
    %192 = tpu.matmul %190, %191, %cst_120 {dimension_numbers = #tpu.dot_dimension_numbers<[1], [0], [0], [1], [0, 0, 1, 1], [], []>} : vector<8x32xbf16>, vector<32x8xbf16>, vector<8x8xf32> -> vector<8x8xf32>
    %c0_121 = arith.constant 0 : index
    %c3_122 = arith.constant 3 : index
    %c0_123 = arith.constant 0 : index
    %c0_124 = arith.constant 0 : index
    %193 = vector.load %arg6[%c0_121, %c3_122, %c0_123, %c0_124] : memref<2x12x1x8xf32, #tpu.memory_space<vmem>>, vector<1x1x1x8xf32>
    %194 = vector.shape_cast %193 : vector<1x1x1x8xf32> to vector<1x8xf32>
    %195 = vector.broadcast %194 : vector<1x8xf32> to vector<8x8xf32>
    %196 = arith.addf %192, %195 : vector<8x8xf32>
    %c0_125 = arith.constant 0 : index
    %c7 = arith.constant 7 : index
    %c0_126 = arith.constant 0 : index
    %c0_127 = arith.constant 0 : index
    %197 = vector.load %arg5[%c0_125, %c7, %c0_126, %c0_127] : memref<2x12x32x8xf32, #tpu.memory_space<vmem>>, vector<1x1x32x8xf32>
    %198 = vector.shape_cast %197 : vector<1x1x32x8xf32> to vector<32x8xf32>
    %199 = arith.truncf %27 : vector<8x32xf32> to vector<8x32xbf16>
    %200 = arith.truncf %198 : vector<32x8xf32> to vector<32x8xbf16>
    %cst_128 = arith.constant dense<0.000000e+00> : vector<8x8xf32>
    %201 = tpu.matmul %199, %200, %cst_128 {dimension_numbers = #tpu.dot_dimension_numbers<[1], [0], [0], [1], [0, 0, 1, 1], [], []>} : vector<8x32xbf16>, vector<32x8xbf16>, vector<8x8xf32> -> vector<8x8xf32>
    %c0_129 = arith.constant 0 : index
    %c7_130 = arith.constant 7 : index
    %c0_131 = arith.constant 0 : index
    %c0_132 = arith.constant 0 : index
    %202 = vector.load %arg6[%c0_129, %c7_130, %c0_131, %c0_132] : memref<2x12x1x8xf32, #tpu.memory_space<vmem>>, vector<1x1x1x8xf32>
    %203 = vector.shape_cast %202 : vector<1x1x1x8xf32> to vector<1x8xf32>
    %204 = vector.broadcast %203 : vector<1x8xf32> to vector<8x8xf32>
    %205 = arith.addf %201, %204 : vector<8x8xf32>
    %c0_133 = arith.constant 0 : index
    %c11 = arith.constant 11 : index
    %c0_134 = arith.constant 0 : index
    %c0_135 = arith.constant 0 : index
    %206 = vector.load %arg5[%c0_133, %c11, %c0_134, %c0_135] : memref<2x12x32x8xf32, #tpu.memory_space<vmem>>, vector<1x1x32x8xf32>
    %207 = vector.shape_cast %206 : vector<1x1x32x8xf32> to vector<32x8xf32>
    %208 = arith.truncf %27 : vector<8x32xf32> to vector<8x32xbf16>
    %209 = arith.truncf %207 : vector<32x8xf32> to vector<32x8xbf16>
    %cst_136 = arith.constant dense<0.000000e+00> : vector<8x8xf32>
    %210 = tpu.matmul %208, %209, %cst_136 {dimension_numbers = #tpu.dot_dimension_numbers<[1], [0], [0], [1], [0, 0, 1, 1], [], []>} : vector<8x32xbf16>, vector<32x8xbf16>, vector<8x8xf32> -> vector<8x8xf32>
    %c0_137 = arith.constant 0 : index
    %c11_138 = arith.constant 11 : index
    %c0_139 = arith.constant 0 : index
    %c0_140 = arith.constant 0 : index
    %211 = vector.load %arg6[%c0_137, %c11_138, %c0_139, %c0_140] : memref<2x12x1x8xf32, #tpu.memory_space<vmem>>, vector<1x1x1x8xf32>
    %212 = vector.shape_cast %211 : vector<1x1x1x8xf32> to vector<1x8xf32>
    %213 = vector.broadcast %212 : vector<1x8xf32> to vector<8x8xf32>
    %214 = arith.addf %210, %213 : vector<8x8xf32>
    %215 = arith.truncf %196 : vector<8x8xf32> to vector<8x8xbf16>
    %216 = arith.truncf %205 : vector<8x8xf32> to vector<8x8xbf16>
    "tpu.trace_start"() <{level = 10 : i32, message = "qd,kd->qk"}> : () -> ()
    %cst_141 = arith.constant dense<0.000000e+00> : vector<8x8xf32>
    %217 = tpu.matmul %215, %216, %cst_141 {dimension_numbers = #tpu.dot_dimension_numbers<[1], [1], [0], [0], [0, 0, 1, 0], [], []>} : vector<8x8xbf16>, vector<8x8xbf16>, vector<8x8xf32> -> vector<8x8xf32>
    "tpu.trace_stop"() : () -> ()
    %cst_142 = arith.constant 0.353553385 : f32
    %218 = vector.broadcast %cst_142 : f32 to vector<8x8xf32>
    %219 = arith.mulf %217, %218 : vector<8x8xf32>
    %220 = vector.broadcast %3 : vector<1x8xf32> to vector<8x8xf32>
    %221 = arith.addf %219, %220 : vector<8x8xf32>
    %cst_143 = arith.constant dense<0xFF800000> : vector<8xf32>
    %222 = vector.multi_reduction <maximumf>, %221, %cst_143 [1] : vector<8x8xf32> to vector<8xf32>
    %223 = vector.shape_cast %222 : vector<8xf32> to vector<8x1xf32>
    %224 = vector.broadcast %223 : vector<8x1xf32> to vector<8x8xf32>
    %225 = arith.subf %221, %224 : vector<8x8xf32>
    %226 = math.exp %225 : vector<8x8xf32>
    %cst_144 = arith.constant dense<0.000000e+00> : vector<8xf32>
    %227 = vector.multi_reduction <add>, %226, %cst_144 [1] : vector<8x8xf32> to vector<8xf32>
    %228 = vector.shape_cast %227 : vector<8xf32> to vector<8x1xf32>
    %229 = tpu.reciprocal %228 {approx = true} : vector<8x1xf32> -> vector<8x1xf32>
    %230 = vector.broadcast %229 : vector<8x1xf32> to vector<8x8xf32>
    %231 = arith.mulf %226, %230 : vector<8x8xf32>
    %232 = arith.truncf %231 : vector<8x8xf32> to vector<8x8xbf16>
    %233 = arith.truncf %214 : vector<8x8xf32> to vector<8x8xbf16>
    %cst_145 = arith.constant dense<0.000000e+00> : vector<8x8xf32>
    %234 = tpu.matmul %232, %233, %cst_145 {dimension_numbers = #tpu.dot_dimension_numbers<[1], [0], [0], [1], [0, 0, 1, 1], [], []>} : vector<8x8xbf16>, vector<8x8xbf16>, vector<8x8xf32> -> vector<8x8xf32>
    %c0_146 = arith.constant 0 : index
    %c3_147 = arith.constant 3 : index
    %c0_148 = arith.constant 0 : index
    %c0_149 = arith.constant 0 : index
    %235 = vector.load %arg7[%c0_146, %c3_147, %c0_148, %c0_149] : memref<2x4x8x32xf32, #tpu.memory_space<vmem>>, vector<1x1x8x32xf32>
    %236 = vector.shape_cast %235 : vector<1x1x8x32xf32> to vector<8x32xf32>
    %237 = arith.truncf %234 : vector<8x8xf32> to vector<8x8xbf16>
    %238 = arith.truncf %236 : vector<8x32xf32> to vector<8x32xbf16>
    %cst_150 = arith.constant dense<0.000000e+00> : vector<8x32xf32>
    %239 = tpu.matmul %237, %238, %cst_150 {dimension_numbers = #tpu.dot_dimension_numbers<[1], [0], [0], [1], [0, 0, 1, 1], [], []>} : vector<8x8xbf16>, vector<8x32xbf16>, vector<8x32xf32> -> vector<8x32xf32>
    %240 = arith.addf %187, %239 : vector<8x32xf32>
    %c0_151 = arith.constant 0 : index
    %c0_152 = arith.constant 0 : index
    %c0_153 = arith.constant 0 : index
    %241 = vector.load %arg8[%c0_151, %c0_152, %c0_153] : memref<2x1x32xf32, #tpu.memory_space<vmem>>, vector<1x1x32xf32>
    %242 = vector.shape_cast %241 : vector<1x1x32xf32> to vector<1x32xf32>
    %243 = vector.broadcast %242 : vector<1x32xf32> to vector<8x32xf32>
    %244 = arith.addf %240, %243 : vector<8x32xf32>
    %245 = arith.addf %27, %244 : vector<8x32xf32>
    %c0_154 = arith.constant 0 : index
    %c0_155 = arith.constant 0 : index
    %c0_156 = arith.constant 0 : index
    %246 = vector.load %arg9[%c0_154, %c0_155, %c0_156] : memref<2x1x32xf32, #tpu.memory_space<vmem>>, vector<1x1x32xf32>
    %247 = vector.shape_cast %246 : vector<1x1x32xf32> to vector<1x32xf32>
    %c0_157 = arith.constant 0 : index
    %c0_158 = arith.constant 0 : index
    %c0_159 = arith.constant 0 : index
    %248 = vector.load %arg10[%c0_157, %c0_158, %c0_159] : memref<2x1x32xf32, #tpu.memory_space<vmem>>, vector<1x1x32xf32>
    %249 = vector.shape_cast %248 : vector<1x1x32xf32> to vector<1x32xf32>
    %cst_160 = arith.constant dense<0.000000e+00> : vector<8xf32>
    %250 = vector.multi_reduction <add>, %245, %cst_160 [1] : vector<8x32xf32> to vector<8xf32>
    %251 = vector.shape_cast %250 : vector<8xf32> to vector<8x1xf32>
    %cst_161 = arith.constant 3.200000e+01 : f32
    %252 = vector.broadcast %cst_161 : f32 to vector<8x1xf32>
    %253 = arith.divf %251, %252 : vector<8x1xf32>
    %254 = vector.broadcast %253 : vector<8x1xf32> to vector<8x32xf32>
    %255 = arith.subf %245, %254 : vector<8x32xf32>
    %256 = arith.mulf %255, %255 : vector<8x32xf32>
    %cst_162 = arith.constant dense<0.000000e+00> : vector<8xf32>
    %257 = vector.multi_reduction <add>, %256, %cst_162 [1] : vector<8x32xf32> to vector<8xf32>
    %258 = vector.shape_cast %257 : vector<8xf32> to vector<8x1xf32>
    %cst_163 = arith.constant 3.200000e+01 : f32
    %259 = vector.broadcast %cst_163 : f32 to vector<8x1xf32>
    %260 = arith.divf %258, %259 : vector<8x1xf32>
    %261 = vector.broadcast %253 : vector<8x1xf32> to vector<8x32xf32>
    %262 = arith.subf %245, %261 : vector<8x32xf32>
    %cst_164 = arith.constant 9.99999996E-13 : f32
    %263 = vector.broadcast %cst_164 : f32 to vector<8x1xf32>
    %264 = arith.addf %260, %263 : vector<8x1xf32>
    %265 = math.rsqrt %264 : vector<8x1xf32>
    %266 = vector.broadcast %265 : vector<8x1xf32> to vector<8x32xf32>
    %267 = arith.mulf %262, %266 : vector<8x32xf32>
    %268 = vector.broadcast %247 : vector<1x32xf32> to vector<8x32xf32>
    %269 = arith.mulf %267, %268 : vector<8x32xf32>
    %270 = vector.broadcast %249 : vector<1x32xf32> to vector<8x32xf32>
    %271 = arith.addf %269, %270 : vector<8x32xf32>
    %c0_165 = arith.constant 0 : index
    %c0_166 = arith.constant 0 : index
    %c0_167 = arith.constant 0 : index
    %272 = vector.load %arg11[%c0_165, %c0_166, %c0_167] : memref<2x32x128xf32, #tpu.memory_space<vmem>>, vector<1x32x128xf32>
    %273 = vector.shape_cast %272 : vector<1x32x128xf32> to vector<32x128xf32>
    %274 = arith.truncf %271 : vector<8x32xf32> to vector<8x32xbf16>
    %275 = arith.truncf %273 : vector<32x128xf32> to vector<32x128xbf16>
    %cst_168 = arith.constant dense<0.000000e+00> : vector<8x128xf32>
    %276 = tpu.matmul %274, %275, %cst_168 {dimension_numbers = #tpu.dot_dimension_numbers<[1], [0], [0], [1], [0, 0, 1, 1], [], []>} : vector<8x32xbf16>, vector<32x128xbf16>, vector<8x128xf32> -> vector<8x128xf32>
    %c0_169 = arith.constant 0 : index
    %c0_170 = arith.constant 0 : index
    %c0_171 = arith.constant 0 : index
    %277 = vector.load %arg12[%c0_169, %c0_170, %c0_171] : memref<2x1x128xf32, #tpu.memory_space<vmem>>, vector<1x1x128xf32>
    %278 = vector.shape_cast %277 : vector<1x1x128xf32> to vector<1x128xf32>
    %279 = vector.broadcast %278 : vector<1x128xf32> to vector<8x128xf32>
    %280 = arith.addf %276, %279 : vector<8x128xf32>
    %cst_172 = arith.constant 5.000000e-01 : f32
    %281 = vector.broadcast %cst_172 : f32 to vector<8x128xf32>
    %282 = arith.mulf %281, %280 : vector<8x128xf32>
    %cst_173 = arith.constant 4.471500e-02 : f32
    %283 = vector.broadcast %cst_173 : f32 to vector<8x128xf32>
    %284 = arith.mulf %283, %280 : vector<8x128xf32>
    %285 = arith.mulf %284, %280 : vector<8x128xf32>
    %286 = arith.mulf %285, %280 : vector<8x128xf32>
    %287 = arith.addf %280, %286 : vector<8x128xf32>
    %cst_174 = arith.constant 0.797884583 : f32
    %288 = vector.broadcast %cst_174 : f32 to vector<8x128xf32>
    %289 = arith.mulf %288, %287 : vector<8x128xf32>
    %290 = math.tanh %289 : vector<8x128xf32>
    %cst_175 = arith.constant 1.000000e+00 : f32
    %291 = vector.broadcast %cst_175 : f32 to vector<8x128xf32>
    %292 = arith.addf %291, %290 : vector<8x128xf32>
    %293 = arith.mulf %282, %292 : vector<8x128xf32>
    %c0_176 = arith.constant 0 : index
    %c0_177 = arith.constant 0 : index
    %c0_178 = arith.constant 0 : index
    %294 = vector.load %arg13[%c0_176, %c0_177, %c0_178] : memref<2x128x32xf32, #tpu.memory_space<vmem>>, vector<1x128x32xf32>
    %295 = vector.shape_cast %294 : vector<1x128x32xf32> to vector<128x32xf32>
    %296 = arith.truncf %293 : vector<8x128xf32> to vector<8x128xbf16>
    %297 = arith.truncf %295 : vector<128x32xf32> to vector<128x32xbf16>
    %cst_179 = arith.constant dense<0.000000e+00> : vector<8x32xf32>
    %298 = tpu.matmul %296, %297, %cst_179 {dimension_numbers = #tpu.dot_dimension_numbers<[1], [0], [0], [1], [0, 0, 1, 1], [], []>} : vector<8x128xbf16>, vector<128x32xbf16>, vector<8x32xf32> -> vector<8x32xf32>
    %c0_180 = arith.constant 0 : index
    %c0_181 = arith.constant 0 : index
    %c0_182 = arith.constant 0 : index
    %299 = vector.load %arg14[%c0_180, %c0_181, %c0_182] : memref<2x1x32xf32, #tpu.memory_space<vmem>>, vector<1x1x32xf32>
    %300 = vector.shape_cast %299 : vector<1x1x32xf32> to vector<1x32xf32>
    %301 = vector.broadcast %300 : vector<1x32xf32> to vector<8x32xf32>
    %302 = arith.addf %298, %301 : vector<8x32xf32>
    %303 = arith.addf %271, %302 : vector<8x32xf32>
    %c0_183 = arith.constant 0 : index
    %c0_184 = arith.constant 0 : index
    %c0_185 = arith.constant 0 : index
    %304 = vector.load %arg15[%c0_183, %c0_184, %c0_185] : memref<2x1x32xf32, #tpu.memory_space<vmem>>, vector<1x1x32xf32>
    %305 = vector.shape_cast %304 : vector<1x1x32xf32> to vector<1x32xf32>
    %c0_186 = arith.constant 0 : index
    %c0_187 = arith.constant 0 : index
    %c0_188 = arith.constant 0 : index
    %306 = vector.load %arg16[%c0_186, %c0_187, %c0_188] : memref<2x1x32xf32, #tpu.memory_space<vmem>>, vector<1x1x32xf32>
    %307 = vector.shape_cast %306 : vector<1x1x32xf32> to vector<1x32xf32>
    %cst_189 = arith.constant dense<0.000000e+00> : vector<8xf32>
    %308 = vector.multi_reduction <add>, %303, %cst_189 [1] : vector<8x32xf32> to vector<8xf32>
    %309 = vector.shape_cast %308 : vector<8xf32> to vector<8x1xf32>
    %cst_190 = arith.constant 3.200000e+01 : f32
    %310 = vector.broadcast %cst_190 : f32 to vector<8x1xf32>
    %311 = arith.divf %309, %310 : vector<8x1xf32>
    %312 = vector.broadcast %311 : vector<8x1xf32> to vector<8x32xf32>
    %313 = arith.subf %303, %312 : vector<8x32xf32>
    %314 = arith.mulf %313, %313 : vector<8x32xf32>
    %cst_191 = arith.constant dense<0.000000e+00> : vector<8xf32>
    %315 = vector.multi_reduction <add>, %314, %cst_191 [1] : vector<8x32xf32> to vector<8xf32>
    %316 = vector.shape_cast %315 : vector<8xf32> to vector<8x1xf32>
    %cst_192 = arith.constant 3.200000e+01 : f32
    %317 = vector.broadcast %cst_192 : f32 to vector<8x1xf32>
    %318 = arith.divf %316, %317 : vector<8x1xf32>
    %319 = vector.broadcast %311 : vector<8x1xf32> to vector<8x32xf32>
    %320 = arith.subf %303, %319 : vector<8x32xf32>
    %cst_193 = arith.constant 9.99999996E-13 : f32
    %321 = vector.broadcast %cst_193 : f32 to vector<8x1xf32>
    %322 = arith.addf %318, %321 : vector<8x1xf32>
    %323 = math.rsqrt %322 : vector<8x1xf32>
    %324 = vector.broadcast %323 : vector<8x1xf32> to vector<8x32xf32>
    %325 = arith.mulf %320, %324 : vector<8x32xf32>
    %326 = vector.broadcast %305 : vector<1x32xf32> to vector<8x32xf32>
    %327 = arith.mulf %325, %326 : vector<8x32xf32>
    %328 = vector.broadcast %307 : vector<1x32xf32> to vector<8x32xf32>
    %329 = arith.addf %327, %328 : vector<8x32xf32>
    %cst_194 = arith.constant 0.000000e+00 : f32
    %330 = vector.broadcast %cst_194 : f32 to vector<8x32xf32>
    %c1_195 = arith.constant 1 : index
    %c0_196 = arith.constant 0 : index
    %c0_197 = arith.constant 0 : index
    %c0_198 = arith.constant 0 : index
    %331 = vector.load %arg5[%c1_195, %c0_196, %c0_197, %c0_198] : memref<2x12x32x8xf32, #tpu.memory_space<vmem>>, vector<1x1x32x8xf32>
    %332 = vector.shape_cast %331 : vector<1x1x32x8xf32> to vector<32x8xf32>
    %333 = arith.truncf %329 : vector<8x32xf32> to vector<8x32xbf16>
    %334 = arith.truncf %332 : vector<32x8xf32> to vector<32x8xbf16>
    %cst_199 = arith.constant dense<0.000000e+00> : vector<8x8xf32>
    %335 = tpu.matmul %333, %334, %cst_199 {dimension_numbers = #tpu.dot_dimension_numbers<[1], [0], [0], [1], [0, 0, 1, 1], [], []>} : vector<8x32xbf16>, vector<32x8xbf16>, vector<8x8xf32> -> vector<8x8xf32>
    %c1_200 = arith.constant 1 : index
    %c0_201 = arith.constant 0 : index
    %c0_202 = arith.constant 0 : index
    %c0_203 = arith.constant 0 : index
    %336 = vector.load %arg6[%c1_200, %c0_201, %c0_202, %c0_203] : memref<2x12x1x8xf32, #tpu.memory_space<vmem>>, vector<1x1x1x8xf32>
    %337 = vector.shape_cast %336 : vector<1x1x1x8xf32> to vector<1x8xf32>
    %338 = vector.broadcast %337 : vector<1x8xf32> to vector<8x8xf32>
    %339 = arith.addf %335, %338 : vector<8x8xf32>
    %c1_204 = arith.constant 1 : index
    %c4_205 = arith.constant 4 : index
    %c0_206 = arith.constant 0 : index
    %c0_207 = arith.constant 0 : index
    %340 = vector.load %arg5[%c1_204, %c4_205, %c0_206, %c0_207] : memref<2x12x32x8xf32, #tpu.memory_space<vmem>>, vector<1x1x32x8xf32>
    %341 = vector.shape_cast %340 : vector<1x1x32x8xf32> to vector<32x8xf32>
    %342 = arith.truncf %329 : vector<8x32xf32> to vector<8x32xbf16>
    %343 = arith.truncf %341 : vector<32x8xf32> to vector<32x8xbf16>
    %cst_208 = arith.constant dense<0.000000e+00> : vector<8x8xf32>
    %344 = tpu.matmul %342, %343, %cst_208 {dimension_numbers = #tpu.dot_dimension_numbers<[1], [0], [0], [1], [0, 0, 1, 1], [], []>} : vector<8x32xbf16>, vector<32x8xbf16>, vector<8x8xf32> -> vector<8x8xf32>
    %c1_209 = arith.constant 1 : index
    %c4_210 = arith.constant 4 : index
    %c0_211 = arith.constant 0 : index
    %c0_212 = arith.constant 0 : index
    %345 = vector.load %arg6[%c1_209, %c4_210, %c0_211, %c0_212] : memref<2x12x1x8xf32, #tpu.memory_space<vmem>>, vector<1x1x1x8xf32>
    %346 = vector.shape_cast %345 : vector<1x1x1x8xf32> to vector<1x8xf32>
    %347 = vector.broadcast %346 : vector<1x8xf32> to vector<8x8xf32>
    %348 = arith.addf %344, %347 : vector<8x8xf32>
    %c1_213 = arith.constant 1 : index
    %c8_214 = arith.constant 8 : index
    %c0_215 = arith.constant 0 : index
    %c0_216 = arith.constant 0 : index
    %349 = vector.load %arg5[%c1_213, %c8_214, %c0_215, %c0_216] : memref<2x12x32x8xf32, #tpu.memory_space<vmem>>, vector<1x1x32x8xf32>
    %350 = vector.shape_cast %349 : vector<1x1x32x8xf32> to vector<32x8xf32>
    %351 = arith.truncf %329 : vector<8x32xf32> to vector<8x32xbf16>
    %352 = arith.truncf %350 : vector<32x8xf32> to vector<32x8xbf16>
    %cst_217 = arith.constant dense<0.000000e+00> : vector<8x8xf32>
    %353 = tpu.matmul %351, %352, %cst_217 {dimension_numbers = #tpu.dot_dimension_numbers<[1], [0], [0], [1], [0, 0, 1, 1], [], []>} : vector<8x32xbf16>, vector<32x8xbf16>, vector<8x8xf32> -> vector<8x8xf32>
    %c1_218 = arith.constant 1 : index
    %c8_219 = arith.constant 8 : index
    %c0_220 = arith.constant 0 : index
    %c0_221 = arith.constant 0 : index
    %354 = vector.load %arg6[%c1_218, %c8_219, %c0_220, %c0_221] : memref<2x12x1x8xf32, #tpu.memory_space<vmem>>, vector<1x1x1x8xf32>
    %355 = vector.shape_cast %354 : vector<1x1x1x8xf32> to vector<1x8xf32>
    %356 = vector.broadcast %355 : vector<1x8xf32> to vector<8x8xf32>
    %357 = arith.addf %353, %356 : vector<8x8xf32>
    %358 = arith.truncf %339 : vector<8x8xf32> to vector<8x8xbf16>
    %359 = arith.truncf %348 : vector<8x8xf32> to vector<8x8xbf16>
    "tpu.trace_start"() <{level = 10 : i32, message = "qd,kd->qk"}> : () -> ()
    %cst_222 = arith.constant dense<0.000000e+00> : vector<8x8xf32>
    %360 = tpu.matmul %358, %359, %cst_222 {dimension_numbers = #tpu.dot_dimension_numbers<[1], [1], [0], [0], [0, 0, 1, 0], [], []>} : vector<8x8xbf16>, vector<8x8xbf16>, vector<8x8xf32> -> vector<8x8xf32>
    "tpu.trace_stop"() : () -> ()
    %cst_223 = arith.constant 0.353553385 : f32
    %361 = vector.broadcast %cst_223 : f32 to vector<8x8xf32>
    %362 = arith.mulf %360, %361 : vector<8x8xf32>
    %363 = vector.broadcast %3 : vector<1x8xf32> to vector<8x8xf32>
    %364 = arith.addf %362, %363 : vector<8x8xf32>
    %cst_224 = arith.constant dense<0xFF800000> : vector<8xf32>
    %365 = vector.multi_reduction <maximumf>, %364, %cst_224 [1] : vector<8x8xf32> to vector<8xf32>
    %366 = vector.shape_cast %365 : vector<8xf32> to vector<8x1xf32>
    %367 = vector.broadcast %366 : vector<8x1xf32> to vector<8x8xf32>
    %368 = arith.subf %364, %367 : vector<8x8xf32>
    %369 = math.exp %368 : vector<8x8xf32>
    %cst_225 = arith.constant dense<0.000000e+00> : vector<8xf32>
    %370 = vector.multi_reduction <add>, %369, %cst_225 [1] : vector<8x8xf32> to vector<8xf32>
    %371 = vector.shape_cast %370 : vector<8xf32> to vector<8x1xf32>
    %372 = tpu.reciprocal %371 {approx = true} : vector<8x1xf32> -> vector<8x1xf32>
    %373 = vector.broadcast %372 : vector<8x1xf32> to vector<8x8xf32>
    %374 = arith.mulf %369, %373 : vector<8x8xf32>
    %375 = arith.truncf %374 : vector<8x8xf32> to vector<8x8xbf16>
    %376 = arith.truncf %357 : vector<8x8xf32> to vector<8x8xbf16>
    %cst_226 = arith.constant dense<0.000000e+00> : vector<8x8xf32>
    %377 = tpu.matmul %375, %376, %cst_226 {dimension_numbers = #tpu.dot_dimension_numbers<[1], [0], [0], [1], [0, 0, 1, 1], [], []>} : vector<8x8xbf16>, vector<8x8xbf16>, vector<8x8xf32> -> vector<8x8xf32>
    %c1_227 = arith.constant 1 : index
    %c0_228 = arith.constant 0 : index
    %c0_229 = arith.constant 0 : index
    %c0_230 = arith.constant 0 : index
    %378 = vector.load %arg7[%c1_227, %c0_228, %c0_229, %c0_230] : memref<2x4x8x32xf32, #tpu.memory_space<vmem>>, vector<1x1x8x32xf32>
    %379 = vector.shape_cast %378 : vector<1x1x8x32xf32> to vector<8x32xf32>
    %380 = arith.truncf %377 : vector<8x8xf32> to vector<8x8xbf16>
    %381 = arith.truncf %379 : vector<8x32xf32> to vector<8x32xbf16>
    %cst_231 = arith.constant dense<0.000000e+00> : vector<8x32xf32>
    %382 = tpu.matmul %380, %381, %cst_231 {dimension_numbers = #tpu.dot_dimension_numbers<[1], [0], [0], [1], [0, 0, 1, 1], [], []>} : vector<8x8xbf16>, vector<8x32xbf16>, vector<8x32xf32> -> vector<8x32xf32>
    %383 = arith.addf %330, %382 : vector<8x32xf32>
    %c1_232 = arith.constant 1 : index
    %c1_233 = arith.constant 1 : index
    %c0_234 = arith.constant 0 : index
    %c0_235 = arith.constant 0 : index
    %384 = vector.load %arg5[%c1_232, %c1_233, %c0_234, %c0_235] : memref<2x12x32x8xf32, #tpu.memory_space<vmem>>, vector<1x1x32x8xf32>
    %385 = vector.shape_cast %384 : vector<1x1x32x8xf32> to vector<32x8xf32>
    %386 = arith.truncf %329 : vector<8x32xf32> to vector<8x32xbf16>
    %387 = arith.truncf %385 : vector<32x8xf32> to vector<32x8xbf16>
    %cst_236 = arith.constant dense<0.000000e+00> : vector<8x8xf32>
    %388 = tpu.matmul %386, %387, %cst_236 {dimension_numbers = #tpu.dot_dimension_numbers<[1], [0], [0], [1], [0, 0, 1, 1], [], []>} : vector<8x32xbf16>, vector<32x8xbf16>, vector<8x8xf32> -> vector<8x8xf32>
    %c1_237 = arith.constant 1 : index
    %c1_238 = arith.constant 1 : index
    %c0_239 = arith.constant 0 : index
    %c0_240 = arith.constant 0 : index
    %389 = vector.load %arg6[%c1_237, %c1_238, %c0_239, %c0_240] : memref<2x12x1x8xf32, #tpu.memory_space<vmem>>, vector<1x1x1x8xf32>
    %390 = vector.shape_cast %389 : vector<1x1x1x8xf32> to vector<1x8xf32>
    %391 = vector.broadcast %390 : vector<1x8xf32> to vector<8x8xf32>
    %392 = arith.addf %388, %391 : vector<8x8xf32>
    %c1_241 = arith.constant 1 : index
    %c5_242 = arith.constant 5 : index
    %c0_243 = arith.constant 0 : index
    %c0_244 = arith.constant 0 : index
    %393 = vector.load %arg5[%c1_241, %c5_242, %c0_243, %c0_244] : memref<2x12x32x8xf32, #tpu.memory_space<vmem>>, vector<1x1x32x8xf32>
    %394 = vector.shape_cast %393 : vector<1x1x32x8xf32> to vector<32x8xf32>
    %395 = arith.truncf %329 : vector<8x32xf32> to vector<8x32xbf16>
    %396 = arith.truncf %394 : vector<32x8xf32> to vector<32x8xbf16>
    %cst_245 = arith.constant dense<0.000000e+00> : vector<8x8xf32>
    %397 = tpu.matmul %395, %396, %cst_245 {dimension_numbers = #tpu.dot_dimension_numbers<[1], [0], [0], [1], [0, 0, 1, 1], [], []>} : vector<8x32xbf16>, vector<32x8xbf16>, vector<8x8xf32> -> vector<8x8xf32>
    %c1_246 = arith.constant 1 : index
    %c5_247 = arith.constant 5 : index
    %c0_248 = arith.constant 0 : index
    %c0_249 = arith.constant 0 : index
    %398 = vector.load %arg6[%c1_246, %c5_247, %c0_248, %c0_249] : memref<2x12x1x8xf32, #tpu.memory_space<vmem>>, vector<1x1x1x8xf32>
    %399 = vector.shape_cast %398 : vector<1x1x1x8xf32> to vector<1x8xf32>
    %400 = vector.broadcast %399 : vector<1x8xf32> to vector<8x8xf32>
    %401 = arith.addf %397, %400 : vector<8x8xf32>
    %c1_250 = arith.constant 1 : index
    %c9_251 = arith.constant 9 : index
    %c0_252 = arith.constant 0 : index
    %c0_253 = arith.constant 0 : index
    %402 = vector.load %arg5[%c1_250, %c9_251, %c0_252, %c0_253] : memref<2x12x32x8xf32, #tpu.memory_space<vmem>>, vector<1x1x32x8xf32>
    %403 = vector.shape_cast %402 : vector<1x1x32x8xf32> to vector<32x8xf32>
    %404 = arith.truncf %329 : vector<8x32xf32> to vector<8x32xbf16>
    %405 = arith.truncf %403 : vector<32x8xf32> to vector<32x8xbf16>
    %cst_254 = arith.constant dense<0.000000e+00> : vector<8x8xf32>
    %406 = tpu.matmul %404, %405, %cst_254 {dimension_numbers = #tpu.dot_dimension_numbers<[1], [0], [0], [1], [0, 0, 1, 1], [], []>} : vector<8x32xbf16>, vector<32x8xbf16>, vector<8x8xf32> -> vector<8x8xf32>
    %c1_255 = arith.constant 1 : index
    %c9_256 = arith.constant 9 : index
    %c0_257 = arith.constant 0 : index
    %c0_258 = arith.constant 0 : index
    %407 = vector.load %arg6[%c1_255, %c9_256, %c0_257, %c0_258] : memref<2x12x1x8xf32, #tpu.memory_space<vmem>>, vector<1x1x1x8xf32>
    %408 = vector.shape_cast %407 : vector<1x1x1x8xf32> to vector<1x8xf32>
    %409 = vector.broadcast %408 : vector<1x8xf32> to vector<8x8xf32>
    %410 = arith.addf %406, %409 : vector<8x8xf32>
    %411 = arith.truncf %392 : vector<8x8xf32> to vector<8x8xbf16>
    %412 = arith.truncf %401 : vector<8x8xf32> to vector<8x8xbf16>
    "tpu.trace_start"() <{level = 10 : i32, message = "qd,kd->qk"}> : () -> ()
    %cst_259 = arith.constant dense<0.000000e+00> : vector<8x8xf32>
    %413 = tpu.matmul %411, %412, %cst_259 {dimension_numbers = #tpu.dot_dimension_numbers<[1], [1], [0], [0], [0, 0, 1, 0], [], []>} : vector<8x8xbf16>, vector<8x8xbf16>, vector<8x8xf32> -> vector<8x8xf32>
    "tpu.trace_stop"() : () -> ()
    %cst_260 = arith.constant 0.353553385 : f32
    %414 = vector.broadcast %cst_260 : f32 to vector<8x8xf32>
    %415 = arith.mulf %413, %414 : vector<8x8xf32>
    %416 = vector.broadcast %3 : vector<1x8xf32> to vector<8x8xf32>
    %417 = arith.addf %415, %416 : vector<8x8xf32>
    %cst_261 = arith.constant dense<0xFF800000> : vector<8xf32>
    %418 = vector.multi_reduction <maximumf>, %417, %cst_261 [1] : vector<8x8xf32> to vector<8xf32>
    %419 = vector.shape_cast %418 : vector<8xf32> to vector<8x1xf32>
    %420 = vector.broadcast %419 : vector<8x1xf32> to vector<8x8xf32>
    %421 = arith.subf %417, %420 : vector<8x8xf32>
    %422 = math.exp %421 : vector<8x8xf32>
    %cst_262 = arith.constant dense<0.000000e+00> : vector<8xf32>
    %423 = vector.multi_reduction <add>, %422, %cst_262 [1] : vector<8x8xf32> to vector<8xf32>
    %424 = vector.shape_cast %423 : vector<8xf32> to vector<8x1xf32>
    %425 = tpu.reciprocal %424 {approx = true} : vector<8x1xf32> -> vector<8x1xf32>
    %426 = vector.broadcast %425 : vector<8x1xf32> to vector<8x8xf32>
    %427 = arith.mulf %422, %426 : vector<8x8xf32>
    %428 = arith.truncf %427 : vector<8x8xf32> to vector<8x8xbf16>
    %429 = arith.truncf %410 : vector<8x8xf32> to vector<8x8xbf16>
    %cst_263 = arith.constant dense<0.000000e+00> : vector<8x8xf32>
    %430 = tpu.matmul %428, %429, %cst_263 {dimension_numbers = #tpu.dot_dimension_numbers<[1], [0], [0], [1], [0, 0, 1, 1], [], []>} : vector<8x8xbf16>, vector<8x8xbf16>, vector<8x8xf32> -> vector<8x8xf32>
    %c1_264 = arith.constant 1 : index
    %c1_265 = arith.constant 1 : index
    %c0_266 = arith.constant 0 : index
    %c0_267 = arith.constant 0 : index
    %431 = vector.load %arg7[%c1_264, %c1_265, %c0_266, %c0_267] : memref<2x4x8x32xf32, #tpu.memory_space<vmem>>, vector<1x1x8x32xf32>
    %432 = vector.shape_cast %431 : vector<1x1x8x32xf32> to vector<8x32xf32>
    %433 = arith.truncf %430 : vector<8x8xf32> to vector<8x8xbf16>
    %434 = arith.truncf %432 : vector<8x32xf32> to vector<8x32xbf16>
    %cst_268 = arith.constant dense<0.000000e+00> : vector<8x32xf32>
    %435 = tpu.matmul %433, %434, %cst_268 {dimension_numbers = #tpu.dot_dimension_numbers<[1], [0], [0], [1], [0, 0, 1, 1], [], []>} : vector<8x8xbf16>, vector<8x32xbf16>, vector<8x32xf32> -> vector<8x32xf32>
    %436 = arith.addf %383, %435 : vector<8x32xf32>
    %c1_269 = arith.constant 1 : index
    %c2_270 = arith.constant 2 : index
    %c0_271 = arith.constant 0 : index
    %c0_272 = arith.constant 0 : index
    %437 = vector.load %arg5[%c1_269, %c2_270, %c0_271, %c0_272] : memref<2x12x32x8xf32, #tpu.memory_space<vmem>>, vector<1x1x32x8xf32>
    %438 = vector.shape_cast %437 : vector<1x1x32x8xf32> to vector<32x8xf32>
    %439 = arith.truncf %329 : vector<8x32xf32> to vector<8x32xbf16>
    %440 = arith.truncf %438 : vector<32x8xf32> to vector<32x8xbf16>
    %cst_273 = arith.constant dense<0.000000e+00> : vector<8x8xf32>
    %441 = tpu.matmul %439, %440, %cst_273 {dimension_numbers = #tpu.dot_dimension_numbers<[1], [0], [0], [1], [0, 0, 1, 1], [], []>} : vector<8x32xbf16>, vector<32x8xbf16>, vector<8x8xf32> -> vector<8x8xf32>
    %c1_274 = arith.constant 1 : index
    %c2_275 = arith.constant 2 : index
    %c0_276 = arith.constant 0 : index
    %c0_277 = arith.constant 0 : index
    %442 = vector.load %arg6[%c1_274, %c2_275, %c0_276, %c0_277] : memref<2x12x1x8xf32, #tpu.memory_space<vmem>>, vector<1x1x1x8xf32>
    %443 = vector.shape_cast %442 : vector<1x1x1x8xf32> to vector<1x8xf32>
    %444 = vector.broadcast %443 : vector<1x8xf32> to vector<8x8xf32>
    %445 = arith.addf %441, %444 : vector<8x8xf32>
    %c1_278 = arith.constant 1 : index
    %c6_279 = arith.constant 6 : index
    %c0_280 = arith.constant 0 : index
    %c0_281 = arith.constant 0 : index
    %446 = vector.load %arg5[%c1_278, %c6_279, %c0_280, %c0_281] : memref<2x12x32x8xf32, #tpu.memory_space<vmem>>, vector<1x1x32x8xf32>
    %447 = vector.shape_cast %446 : vector<1x1x32x8xf32> to vector<32x8xf32>
    %448 = arith.truncf %329 : vector<8x32xf32> to vector<8x32xbf16>
    %449 = arith.truncf %447 : vector<32x8xf32> to vector<32x8xbf16>
    %cst_282 = arith.constant dense<0.000000e+00> : vector<8x8xf32>
    %450 = tpu.matmul %448, %449, %cst_282 {dimension_numbers = #tpu.dot_dimension_numbers<[1], [0], [0], [1], [0, 0, 1, 1], [], []>} : vector<8x32xbf16>, vector<32x8xbf16>, vector<8x8xf32> -> vector<8x8xf32>
    %c1_283 = arith.constant 1 : index
    %c6_284 = arith.constant 6 : index
    %c0_285 = arith.constant 0 : index
    %c0_286 = arith.constant 0 : index
    %451 = vector.load %arg6[%c1_283, %c6_284, %c0_285, %c0_286] : memref<2x12x1x8xf32, #tpu.memory_space<vmem>>, vector<1x1x1x8xf32>
    %452 = vector.shape_cast %451 : vector<1x1x1x8xf32> to vector<1x8xf32>
    %453 = vector.broadcast %452 : vector<1x8xf32> to vector<8x8xf32>
    %454 = arith.addf %450, %453 : vector<8x8xf32>
    %c1_287 = arith.constant 1 : index
    %c10_288 = arith.constant 10 : index
    %c0_289 = arith.constant 0 : index
    %c0_290 = arith.constant 0 : index
    %455 = vector.load %arg5[%c1_287, %c10_288, %c0_289, %c0_290] : memref<2x12x32x8xf32, #tpu.memory_space<vmem>>, vector<1x1x32x8xf32>
    %456 = vector.shape_cast %455 : vector<1x1x32x8xf32> to vector<32x8xf32>
    %457 = arith.truncf %329 : vector<8x32xf32> to vector<8x32xbf16>
    %458 = arith.truncf %456 : vector<32x8xf32> to vector<32x8xbf16>
    %cst_291 = arith.constant dense<0.000000e+00> : vector<8x8xf32>
    %459 = tpu.matmul %457, %458, %cst_291 {dimension_numbers = #tpu.dot_dimension_numbers<[1], [0], [0], [1], [0, 0, 1, 1], [], []>} : vector<8x32xbf16>, vector<32x8xbf16>, vector<8x8xf32> -> vector<8x8xf32>
    %c1_292 = arith.constant 1 : index
    %c10_293 = arith.constant 10 : index
    %c0_294 = arith.constant 0 : index
    %c0_295 = arith.constant 0 : index
    %460 = vector.load %arg6[%c1_292, %c10_293, %c0_294, %c0_295] : memref<2x12x1x8xf32, #tpu.memory_space<vmem>>, vector<1x1x1x8xf32>
    %461 = vector.shape_cast %460 : vector<1x1x1x8xf32> to vector<1x8xf32>
    %462 = vector.broadcast %461 : vector<1x8xf32> to vector<8x8xf32>
    %463 = arith.addf %459, %462 : vector<8x8xf32>
    %464 = arith.truncf %445 : vector<8x8xf32> to vector<8x8xbf16>
    %465 = arith.truncf %454 : vector<8x8xf32> to vector<8x8xbf16>
    "tpu.trace_start"() <{level = 10 : i32, message = "qd,kd->qk"}> : () -> ()
    %cst_296 = arith.constant dense<0.000000e+00> : vector<8x8xf32>
    %466 = tpu.matmul %464, %465, %cst_296 {dimension_numbers = #tpu.dot_dimension_numbers<[1], [1], [0], [0], [0, 0, 1, 0], [], []>} : vector<8x8xbf16>, vector<8x8xbf16>, vector<8x8xf32> -> vector<8x8xf32>
    "tpu.trace_stop"() : () -> ()
    %cst_297 = arith.constant 0.353553385 : f32
    %467 = vector.broadcast %cst_297 : f32 to vector<8x8xf32>
    %468 = arith.mulf %466, %467 : vector<8x8xf32>
    %469 = vector.broadcast %3 : vector<1x8xf32> to vector<8x8xf32>
    %470 = arith.addf %468, %469 : vector<8x8xf32>
    %cst_298 = arith.constant dense<0xFF800000> : vector<8xf32>
    %471 = vector.multi_reduction <maximumf>, %470, %cst_298 [1] : vector<8x8xf32> to vector<8xf32>
    %472 = vector.shape_cast %471 : vector<8xf32> to vector<8x1xf32>
    %473 = vector.broadcast %472 : vector<8x1xf32> to vector<8x8xf32>
    %474 = arith.subf %470, %473 : vector<8x8xf32>
    %475 = math.exp %474 : vector<8x8xf32>
    %cst_299 = arith.constant dense<0.000000e+00> : vector<8xf32>
    %476 = vector.multi_reduction <add>, %475, %cst_299 [1] : vector<8x8xf32> to vector<8xf32>
    %477 = vector.shape_cast %476 : vector<8xf32> to vector<8x1xf32>
    %478 = tpu.reciprocal %477 {approx = true} : vector<8x1xf32> -> vector<8x1xf32>
    %479 = vector.broadcast %478 : vector<8x1xf32> to vector<8x8xf32>
    %480 = arith.mulf %475, %479 : vector<8x8xf32>
    %481 = arith.truncf %480 : vector<8x8xf32> to vector<8x8xbf16>
    %482 = arith.truncf %463 : vector<8x8xf32> to vector<8x8xbf16>
    %cst_300 = arith.constant dense<0.000000e+00> : vector<8x8xf32>
    %483 = tpu.matmul %481, %482, %cst_300 {dimension_numbers = #tpu.dot_dimension_numbers<[1], [0], [0], [1], [0, 0, 1, 1], [], []>} : vector<8x8xbf16>, vector<8x8xbf16>, vector<8x8xf32> -> vector<8x8xf32>
    %c1_301 = arith.constant 1 : index
    %c2_302 = arith.constant 2 : index
    %c0_303 = arith.constant 0 : index
    %c0_304 = arith.constant 0 : index
    %484 = vector.load %arg7[%c1_301, %c2_302, %c0_303, %c0_304] : memref<2x4x8x32xf32, #tpu.memory_space<vmem>>, vector<1x1x8x32xf32>
    %485 = vector.shape_cast %484 : vector<1x1x8x32xf32> to vector<8x32xf32>
    %486 = arith.truncf %483 : vector<8x8xf32> to vector<8x8xbf16>
    %487 = arith.truncf %485 : vector<8x32xf32> to vector<8x32xbf16>
    %cst_305 = arith.constant dense<0.000000e+00> : vector<8x32xf32>
    %488 = tpu.matmul %486, %487, %cst_305 {dimension_numbers = #tpu.dot_dimension_numbers<[1], [0], [0], [1], [0, 0, 1, 1], [], []>} : vector<8x8xbf16>, vector<8x32xbf16>, vector<8x32xf32> -> vector<8x32xf32>
    %489 = arith.addf %436, %488 : vector<8x32xf32>
    %c1_306 = arith.constant 1 : index
    %c3_307 = arith.constant 3 : index
    %c0_308 = arith.constant 0 : index
    %c0_309 = arith.constant 0 : index
    %490 = vector.load %arg5[%c1_306, %c3_307, %c0_308, %c0_309] : memref<2x12x32x8xf32, #tpu.memory_space<vmem>>, vector<1x1x32x8xf32>
    %491 = vector.shape_cast %490 : vector<1x1x32x8xf32> to vector<32x8xf32>
    %492 = arith.truncf %329 : vector<8x32xf32> to vector<8x32xbf16>
    %493 = arith.truncf %491 : vector<32x8xf32> to vector<32x8xbf16>
    %cst_310 = arith.constant dense<0.000000e+00> : vector<8x8xf32>
    %494 = tpu.matmul %492, %493, %cst_310 {dimension_numbers = #tpu.dot_dimension_numbers<[1], [0], [0], [1], [0, 0, 1, 1], [], []>} : vector<8x32xbf16>, vector<32x8xbf16>, vector<8x8xf32> -> vector<8x8xf32>
    %c1_311 = arith.constant 1 : index
    %c3_312 = arith.constant 3 : index
    %c0_313 = arith.constant 0 : index
    %c0_314 = arith.constant 0 : index
    %495 = vector.load %arg6[%c1_311, %c3_312, %c0_313, %c0_314] : memref<2x12x1x8xf32, #tpu.memory_space<vmem>>, vector<1x1x1x8xf32>
    %496 = vector.shape_cast %495 : vector<1x1x1x8xf32> to vector<1x8xf32>
    %497 = vector.broadcast %496 : vector<1x8xf32> to vector<8x8xf32>
    %498 = arith.addf %494, %497 : vector<8x8xf32>
    %c1_315 = arith.constant 1 : index
    %c7_316 = arith.constant 7 : index
    %c0_317 = arith.constant 0 : index
    %c0_318 = arith.constant 0 : index
    %499 = vector.load %arg5[%c1_315, %c7_316, %c0_317, %c0_318] : memref<2x12x32x8xf32, #tpu.memory_space<vmem>>, vector<1x1x32x8xf32>
    %500 = vector.shape_cast %499 : vector<1x1x32x8xf32> to vector<32x8xf32>
    %501 = arith.truncf %329 : vector<8x32xf32> to vector<8x32xbf16>
    %502 = arith.truncf %500 : vector<32x8xf32> to vector<32x8xbf16>
    %cst_319 = arith.constant dense<0.000000e+00> : vector<8x8xf32>
    %503 = tpu.matmul %501, %502, %cst_319 {dimension_numbers = #tpu.dot_dimension_numbers<[1], [0], [0], [1], [0, 0, 1, 1], [], []>} : vector<8x32xbf16>, vector<32x8xbf16>, vector<8x8xf32> -> vector<8x8xf32>
    %c1_320 = arith.constant 1 : index
    %c7_321 = arith.constant 7 : index
    %c0_322 = arith.constant 0 : index
    %c0_323 = arith.constant 0 : index
    %504 = vector.load %arg6[%c1_320, %c7_321, %c0_322, %c0_323] : memref<2x12x1x8xf32, #tpu.memory_space<vmem>>, vector<1x1x1x8xf32>
    %505 = vector.shape_cast %504 : vector<1x1x1x8xf32> to vector<1x8xf32>
    %506 = vector.broadcast %505 : vector<1x8xf32> to vector<8x8xf32>
    %507 = arith.addf %503, %506 : vector<8x8xf32>
    %c1_324 = arith.constant 1 : index
    %c11_325 = arith.constant 11 : index
    %c0_326 = arith.constant 0 : index
    %c0_327 = arith.constant 0 : index
    %508 = vector.load %arg5[%c1_324, %c11_325, %c0_326, %c0_327] : memref<2x12x32x8xf32, #tpu.memory_space<vmem>>, vector<1x1x32x8xf32>
    %509 = vector.shape_cast %508 : vector<1x1x32x8xf32> to vector<32x8xf32>
    %510 = arith.truncf %329 : vector<8x32xf32> to vector<8x32xbf16>
    %511 = arith.truncf %509 : vector<32x8xf32> to vector<32x8xbf16>
    %cst_328 = arith.constant dense<0.000000e+00> : vector<8x8xf32>
    %512 = tpu.matmul %510, %511, %cst_328 {dimension_numbers = #tpu.dot_dimension_numbers<[1], [0], [0], [1], [0, 0, 1, 1], [], []>} : vector<8x32xbf16>, vector<32x8xbf16>, vector<8x8xf32> -> vector<8x8xf32>
    %c1_329 = arith.constant 1 : index
    %c11_330 = arith.constant 11 : index
    %c0_331 = arith.constant 0 : index
    %c0_332 = arith.constant 0 : index
    %513 = vector.load %arg6[%c1_329, %c11_330, %c0_331, %c0_332] : memref<2x12x1x8xf32, #tpu.memory_space<vmem>>, vector<1x1x1x8xf32>
    %514 = vector.shape_cast %513 : vector<1x1x1x8xf32> to vector<1x8xf32>
    %515 = vector.broadcast %514 : vector<1x8xf32> to vector<8x8xf32>
    %516 = arith.addf %512, %515 : vector<8x8xf32>
    %517 = arith.truncf %498 : vector<8x8xf32> to vector<8x8xbf16>
    %518 = arith.truncf %507 : vector<8x8xf32> to vector<8x8xbf16>
    "tpu.trace_start"() <{level = 10 : i32, message = "qd,kd->qk"}> : () -> ()
    %cst_333 = arith.constant dense<0.000000e+00> : vector<8x8xf32>
    %519 = tpu.matmul %517, %518, %cst_333 {dimension_numbers = #tpu.dot_dimension_numbers<[1], [1], [0], [0], [0, 0, 1, 0], [], []>} : vector<8x8xbf16>, vector<8x8xbf16>, vector<8x8xf32> -> vector<8x8xf32>
    "tpu.trace_stop"() : () -> ()
    %cst_334 = arith.constant 0.353553385 : f32
    %520 = vector.broadcast %cst_334 : f32 to vector<8x8xf32>
    %521 = arith.mulf %519, %520 : vector<8x8xf32>
    %522 = vector.broadcast %3 : vector<1x8xf32> to vector<8x8xf32>
    %523 = arith.addf %521, %522 : vector<8x8xf32>
    %cst_335 = arith.constant dense<0xFF800000> : vector<8xf32>
    %524 = vector.multi_reduction <maximumf>, %523, %cst_335 [1] : vector<8x8xf32> to vector<8xf32>
    %525 = vector.shape_cast %524 : vector<8xf32> to vector<8x1xf32>
    %526 = vector.broadcast %525 : vector<8x1xf32> to vector<8x8xf32>
    %527 = arith.subf %523, %526 : vector<8x8xf32>
    %528 = math.exp %527 : vector<8x8xf32>
    %cst_336 = arith.constant dense<0.000000e+00> : vector<8xf32>
    %529 = vector.multi_reduction <add>, %528, %cst_336 [1] : vector<8x8xf32> to vector<8xf32>
    %530 = vector.shape_cast %529 : vector<8xf32> to vector<8x1xf32>
    %531 = tpu.reciprocal %530 {approx = true} : vector<8x1xf32> -> vector<8x1xf32>
    %532 = vector.broadcast %531 : vector<8x1xf32> to vector<8x8xf32>
    %533 = arith.mulf %528, %532 : vector<8x8xf32>
    %534 = arith.truncf %533 : vector<8x8xf32> to vector<8x8xbf16>
    %535 = arith.truncf %516 : vector<8x8xf32> to vector<8x8xbf16>
    %cst_337 = arith.constant dense<0.000000e+00> : vector<8x8xf32>
    %536 = tpu.matmul %534, %535, %cst_337 {dimension_numbers = #tpu.dot_dimension_numbers<[1], [0], [0], [1], [0, 0, 1, 1], [], []>} : vector<8x8xbf16>, vector<8x8xbf16>, vector<8x8xf32> -> vector<8x8xf32>
    %c1_338 = arith.constant 1 : index
    %c3_339 = arith.constant 3 : index
    %c0_340 = arith.constant 0 : index
    %c0_341 = arith.constant 0 : index
    %537 = vector.load %arg7[%c1_338, %c3_339, %c0_340, %c0_341] : memref<2x4x8x32xf32, #tpu.memory_space<vmem>>, vector<1x1x8x32xf32>
    %538 = vector.shape_cast %537 : vector<1x1x8x32xf32> to vector<8x32xf32>
    %539 = arith.truncf %536 : vector<8x8xf32> to vector<8x8xbf16>
    %540 = arith.truncf %538 : vector<8x32xf32> to vector<8x32xbf16>
    %cst_342 = arith.constant dense<0.000000e+00> : vector<8x32xf32>
    %541 = tpu.matmul %539, %540, %cst_342 {dimension_numbers = #tpu.dot_dimension_numbers<[1], [0], [0], [1], [0, 0, 1, 1], [], []>} : vector<8x8xbf16>, vector<8x32xbf16>, vector<8x32xf32> -> vector<8x32xf32>
    %542 = arith.addf %489, %541 : vector<8x32xf32>
    %c1_343 = arith.constant 1 : index
    %c0_344 = arith.constant 0 : index
    %c0_345 = arith.constant 0 : index
    %543 = vector.load %arg8[%c1_343, %c0_344, %c0_345] : memref<2x1x32xf32, #tpu.memory_space<vmem>>, vector<1x1x32xf32>
    %544 = vector.shape_cast %543 : vector<1x1x32xf32> to vector<1x32xf32>
    %545 = vector.broadcast %544 : vector<1x32xf32> to vector<8x32xf32>
    %546 = arith.addf %542, %545 : vector<8x32xf32>
    %547 = arith.addf %329, %546 : vector<8x32xf32>
    %c1_346 = arith.constant 1 : index
    %c0_347 = arith.constant 0 : index
    %c0_348 = arith.constant 0 : index
    %548 = vector.load %arg9[%c1_346, %c0_347, %c0_348] : memref<2x1x32xf32, #tpu.memory_space<vmem>>, vector<1x1x32xf32>
    %549 = vector.shape_cast %548 : vector<1x1x32xf32> to vector<1x32xf32>
    %c1_349 = arith.constant 1 : index
    %c0_350 = arith.constant 0 : index
    %c0_351 = arith.constant 0 : index
    %550 = vector.load %arg10[%c1_349, %c0_350, %c0_351] : memref<2x1x32xf32, #tpu.memory_space<vmem>>, vector<1x1x32xf32>
    %551 = vector.shape_cast %550 : vector<1x1x32xf32> to vector<1x32xf32>
    %cst_352 = arith.constant dense<0.000000e+00> : vector<8xf32>
    %552 = vector.multi_reduction <add>, %547, %cst_352 [1] : vector<8x32xf32> to vector<8xf32>
    %553 = vector.shape_cast %552 : vector<8xf32> to vector<8x1xf32>
    %cst_353 = arith.constant 3.200000e+01 : f32
    %554 = vector.broadcast %cst_353 : f32 to vector<8x1xf32>
    %555 = arith.divf %553, %554 : vector<8x1xf32>
    %556 = vector.broadcast %555 : vector<8x1xf32> to vector<8x32xf32>
    %557 = arith.subf %547, %556 : vector<8x32xf32>
    %558 = arith.mulf %557, %557 : vector<8x32xf32>
    %cst_354 = arith.constant dense<0.000000e+00> : vector<8xf32>
    %559 = vector.multi_reduction <add>, %558, %cst_354 [1] : vector<8x32xf32> to vector<8xf32>
    %560 = vector.shape_cast %559 : vector<8xf32> to vector<8x1xf32>
    %cst_355 = arith.constant 3.200000e+01 : f32
    %561 = vector.broadcast %cst_355 : f32 to vector<8x1xf32>
    %562 = arith.divf %560, %561 : vector<8x1xf32>
    %563 = vector.broadcast %555 : vector<8x1xf32> to vector<8x32xf32>
    %564 = arith.subf %547, %563 : vector<8x32xf32>
    %cst_356 = arith.constant 9.99999996E-13 : f32
    %565 = vector.broadcast %cst_356 : f32 to vector<8x1xf32>
    %566 = arith.addf %562, %565 : vector<8x1xf32>
    %567 = math.rsqrt %566 : vector<8x1xf32>
    %568 = vector.broadcast %567 : vector<8x1xf32> to vector<8x32xf32>
    %569 = arith.mulf %564, %568 : vector<8x32xf32>
    %570 = vector.broadcast %549 : vector<1x32xf32> to vector<8x32xf32>
    %571 = arith.mulf %569, %570 : vector<8x32xf32>
    %572 = vector.broadcast %551 : vector<1x32xf32> to vector<8x32xf32>
    %573 = arith.addf %571, %572 : vector<8x32xf32>
    %c1_357 = arith.constant 1 : index
    %c0_358 = arith.constant 0 : index
    %c0_359 = arith.constant 0 : index
    %574 = vector.load %arg11[%c1_357, %c0_358, %c0_359] : memref<2x32x128xf32, #tpu.memory_space<vmem>>, vector<1x32x128xf32>
    %575 = vector.shape_cast %574 : vector<1x32x128xf32> to vector<32x128xf32>
    %576 = arith.truncf %573 : vector<8x32xf32> to vector<8x32xbf16>
    %577 = arith.truncf %575 : vector<32x128xf32> to vector<32x128xbf16>
    %cst_360 = arith.constant dense<0.000000e+00> : vector<8x128xf32>
    %578 = tpu.matmul %576, %577, %cst_360 {dimension_numbers = #tpu.dot_dimension_numbers<[1], [0], [0], [1], [0, 0, 1, 1], [], []>} : vector<8x32xbf16>, vector<32x128xbf16>, vector<8x128xf32> -> vector<8x128xf32>
    %c1_361 = arith.constant 1 : index
    %c0_362 = arith.constant 0 : index
    %c0_363 = arith.constant 0 : index
    %579 = vector.load %arg12[%c1_361, %c0_362, %c0_363] : memref<2x1x128xf32, #tpu.memory_space<vmem>>, vector<1x1x128xf32>
    %580 = vector.shape_cast %579 : vector<1x1x128xf32> to vector<1x128xf32>
    %581 = vector.broadcast %580 : vector<1x128xf32> to vector<8x128xf32>
    %582 = arith.addf %578, %581 : vector<8x128xf32>
    %cst_364 = arith.constant 5.000000e-01 : f32
    %583 = vector.broadcast %cst_364 : f32 to vector<8x128xf32>
    %584 = arith.mulf %583, %582 : vector<8x128xf32>
    %cst_365 = arith.constant 4.471500e-02 : f32
    %585 = vector.broadcast %cst_365 : f32 to vector<8x128xf32>
    %586 = arith.mulf %585, %582 : vector<8x128xf32>
    %587 = arith.mulf %586, %582 : vector<8x128xf32>
    %588 = arith.mulf %587, %582 : vector<8x128xf32>
    %589 = arith.addf %582, %588 : vector<8x128xf32>
    %cst_366 = arith.constant 0.797884583 : f32
    %590 = vector.broadcast %cst_366 : f32 to vector<8x128xf32>
    %591 = arith.mulf %590, %589 : vector<8x128xf32>
    %592 = math.tanh %591 : vector<8x128xf32>
    %cst_367 = arith.constant 1.000000e+00 : f32
    %593 = vector.broadcast %cst_367 : f32 to vector<8x128xf32>
    %594 = arith.addf %593, %592 : vector<8x128xf32>
    %595 = arith.mulf %584, %594 : vector<8x128xf32>
    %c1_368 = arith.constant 1 : index
    %c0_369 = arith.constant 0 : index
    %c0_370 = arith.constant 0 : index
    %596 = vector.load %arg13[%c1_368, %c0_369, %c0_370] : memref<2x128x32xf32, #tpu.memory_space<vmem>>, vector<1x128x32xf32>
    %597 = vector.shape_cast %596 : vector<1x128x32xf32> to vector<128x32xf32>
    %598 = arith.truncf %595 : vector<8x128xf32> to vector<8x128xbf16>
    %599 = arith.truncf %597 : vector<128x32xf32> to vector<128x32xbf16>
    %cst_371 = arith.constant dense<0.000000e+00> : vector<8x32xf32>
    %600 = tpu.matmul %598, %599, %cst_371 {dimension_numbers = #tpu.dot_dimension_numbers<[1], [0], [0], [1], [0, 0, 1, 1], [], []>} : vector<8x128xbf16>, vector<128x32xbf16>, vector<8x32xf32> -> vector<8x32xf32>
    %c1_372 = arith.constant 1 : index
    %c0_373 = arith.constant 0 : index
    %c0_374 = arith.constant 0 : index
    %601 = vector.load %arg14[%c1_372, %c0_373, %c0_374] : memref<2x1x32xf32, #tpu.memory_space<vmem>>, vector<1x1x32xf32>
    %602 = vector.shape_cast %601 : vector<1x1x32xf32> to vector<1x32xf32>
    %603 = vector.broadcast %602 : vector<1x32xf32> to vector<8x32xf32>
    %604 = arith.addf %600, %603 : vector<8x32xf32>
    %605 = arith.addf %573, %604 : vector<8x32xf32>
    %c1_375 = arith.constant 1 : index
    %c0_376 = arith.constant 0 : index
    %c0_377 = arith.constant 0 : index
    %606 = vector.load %arg15[%c1_375, %c0_376, %c0_377] : memref<2x1x32xf32, #tpu.memory_space<vmem>>, vector<1x1x32xf32>
    %607 = vector.shape_cast %606 : vector<1x1x32xf32> to vector<1x32xf32>
    %c1_378 = arith.constant 1 : index
    %c0_379 = arith.constant 0 : index
    %c0_380 = arith.constant 0 : index
    %608 = vector.load %arg16[%c1_378, %c0_379, %c0_380] : memref<2x1x32xf32, #tpu.memory_space<vmem>>, vector<1x1x32xf32>
    %609 = vector.shape_cast %608 : vector<1x1x32xf32> to vector<1x32xf32>
    %cst_381 = arith.constant dense<0.000000e+00> : vector<8xf32>
    %610 = vector.multi_reduction <add>, %605, %cst_381 [1] : vector<8x32xf32> to vector<8xf32>
    %611 = vector.shape_cast %610 : vector<8xf32> to vector<8x1xf32>
    %cst_382 = arith.constant 3.200000e+01 : f32
    %612 = vector.broadcast %cst_382 : f32 to vector<8x1xf32>
    %613 = arith.divf %611, %612 : vector<8x1xf32>
    %614 = vector.broadcast %613 : vector<8x1xf32> to vector<8x32xf32>
    %615 = arith.subf %605, %614 : vector<8x32xf32>
    %616 = arith.mulf %615, %615 : vector<8x32xf32>
    %cst_383 = arith.constant dense<0.000000e+00> : vector<8xf32>
    %617 = vector.multi_reduction <add>, %616, %cst_383 [1] : vector<8x32xf32> to vector<8xf32>
    %618 = vector.shape_cast %617 : vector<8xf32> to vector<8x1xf32>
    %cst_384 = arith.constant 3.200000e+01 : f32
    %619 = vector.broadcast %cst_384 : f32 to vector<8x1xf32>
    %620 = arith.divf %618, %619 : vector<8x1xf32>
    %621 = vector.broadcast %613 : vector<8x1xf32> to vector<8x32xf32>
    %622 = arith.subf %605, %621 : vector<8x32xf32>
    %cst_385 = arith.constant 9.99999996E-13 : f32
    %623 = vector.broadcast %cst_385 : f32 to vector<8x1xf32>
    %624 = arith.addf %620, %623 : vector<8x1xf32>
    %625 = math.rsqrt %624 : vector<8x1xf32>
    %626 = vector.broadcast %625 : vector<8x1xf32> to vector<8x32xf32>
    %627 = arith.mulf %622, %626 : vector<8x32xf32>
    %628 = vector.broadcast %607 : vector<1x32xf32> to vector<8x32xf32>
    %629 = arith.mulf %627, %628 : vector<8x32xf32>
    %630 = vector.broadcast %609 : vector<1x32xf32> to vector<8x32xf32>
    %631 = arith.addf %629, %630 : vector<8x32xf32>
    %632 = vector.extract_strided_slice %631 {offsets = [0, 0], sizes = [1, 32], strides = [1, 1]} : vector<8x32xf32> to vector<1x32xf32>
    %c0_386 = arith.constant 0 : index
    %c0_387 = arith.constant 0 : index
    %633 = vector.load %arg17[%c0_386, %c0_387] : memref<32x32xf32, #tpu.memory_space<vmem>>, vector<32x32xf32>
    %634 = arith.truncf %632 : vector<1x32xf32> to vector<1x32xbf16>
    %635 = arith.truncf %633 : vector<32x32xf32> to vector<32x32xbf16>
    %cst_388 = arith.constant dense<0.000000e+00> : vector<1x32xf32>
    %636 = tpu.matmul %634, %635, %cst_388 {dimension_numbers = #tpu.dot_dimension_numbers<[1], [0], [0], [1], [0, 0, 1, 1], [], []>} : vector<1x32xbf16>, vector<32x32xbf16>, vector<1x32xf32> -> vector<1x32xf32>
    %c0_389 = arith.constant 0 : index
    %c0_390 = arith.constant 0 : index
    %637 = vector.load %arg18[%c0_389, %c0_390] : memref<1x32xf32, #tpu.memory_space<vmem>>, vector<1x32xf32>
    %638 = arith.addf %636, %637 : vector<1x32xf32>
    %639 = math.tanh %638 : vector<1x32xf32>
    %c0_391 = arith.constant 0 : index
    %c0_392 = arith.constant 0 : index
    %c0_393 = arith.constant 0 : index
    %640 = vector.load %arg19[%c0_391, %c0_392, %c0_393] : memref<1x1x32xf32, #tpu.memory_space<vmem>>, vector<1x1x32xf32>
    %641 = vector.shape_cast %640 : vector<1x1x32xf32> to vector<1x32xf32>
    %642 = vector.shape_cast %639 : vector<1x32xf32> to vector<1x1x32xf32>
    tpu.vector_store %arg19[%c0_391, %c0_392, %c0_393], %642 {strides = array<i32>} : memref<1x1x32xf32, #tpu.memory_space<vmem>>, vector<1x1x32xf32>,
    return
  }
  func.func @transform_0(%arg0: i32) -> (i32, i32, i32) {
    %c0_i32 = arith.constant 0 : i32
    %c0_i32_0 = arith.constant 0 : i32
    %c0_i32_1 = arith.constant 0 : i32
    return %arg0, %c0_i32, %c0_i32_0 : i32, i32, i32
  }
  func.func @transform_1(%arg0: i32) -> (i32, i32, i32) {
    %c0_i32 = arith.constant 0 : i32
    %c0_i32_0 = arith.constant 0 : i32
    %c0_i32_1 = arith.constant 0 : i32
    return %arg0, %c0_i32, %c0_i32_0 : i32, i32, i32
  }
  func.func @transform_2(%arg0: i32) -> (i32, i32) {
    %c0_i32 = arith.constant 0 : i32
    %c0_i32_0 = arith.constant 0 : i32
    %c0_i32_1 = arith.constant 0 : i32
    return %c0_i32, %c0_i32_0 : i32, i32
  }
  func.func @transform_3(%arg0: i32) -> (i32, i32) {
    %c0_i32 = arith.constant 0 : i32
    %c0_i32_0 = arith.constant 0 : i32
    %c0_i32_1 = arith.constant 0 : i32
    return %c0_i32, %c0_i32_0 : i32, i32
  }
  func.func @transform_4(%arg0: i32) -> (i32, i32, i32, i32) {
    %c0_i32 = arith.constant 0 : i32
    %c0_i32_0 = arith.constant 0 : i32
    %c0_i32_1 = arith.constant 0 : i32
    %c0_i32_2 = arith.constant 0 : i32
    %c0_i32_3 = arith.constant 0 : i32
    return %c0_i32, %c0_i32_0, %c0_i32_1, %c0_i32_2 : i32, i32, i32, i32
  }
  func.func @transform_5(%arg0: i32) -> (i32, i32, i32, i32) {
    %c0_i32 = arith.constant 0 : i32
    %c0_i32_0 = arith.constant 0 : i32
    %c0_i32_1 = arith.constant 0 : i32
    %c0_i32_2 = arith.constant 0 : i32
    %c0_i32_3 = arith.constant 0 : i32
    return %c0_i32, %c0_i32_0, %c0_i32_1, %c0_i32_2 : i32, i32, i32, i32
  }
  func.func @transform_6(%arg0: i32) -> (i32, i32, i32, i32) {
    %c0_i32 = arith.constant 0 : i32
    %c0_i32_0 = arith.constant 0 : i32
    %c0_i32_1 = arith.constant 0 : i32
    %c0_i32_2 = arith.constant 0 : i32
    %c0_i32_3 = arith.constant 0 : i32
    return %c0_i32, %c0_i32_0, %c0_i32_1, %c0_i32_2 : i32, i32, i32, i32
  }
  func.func @transform_7(%arg0: i32) -> (i32, i32, i32) {
    %c0_i32 = arith.constant 0 : i32
    %c0_i32_0 = arith.constant 0 : i32
    %c0_i32_1 = arith.constant 0 : i32
    %c0_i32_2 = arith.constant 0 : i32
    return %c0_i32, %c0_i32_0, %c0_i32_1 : i32, i32, i32
  }
  func.func @transform_8(%arg0: i32) -> (i32, i32, i32) {
    %c0_i32 = arith.constant 0 : i32
    %c0_i32_0 = arith.constant 0 : i32
    %c0_i32_1 = arith.constant 0 : i32
    %c0_i32_2 = arith.constant 0 : i32
    return %c0_i32, %c0_i32_0, %c0_i32_1 : i32, i32, i32
  }
  func.func @transform_9(%arg0: i32) -> (i32, i32, i32) {
    %c0_i32 = arith.constant 0 : i32
    %c0_i32_0 = arith.constant 0 : i32
    %c0_i32_1 = arith.constant 0 : i32
    %c0_i32_2 = arith.constant 0 : i32
    return %c0_i32, %c0_i32_0, %c0_i32_1 : i32, i32, i32
  }
  func.func @transform_10(%arg0: i32) -> (i32, i32, i32) {
    %c0_i32 = arith.constant 0 : i32
    %c0_i32_0 = arith.constant 0 : i32
    %c0_i32_1 = arith.constant 0 : i32
    %c0_i32_2 = arith.constant 0 : i32
    return %c0_i32, %c0_i32_0, %c0_i32_1 : i32, i32, i32
  }
  func.func @transform_11(%arg0: i32) -> (i32, i32, i32) {
    %c0_i32 = arith.constant 0 : i32
    %c0_i32_0 = arith.constant 0 : i32
    %c0_i32_1 = arith.constant 0 : i32
    %c0_i32_2 = arith.constant 0 : i32
    return %c0_i32, %c0_i32_0, %c0_i32_1 : i32, i32, i32
  }
  func.func @transform_12(%arg0: i32) -> (i32, i32, i32) {
    %c0_i32 = arith.constant 0 : i32
    %c0_i32_0 = arith.constant 0 : i32
    %c0_i32_1 = arith.constant 0 : i32
    %c0_i32_2 = arith.constant 0 : i32
    return %c0_i32, %c0_i32_0, %c0_i32_1 : i32, i32, i32
  }
  func.func @transform_13(%arg0: i32) -> (i32, i32, i32) {
    %c0_i32 = arith.constant 0 : i32
    %c0_i32_0 = arith.constant 0 : i32
    %c0_i32_1 = arith.constant 0 : i32
    %c0_i32_2 = arith.constant 0 : i32
    return %c0_i32, %c0_i32_0, %c0_i32_1 : i32, i32, i32
  }
  func.func @transform_14(%arg0: i32) -> (i32, i32, i32) {
    %c0_i32 = arith.constant 0 : i32
    %c0_i32_0 = arith.constant 0 : i32
    %c0_i32_1 = arith.constant 0 : i32
    %c0_i32_2 = arith.constant 0 : i32
    return %c0_i32, %c0_i32_0, %c0_i32_1 : i32, i32, i32
  }
  func.func @transform_15(%arg0: i32) -> (i32, i32, i32) {
    %c0_i32 = arith.constant 0 : i32
    %c0_i32_0 = arith.constant 0 : i32
    %c0_i32_1 = arith.constant 0 : i32
    %c0_i32_2 = arith.constant 0 : i32
    return %c0_i32, %c0_i32_0, %c0_i32_1 : i32, i32, i32
  }
  func.func @transform_16(%arg0: i32) -> (i32, i32) {
    %c0_i32 = arith.constant 0 : i32
    %c0_i32_0 = arith.constant 0 : i32
    %c0_i32_1 = arith.constant 0 : i32
    return %c0_i32, %c0_i32_0 : i32, i32
  }
  func.func @transform_17(%arg0: i32) -> (i32, i32) {
    %c0_i32 = arith.constant 0 : i32
    %c0_i32_0 = arith.constant 0 : i32
    %c0_i32_1 = arith.constant 0 : i32
    return %c0_i32, %c0_i32_0 : i32, i32
  }
  func.func @transform_18(%arg0: i32) -> (i32, i32, i32) {
    %c0_i32 = arith.constant 0 : i32
    %c0_i32_0 = arith.constant 0 : i32
    %c0_i32_1 = arith.constant 0 : i32
    return %arg0, %c0_i32, %c0_i32_0 : i32, i32, i32
  }
}

</mosaic_0001>

<llo_original>
// kernel: text_encoder_forward.1
$region0: #{text_encoder_forward.1}
  #allocation0 [shape = 'u32[]', space=smem, size = 0x4, offset = 0x4, fixed_abs, tag = 'smem constant byte address 0x4 - core index']
  #allocation1 [shape = 'u32[144,128]{1,0:T(1,128)}', space=vmem, size = 0x12000, scoped, tag = 'internal scratch']
  %s0 = inlined_call_operand.vmem [shape: f32[2,8,32], index: 0, kind: input, shape index: {}]
  %s1 = inlined_call_operand.vmem [shape: f32[2,1,8], index: 1, kind: input, shape index: {}]
  %s2 = inlined_call_operand.vmem [shape: f32[1,32], index: 2, kind: input, shape index: {}]
  %s3 = inlined_call_operand.vmem [shape: f32[1,32], index: 3, kind: input, shape index: {}]
  %s4 = inlined_call_operand.vmem [shape: f32[2,12,32,8], index: 4, kind: input, shape index: {}]
  %s5 = inlined_call_operand.vmem [shape: f32[2,12,1,8], index: 5, kind: input, shape index: {}]
  %s6 = inlined_call_operand.vmem [shape: f32[2,4,8,32], index: 6, kind: input, shape index: {}]
  %s7 = inlined_call_operand.vmem [shape: f32[2,1,32], index: 7, kind: input, shape index: {}]
  %s8 = inlined_call_operand.vmem [shape: f32[2,1,32], index: 8, kind: input, shape index: {}]
  %s9 = inlined_call_operand.vmem [shape: f32[2,1,32], index: 9, kind: input, shape index: {}]
  %s10 = inlined_call_operand.vmem [shape: f32[2,32,128], index: 10, kind: input, shape index: {}]
  %s11 = inlined_call_operand.vmem [shape: f32[2,1,128], index: 11, kind: input, shape index: {}]
  %s12 = inlined_call_operand.vmem [shape: f32[2,128,32], index: 12, kind: input, shape index: {}]
  %s13 = inlined_call_operand.vmem [shape: f32[2,1,32], index: 13, kind: input, shape index: {}]
  %s14 = inlined_call_operand.vmem [shape: f32[2,1,32], index: 14, kind: input, shape index: {}]
  %s15 = inlined_call_operand.vmem [shape: f32[2,1,32], index: 15, kind: input, shape index: {}]
  %s16 = inlined_call_operand.vmem [shape: f32[32,32], index: 16, kind: input, shape index: {}]
  %s17 = inlined_call_operand.vmem [shape: f32[1,32], index: 17, kind: input, shape index: {}]
  %s18 = inlined_call_operand.hbm [shape: f32[2,1,32], index: 18, kind: output, shape index: {}]
  %s19 = sld [smem:[#allocation0]]
  $region105: #{text_encoder_forward.1} parent=0
    _
  %s21 = ssub.s32 1, %s19
  %s22 = scalar_select 0, %s21, %s19
  $region1: #{text_encoder_forward.1} parent=0
    #allocation2 [shape = 'u8[1024]{0}', space=vmem, size = 0x400, scoped, tag = 'output window, operand 0']
    #allocation3 [shape = 's32[2]{0}', space=sflag, size = 0x8, scoped, tag = 'scoped memory for text_encoder_forward.1']
    %23 = vsyncpa [#allocation3], 0
    %s24 = scalar_lea.sflag [#allocation3], 1
    %25 = vsyncpa %s24, 0
    loop: start=0, step=1, limit=4
    $region2: #{text_encoder_forward.1} parent=1 // loop_pre_header
      _
    $region3: #{text_encoder_forward.1} parent=1 // loop_header
      %s27 = sphi 0, %s31
      %p28 = scmp.ge.s32.totalorder %s27, 4
      %s37 = sphi 0, %s39
      %s40 = sphi 0, %s37
      %s41 = sphi 0, %s40
      %s57 = sphi 0, %s41
      %s63 = sphi 0, %s65
      %s66 = sphi 0, %s63
      %s67 = sphi 0, %s66
      %s83 = sphi 0, %s67
      %s87 = sphi 0, %s87
      %s89 = sphi 0, %s87
      %s90 = sphi 0, %s89
      %s104 = sphi 0, %s90
      %s108 = sphi 0, %s108
      %s110 = sphi 0, %s108
      %s111 = sphi 0, %s110
      %s125 = sphi 0, %s111
      %s129 = sphi 0, %s129
      %s131 = sphi 0, %s129
      %s132 = sphi 0, %s131
      %s146 = sphi 0, %s132
      %s150 = sphi 0, %s150
      %s152 = sphi 0, %s150
      %s153 = sphi 0, %s152
      %s167 = sphi 0, %s153
      %s171 = sphi 0, %s171
      %s173 = sphi 0, %s171
      %s174 = sphi 0, %s173
      %s188 = sphi 0, %s174
      %s192 = sphi 0, %s192
      %s194 = sphi 0, %s192
      %s195 = sphi 0, %s194
      %s209 = sphi 0, %s195
      %s213 = sphi 0, %s213
      %s215 = sphi 0, %s213
      %s216 = sphi 0, %s215
      %s230 = sphi 0, %s216
      %s234 = sphi 0, %s234
      %s236 = sphi 0, %s234
      %s237 = sphi 0, %s236
      %s251 = sphi 0, %s237
      %s255 = sphi 0, %s255
      %s257 = sphi 0, %s255
      %s258 = sphi 0, %s257
      %s272 = sphi 0, %s258
      %s276 = sphi 0, %s276
      %s278 = sphi 0, %s276
      %s279 = sphi 0, %s278
      %s293 = sphi 0, %s279
      %s297 = sphi 0, %s297
      %s299 = sphi 0, %s297
      %s300 = sphi 0, %s299
      %s314 = sphi 0, %s300
      %s318 = sphi 0, %s318
      %s320 = sphi 0, %s318
      %s321 = sphi 0, %s320
      %s335 = sphi 0, %s321
      %s339 = sphi 0, %s339
      %s341 = sphi 0, %s339
      %s342 = sphi 0, %s341
      %s356 = sphi 0, %s342
      %s360 = sphi 0, %s360
      %s362 = sphi 0, %s360
      %s363 = sphi 0, %s362
      %s377 = sphi 0, %s363
      %s381 = sphi 0, %s381
      %s383 = sphi 0, %s381
      %s384 = sphi 0, %s383
      %s398 = sphi 0, %s384
      %s402 = sphi 0, %s402
      %s404 = sphi 0, %s402
      %s405 = sphi 0, %s404
      %s419 = sphi 0, %s405
      %s425 = sphi 0, %s427
      %s428 = sphi 0, %s425
      %s429 = sphi 0, %s428
      %s445 = sphi 0, %s429
    $region4: #{text_encoder_forward.1} parent=1 // loop_header_branch
      %30 = sbr.rel (%p28) target = $region8
    $region5: #{text_encoder_forward.1} parent=1 // loop_body
      %s32 = ssub.s32 %s27, 1
      %s33 = ssub.s32 %s27, 2
      %s34 = sadd.s32 %s27, 1
      %s35 = ssub.s32 %s27, %s34
      %p36 = scmp.eq.s32.totalorder %s35, 0
      %s38 = sadd.s32 %s37, 1
      %s39 = scalar_select %p36, %s37, %s38
      %p42 = pneg %p36
      %p43 = scmp.eq.s32.totalorder %s27, 1
      %p44 = por %p42, %p43
      %p45 = scmp.ne.s32.totalorder %s37, %s40
      %p46 = scmp.eq.s32.totalorder %s27, 0
      %p47 = por %p45, %p46
      %p48 = scmp.ne.s32.totalorder %s37, %s40
      %p49 = scmp.eq.s32.totalorder %s32, 1
      %p50 = por %p48, %p49
      %p51 = scmp.ne.s32.totalorder %s40, %s41
      %p52 = scmp.eq.s32.totalorder %s32, 0
      %p53 = por %p51, %p52
      %p54 = scmp.ne.s32.totalorder %s40, %s41
      %p55 = scmp.eq.s32.totalorder %s33, 1
      %p56 = por %p54, %p55
      %p58 = scmp.ne.s32.totalorder %s41, %s57
      %p59 = scmp.eq.s32.totalorder %s33, 0
      %p60 = por %p58, %p59
      %s61 = ssub.s32 %s27, %s34
      %p62 = scmp.eq.s32.totalorder %s61, 0
      %s64 = sadd.s32 %s63, 1
      %s65 = scalar_select %p62, %s63, %s64
      %p68 = pneg %p62
      %p69 = scmp.eq.s32.totalorder %s27, 1
      %p70 = por %p68, %p69
      %p71 = scmp.ne.s32.totalorder %s63, %s66
      %p72 = scmp.eq.s32.totalorder %s27, 0
      %p73 = por %p71, %p72
      %p74 = scmp.ne.s32.totalorder %s63, %s66
      %p75 = scmp.eq.s32.totalorder %s32, 1
      %p76 = por %p74, %p75
      %p77 = scmp.ne.s32.totalorder %s66, %s67
      %p78 = scmp.eq.s32.totalorder %s32, 0
      %p79 = por %p77, %p78
      %p80 = scmp.ne.s32.totalorder %s66, %s67
      %p81 = scmp.eq.s32.totalorder %s33, 1
      %p82 = por %p80, %p81
      %p84 = scmp.ne.s32.totalorder %s67, %s83
      %p85 = scmp.eq.s32.totalorder %s33, 0
      %p86 = por %p84, %p85
      %s88 = sadd.s32 %s87, 1
      %p91 = scmp.eq.s32.totalorder %s27, 1
      %p92 = scmp.ne.s32.totalorder %s87, %s89
      %p93 = scmp.eq.s32.totalorder %s27, 0
      %p94 = por %p92, %p93
      %p95 = scmp.ne.s32.totalorder %s87, %s89
      %p96 = scmp.eq.s32.totalorder %s32, 1
      %p97 = por %p95, %p96
      %p98 = scmp.ne.s32.totalorder %s89, %s90
      %p99 = scmp.eq.s32.totalorder %s32, 0
      %p100 = por %p98, %p99
      %p101 = scmp.ne.s32.totalorder %s89, %s90
      %p102 = scmp.eq.s32.totalorder %s33, 1
      %p103 = por %p101, %p102
      %p105 = scmp.ne.s32.totalorder %s90, %s104
      %p106 = scmp.eq.s32.totalorder %s33, 0
      %p107 = por %p105, %p106
      %s109 = sadd.s32 %s108, 1
      %p112 = scmp.eq.s32.totalorder %s27, 1
      %p113 = scmp.ne.s32.totalorder %s108, %s110
      %p114 = scmp.eq.s32.totalorder %s27, 0
      %p115 = por %p113, %p114
      %p116 = scmp.ne.s32.totalorder %s108, %s110
      %p117 = scmp.eq.s32.totalorder %s32, 1
      %p118 = por %p116, %p117
      %p119 = scmp.ne.s32.totalorder %s110, %s111
      %p120 = scmp.eq.s32.totalorder %s32, 0
      %p121 = por %p119, %p120
      %p122 = scmp.ne.s32.totalorder %s110, %s111
      %p123 = scmp.eq.s32.totalorder %s33, 1
      %p124 = por %p122, %p123
      %p126 = scmp.ne.s32.totalorder %s111, %s125
      %p127 = scmp.eq.s32.totalorder %s33, 0
      %p128 = por %p126, %p127
      %s130 = sadd.s32 %s129, 1
      %p133 = scmp.eq.s32.totalorder %s27, 1
      %p134 = scmp.ne.s32.totalorder %s129, %s131
      %p135 = scmp.eq.s32.totalorder %s27, 0
      %p136 = por %p134, %p135
      %p137 = scmp.ne.s32.totalorder %s129, %s131
      %p138 = scmp.eq.s32.totalorder %s32, 1
      %p139 = por %p137, %p138
      %p140 = scmp.ne.s32.totalorder %s131, %s132
      %p141 = scmp.eq.s32.totalorder %s32, 0
      %p142 = por %p140, %p141
      %p143 = scmp.ne.s32.totalorder %s131, %s132
      %p144 = scmp.eq.s32.totalorder %s33, 1
      %p145 = por %p143, %p144
      %p147 = scmp.ne.s32.totalorder %s132, %s146
      %p148 = scmp.eq.s32.totalorder %s33, 0
      %p149 = por %p147, %p148
      %s151 = sadd.s32 %s150, 1
      %p154 = scmp.eq.s32.totalorder %s27, 1
      %p155 = scmp.ne.s32.totalorder %s150, %s152
      %p156 = scmp.eq.s32.totalorder %s27, 0
      %p157 = por %p155, %p156
      %p158 = scmp.ne.s32.totalorder %s150, %s152
      %p159 = scmp.eq.s32.totalorder %s32, 1
      %p160 = por %p158, %p159
      %p161 = scmp.ne.s32.totalorder %s152, %s153
      %p162 = scmp.eq.s32.totalorder %s32, 0
      %p163 = por %p161, %p162
      %p164 = scmp.ne.s32.totalorder %s152, %s153
      %p165 = scmp.eq.s32.totalorder %s33, 1
      %p166 = por %p164, %p165
      %p168 = scmp.ne.s32.totalorder %s153, %s167
      %p169 = scmp.eq.s32.totalorder %s33, 0
      %p170 = por %p168, %p169
      %s172 = sadd.s32 %s171, 1
      %p175 = scmp.eq.s32.totalorder %s27, 1
      %p176 = scmp.ne.s32.totalorder %s171, %s173
      %p177 = scmp.eq.s32.totalorder %s27, 0
      %p178 = por %p176, %p177
      %p179 = scmp.ne.s32.totalorder %s171, %s173
      %p180 = scmp.eq.s32.totalorder %s32, 1
      %p181 = por %p179, %p180
      %p182 = scmp.ne.s32.totalorder %s173, %s174
      %p183 = scmp.eq.s32.totalorder %s32, 0
      %p184 = por %p182, %p183
      %p185 = scmp.ne.s32.totalorder %s173, %s174
      %p186 = scmp.eq.s32.totalorder %s33, 1
      %p187 = por %p185, %p186
      %p189 = scmp.ne.s32.totalorder %s174, %s188
      %p190 = scmp.eq.s32.totalorder %s33, 0
      %p191 = por %p189, %p190
      %s193 = sadd.s32 %s192, 1
      %p196 = scmp.eq.s32.totalorder %s27, 1
      %p197 = scmp.ne.s32.totalorder %s192, %s194
      %p198 = scmp.eq.s32.totalorder %s27, 0
      %p199 = por %p197, %p198
      %p200 = scmp.ne.s32.totalorder %s192, %s194
      %p201 = scmp.eq.s32.totalorder %s32, 1
      %p202 = por %p200, %p201
      %p203 = scmp.ne.s32.totalorder %s194, %s195
      %p204 = scmp.eq.s32.totalorder %s32, 0
      %p205 = por %p203, %p204
      %p206 = scmp.ne.s32.totalorder %s194, %s195
      %p207 = scmp.eq.s32.totalorder %s33, 1
      %p208 = por %p206, %p207
      %p210 = scmp.ne.s32.totalorder %s195, %s209
      %p211 = scmp.eq.s32.totalorder %s33, 0
      %p212 = por %p210, %p211
      %s214 = sadd.s32 %s213, 1
      %p217 = scmp.eq.s32.totalorder %s27, 1
      %p218 = scmp.ne.s32.totalorder %s213, %s215
      %p219 = scmp.eq.s32.totalorder %s27, 0
      %p220 = por %p218, %p219
      %p221 = scmp.ne.s32.totalorder %s213, %s215
      %p222 = scmp.eq.s32.totalorder %s32, 1
      %p223 = por %p221, %p222
      %p224 = scmp.ne.s32.totalorder %s215, %s216
      %p225 = scmp.eq.s32.totalorder %s32, 0
      %p226 = por %p224, %p225
      %p227 = scmp.ne.s32.totalorder %s215, %s216
      %p228 = scmp.eq.s32.totalorder %s33, 1
      %p229 = por %p227, %p228
      %p231 = scmp.ne.s32.totalorder %s216, %s230
      %p232 = scmp.eq.s32.totalorder %s33, 0
      %p233 = por %p231, %p232
      %s235 = sadd.s32 %s234, 1
      %p238 = scmp.eq.s32.totalorder %s27, 1
      %p239 = scmp.ne.s32.totalorder %s234, %s236
      %p240 = scmp.eq.s32.totalorder %s27, 0
      %p241 = por %p239, %p240
      %p242 = scmp.ne.s32.totalorder %s234, %s236
      %p243 = scmp.eq.s32.totalorder %s32, 1
      %p244 = por %p242, %p243
      %p245 = scmp.ne.s32.totalorder %s236, %s237
      %p246 = scmp.eq.s32.totalorder %s32, 0
      %p247 = por %p245, %p246
      %p248 = scmp.ne.s32.totalorder %s236, %s237
      %p249 = scmp.eq.s32.totalorder %s33, 1
      %p250 = por %p248, %p249
      %p252 = scmp.ne.s32.totalorder %s237, %s251
      %p253 = scmp.eq.s32.totalorder %s33, 0
      %p254 = por %p252, %p253
      %s256 = sadd.s32 %s255, 1
      %p259 = scmp.eq.s32.totalorder %s27, 1
      %p260 = scmp.ne.s32.totalorder %s255, %s257
      %p261 = scmp.eq.s32.totalorder %s27, 0
      %p262 = por %p260, %p261
      %p263 = scmp.ne.s32.totalorder %s255, %s257
      %p264 = scmp.eq.s32.totalorder %s32, 1
      %p265 = por %p263, %p264
      %p266 = scmp.ne.s32.totalorder %s257, %s258
      %p267 = scmp.eq.s32.totalorder %s32, 0
      %p268 = por %p266, %p267
      %p269 = scmp.ne.s32.totalorder %s257, %s258
      %p270 = scmp.eq.s32.totalorder %s33, 1
      %p271 = por %p269, %p270
      %p273 = scmp.ne.s32.totalorder %s258, %s272
      %p274 = scmp.eq.s32.totalorder %s33, 0
      %p275 = por %p273, %p274
      %s277 = sadd.s32 %s276, 1
      %p280 = scmp.eq.s32.totalorder %s27, 1
      %p281 = scmp.ne.s32.totalorder %s276, %s278
      %p282 = scmp.eq.s32.totalorder %s27, 0
      %p283 = por %p281, %p282
      %p284 = scmp.ne.s32.totalorder %s276, %s278
      %p285 = scmp.eq.s32.totalorder %s32, 1
      %p286 = por %p284, %p285
      %p287 = scmp.ne.s32.totalorder %s278, %s279
      %p288 = scmp.eq.s32.totalorder %s32, 0
      %p289 = por %p287, %p288
      %p290 = scmp.ne.s32.totalorder %s278, %s279
      %p291 = scmp.eq.s32.totalorder %s33, 1
      %p292 = por %p290, %p291
      %p294 = scmp.ne.s32.totalorder %s279, %s293
      %p295 = scmp.eq.s32.totalorder %s33, 0
      %p296 = por %p294, %p295
      %s298 = sadd.s32 %s297, 1
      %p301 = scmp.eq.s32.totalorder %s27, 1
      %p302 = scmp.ne.s32.totalorder %s297, %s299
      %p303 = scmp.eq.s32.totalorder %s27, 0
      %p304 = por %p302, %p303
      %p305 = scmp.ne.s32.totalorder %s297, %s299
      %p306 = scmp.eq.s32.totalorder %s32, 1
      %p307 = por %p305, %p306
      %p308 = scmp.ne.s32.totalorder %s299, %s300
      %p309 = scmp.eq.s32.totalorder %s32, 0
      %p310 = por %p308, %p309
      %p311 = scmp.ne.s32.totalorder %s299, %s300
      %p312 = scmp.eq.s32.totalorder %s33, 1
      %p313 = por %p311, %p312
      %p315 = scmp.ne.s32.totalorder %s300, %s314
      %p316 = scmp.eq.s32.totalorder %s33, 0
      %p317 = por %p315, %p316
      %s319 = sadd.s32 %s318, 1
      %p322 = scmp.eq.s32.totalorder %s27, 1
      %p323 = scmp.ne.s32.totalorder %s318, %s320
      %p324 = scmp.eq.s32.totalorder %s27, 0
      %p325 = por %p323, %p324
      %p326 = scmp.ne.s32.totalorder %s318, %s320
      %p327 = scmp.eq.s32.totalorder %s32, 1
      %p328 = por %p326, %p327
      %p329 = scmp.ne.s32.totalorder %s320, %s321
      %p330 = scmp.eq.s32.totalorder %s32, 0
      %p331 = por %p329, %p330
      %p332 = scmp.ne.s32.totalorder %s320, %s321
      %p333 = scmp.eq.s32.totalorder %s33, 1
      %p334 = por %p332, %p333
      %p336 = scmp.ne.s32.totalorder %s321, %s335
      %p337 = scmp.eq.s32.totalorder %s33, 0
      %p338 = por %p336, %p337
      %s340 = sadd.s32 %s339, 1
      %p343 = scmp.eq.s32.totalorder %s27, 1
      %p344 = scmp.ne.s32.totalorder %s339, %s341
      %p345 = scmp.eq.s32.totalorder %s27, 0
      %p346 = por %p344, %p345
      %p347 = scmp.ne.s32.totalorder %s339, %s341
      %p348 = scmp.eq.s32.totalorder %s32, 1
      %p349 = por %p347, %p348
      %p350 = scmp.ne.s32.totalorder %s341, %s342
      %p351 = scmp.eq.s32.totalorder %s32, 0
      %p352 = por %p350, %p351
      %p353 = scmp.ne.s32.totalorder %s341, %s342
      %p354 = scmp.eq.s32.totalorder %s33, 1
      %p355 = por %p353, %p354
      %p357 = scmp.ne.s32.totalorder %s342, %s356
      %p358 = scmp.eq.s32.totalorder %s33, 0
      %p359 = por %p357, %p358
      %s361 = sadd.s32 %s360, 1
      %p364 = scmp.eq.s32.totalorder %s27, 1
      %p365 = scmp.ne.s32.totalorder %s360, %s362
      %p366 = scmp.eq.s32.totalorder %s27, 0
      %p367 = por %p365, %p366
      %p368 = scmp.ne.s32.totalorder %s360, %s362
      %p369 = scmp.eq.s32.totalorder %s32, 1
      %p370 = por %p368, %p369
      %p371 = scmp.ne.s32.totalorder %s362, %s363
      %p372 = scmp.eq.s32.totalorder %s32, 0
      %p373 = por %p371, %p372
      %p374 = scmp.ne.s32.totalorder %s362, %s363
      %p375 = scmp.eq.s32.totalorder %s33, 1
      %p376 = por %p374, %p375
      %p378 = scmp.ne.s32.totalorder %s363, %s377
      %p379 = scmp.eq.s32.totalorder %s33, 0
      %p380 = por %p378, %p379
      %s382 = sadd.s32 %s381, 1
      %p385 = scmp.eq.s32.totalorder %s27, 1
      %p386 = scmp.ne.s32.totalorder %s381, %s383
      %p387 = scmp.eq.s32.totalorder %s27, 0
      %p388 = por %p386, %p387
      %p389 = scmp.ne.s32.totalorder %s381, %s383
      %p390 = scmp.eq.s32.totalorder %s32, 1
      %p391 = por %p389, %p390
      %p392 = scmp.ne.s32.totalorder %s383, %s384
      %p393 = scmp.eq.s32.totalorder %s32, 0
      %p394 = por %p392, %p393
      %p395 = scmp.ne.s32.totalorder %s383, %s384
      %p396 = scmp.eq.s32.totalorder %s33, 1
      %p397 = por %p395, %p396
      %p399 = scmp.ne.s32.totalorder %s384, %s398
      %p400 = scmp.eq.s32.totalorder %s33, 0
      %p401 = por %p399, %p400
      %s403 = sadd.s32 %s402, 1
      %p406 = scmp.eq.s32.totalorder %s27, 1
      %p407 = scmp.ne.s32.totalorder %s402, %s404
      %p408 = scmp.eq.s32.totalorder %s27, 0
      %p409 = por %p407, %p408
      %p410 = scmp.ne.s32.totalorder %s402, %s404
      %p411 = scmp.eq.s32.totalorder %s32, 1
      %p412 = por %p410, %p411
      %p413 = scmp.ne.s32.totalorder %s404, %s405
      %p414 = scmp.eq.s32.totalorder %s32, 0
      %p415 = por %p413, %p414
      %p416 = scmp.ne.s32.totalorder %s404, %s405
      %p417 = scmp.eq.s32.totalorder %s33, 1
      %p418 = por %p416, %p417
      %p420 = scmp.ne.s32.totalorder %s405, %s419
      %p421 = scmp.eq.s32.totalorder %s33, 0
      %p422 = por %p420, %p421
      %s423 = ssub.s32 %s27, %s34
      %p424 = scmp.eq.s32.totalorder %s423, 0
      %s426 = sadd.s32 %s425, 1
      %s427 = scalar_select %p424, %s425, %s426
      %p430 = pneg %p424
      %p431 = scmp.eq.s32.totalorder %s27, 1
      %p432 = por %p430, %p431
      %p433 = scmp.ne.s32.totalorder %s425, %s428
      %p434 = scmp.eq.s32.totalorder %s27, 0
      %p435 = por %p433, %p434
      %p436 = scmp.ne.s32.totalorder %s425, %s428
      %p437 = scmp.eq.s32.totalorder %s32, 1
      %p438 = por %p436, %p437
      %p439 = scmp.ne.s32.totalorder %s428, %s429
      %p440 = scmp.eq.s32.totalorder %s32, 0
      %p441 = por %p439, %p440
      %p442 = scmp.ne.s32.totalorder %s428, %s429
      %p443 = scmp.eq.s32.totalorder %s33, 1
      %p444 = por %p442, %p443
      %p446 = scmp.ne.s32.totalorder %s429, %s445
      %p447 = scmp.eq.s32.totalorder %s33, 0
      %p448 = por %p446, %p447
      %p449 = scmp.le.s32.totalorder 1, %s27
      %p450 = scmp.lt.s32.totalorder %s27, 3
      %p451 = pnand %p449, %p450
      %p452 = pneg %p451
      // Predicated region
      $region9: #{text_encoder_forward.1} parent=5 // pred_check
        _
      $region10: #{text_encoder_forward.1} parent=5 // pred_check_branch
        %454 = sbr.rel (%p451) target = $region12
      $region11: #{text_encoder_forward.1} parent=5 // pred_region
        %s455 = ssub.s32 %s27, 1
        // Predicated region
        $region13: #{text_encoder_forward.1} parent=11 // pred_check
          %p456 = pneg %p100
        $region14: #{text_encoder_forward.1} parent=11 // pred_check_branch
          %458 = sbr.rel (%p456) target = $region16
        $region15: #{text_encoder_forward.1} parent=11 // pred_region
          _
        $region16: #{text_encoder_forward.1} parent=11 // pred_fallthru
          _
        // Predicated region
        $region17: #{text_encoder_forward.1} parent=11 // pred_check
          %p459 = pneg %p121
        $region18: #{text_encoder_forward.1} parent=11 // pred_check_branch
          %461 = sbr.rel (%p459) target = $region20
        $region19: #{text_encoder_forward.1} parent=11 // pred_region
          _
        $region20: #{text_encoder_forward.1} parent=11 // pred_fallthru
          _
        // Predicated region
        $region21: #{text_encoder_forward.1} parent=11 // pred_check
          %p462 = pneg %p142
        $region22: #{text_encoder_forward.1} parent=11 // pred_check_branch
          %464 = sbr.rel (%p462) target = $region24
        $region23: #{text_encoder_forward.1} parent=11 // pred_region
          _
        $region24: #{text_encoder_forward.1} parent=11 // pred_fallthru
          _
        // Predicated region
        $region25: #{text_encoder_forward.1} parent=11 // pred_check
          %p465 = pneg %p163
        $region26: #{text_encoder_forward.1} parent=11 // pred_check_branch
          %467 = sbr.rel (%p465) target = $region28
        $region27: #{text_encoder_forward.1} parent=11 // pred_region
          _
        $region28: #{text_encoder_forward.1} parent=11 // pred_fallthru
          _
        // Predicated region
        $region29: #{text_encoder_forward.1} parent=11 // pred_check
          %p468 = pneg %p184
        $region30: #{text_encoder_forward.1} parent=11 // pred_check_branch
          %470 = sbr.rel (%p468) target = $region32
        $region31: #{text_encoder_forward.1} parent=11 // pred_region
          _
        $region32: #{text_encoder_forward.1} parent=11 // pred_fallthru
          _
        // Predicated region
        $region33: #{text_encoder_forward.1} parent=11 // pred_check
          %p471 = pneg %p205
        $region34: #{text_encoder_forward.1} parent=11 // pred_check_branch
          %473 = sbr.rel (%p471) target = $region36
        $region35: #{text_encoder_forward.1} parent=11 // pred_region
          _
        $region36: #{text_encoder_forward.1} parent=11 // pred_fallthru
          _
        // Predicated region
        $region37: #{text_encoder_forward.1} parent=11 // pred_check
          %p474 = pneg %p226
        $region38: #{text_encoder_forward.1} parent=11 // pred_check_branch
          %476 = sbr.rel (%p474) target = $region40
        $region39: #{text_encoder_forward.1} parent=11 // pred_region
          _
        $region40: #{text_encoder_forward.1} parent=11 // pred_fallthru
          _
        // Predicated region
        $region41: #{text_encoder_forward.1} parent=11 // pred_check
          %p477 = pneg %p247
        $region42: #{text_encoder_forward.1} parent=11 // pred_check_branch
          %479 = sbr.rel (%p477) target = $region44
        $region43: #{text_encoder_forward.1} parent=11 // pred_region
          _
        $region44: #{text_encoder_forward.1} parent=11 // pred_fallthru
          _
        // Predicated region
        $region45: #{text_encoder_forward.1} parent=11 // pred_check
          %p480 = pneg %p268
        $region46: #{text_encoder_forward.1} parent=11 // pred_check_branch
          %482 = sbr.rel (%p480) target = $region48
        $region47: #{text_encoder_forward.1} parent=11 // pred_region
          _
        $region48: #{text_encoder_forward.1} parent=11 // pred_fallthru
          _
        // Predicated region
        $region49: #{text_encoder_forward.1} parent=11 // pred_check
          %p483 = pneg %p289
        $region50: #{text_encoder_forward.1} parent=11 // pred_check_branch
          %485 = sbr.rel (%p483) target = $region52
        $region51: #{text_encoder_forward.1} parent=11 // pred_region
          _
        $region52: #{text_encoder_forward.1} parent=11 // pred_fallthru
          _
        // Predicated region
        $region53: #{text_encoder_forward.1} parent=11 // pred_check
          %p486 = pneg %p310
        $region54: #{text_encoder_forward.1} parent=11 // pred_check_branch
          %488 = sbr.rel (%p486) target = $region56
        $region55: #{text_encoder_forward.1} parent=11 // pred_region
          _
        $region56: #{text_encoder_forward.1} parent=11 // pred_fallthru
          _
        // Predicated region
        $region57: #{text_encoder_forward.1} parent=11 // pred_check
          %p489 = pneg %p331
        $region58: #{text_encoder_forward.1} parent=11 // pred_check_branch
          %491 = sbr.rel (%p489) target = $region60
        $region59: #{text_encoder_forward.1} parent=11 // pred_region
          _
        $region60: #{text_encoder_forward.1} parent=11 // pred_fallthru
          _
        // Predicated region
        $region61: #{text_encoder_forward.1} parent=11 // pred_check
          %p492 = pneg %p352
        $region62: #{text_encoder_forward.1} parent=11 // pred_check_branch
          %494 = sbr.rel (%p492) target = $region64
        $region63: #{text_encoder_forward.1} parent=11 // pred_region
          _
        $region64: #{text_encoder_forward.1} parent=11 // pred_fallthru
          _
        // Predicated region
        $region65: #{text_encoder_forward.1} parent=11 // pred_check
          %p495 = pneg %p373
        $region66: #{text_encoder_forward.1} parent=11 // pred_check_branch
          %497 = sbr.rel (%p495) target = $region68
        $region67: #{text_encoder_forward.1} parent=11 // pred_region
          _
        $region68: #{text_encoder_forward.1} parent=11 // pred_fallthru
          _
        // Predicated region
        $region69: #{text_encoder_forward.1} parent=11 // pred_check
          %p498 = pneg %p394
        $region70: #{text_encoder_forward.1} parent=11 // pred_check_branch
          %500 = sbr.rel (%p498) target = $region72
        $region71: #{text_encoder_forward.1} parent=11 // pred_region
          _
        $region72: #{text_encoder_forward.1} parent=11 // pred_fallthru
          _
        // Predicated region
        $region73: #{text_encoder_forward.1} parent=11 // pred_check
          %p501 = pneg %p415
        $region74: #{text_encoder_forward.1} parent=11 // pred_check_branch
          %503 = sbr.rel (%p501) target = $region76
        $region75: #{text_encoder_forward.1} parent=11 // pred_region
          _
        $region76: #{text_encoder_forward.1} parent=11 // pred_fallthru
          _
      $region12: #{text_encoder_forward.1} parent=5 // pred_fallthru
        _
      %p504 = scmp.lt.s32.totalorder %s27, 2
      // Predicated region
      $region77: #{text_encoder_forward.1} parent=5 // pred_check
        %p505 = pneg %p504
      $region78: #{text_encoder_forward.1} parent=5 // pred_check_branch
        %507 = sbr.rel (%p505) target = $region80
      $region79: #{text_encoder_forward.1} parent=5 // pred_region
        // Predicated region
        $region81: #{text_encoder_forward.1} parent=79 // pred_check
          %p508 = pneg %p47
        $region82: #{text_encoder_forward.1} parent=79 // pred_check_branch
          %510 = sbr.rel (%p508) target = $region84
        $region83: #{text_encoder_forward.1} parent=79 // pred_region
          %p511 = scmp.lt.s32.totalorder %s27, 1
          %s512 = scalar_select %p511, %s27, 1
          %s513 = smul.addr %s512, 8
          %s514 = scalar_lea.vmem %s0, %s513
        $region84: #{text_encoder_forward.1} parent=79 // pred_fallthru
          _
        // Predicated region
        $region85: #{text_encoder_forward.1} parent=79 // pred_check
          %p515 = pneg %p73
        $region86: #{text_encoder_forward.1} parent=79 // pred_check_branch
          %517 = sbr.rel (%p515) target = $region88
        $region87: #{text_encoder_forward.1} parent=79 // pred_region
          %p518 = scmp.lt.s32.totalorder %s27, 1
          %s519 = scalar_select %p518, %s27, 1
          %s520 = scalar_lea.vmem %s1, %s519
        $region88: #{text_encoder_forward.1} parent=79 // pred_fallthru
          _
      $region80: #{text_encoder_forward.1} parent=5 // pred_fallthru
        _
      %p521 = scmp.le.s32.totalorder 1, %s27
      %p522 = scmp.lt.s32.totalorder %s27, 3
      %p523 = pnand %p521, %p522
      %p524 = pneg %p523
      // Predicated region
      $region89: #{text_encoder_forward.1} parent=5 // pred_check
        _
      $region90: #{text_encoder_forward.1} parent=5 // pred_check_branch
        %526 = sbr.rel (%p523) target = $region92
      $region91: #{text_encoder_forward.1} parent=5 // pred_region
        %s527 = ssub.s32 %s27, 1
        %p528 = scmp.lt.s32.totalorder %s32, 1
        %s529 = scalar_select %p528, %s32, 1
        %s530 = smul.addr %s529, 8
        %s531 = scalar_lea.vmem %s0, %s530
        %p532 = pneg %p53
        %p533 = pneg %p50
        %p534 = scmp.lt.s32.totalorder %s32, 1
        %s535 = scalar_select %p534, %s32, 1
        %s536 = scalar_lea.vmem %s1, %s535
        %p537 = pneg %p79
        %p538 = pneg %p76
        %p539 = pneg %p100
        %p540 = pneg %p97
        %p541 = pneg %p121
        %p542 = pneg %p118
        %p543 = pneg %p142
        %p544 = pneg %p139
        %p545 = pneg %p163
        %p546 = pneg %p160
        %p547 = pneg %p184
        %p548 = pneg %p181
        %p549 = pneg %p205
        %p550 = pneg %p202
        %p551 = pneg %p226
        %p552 = pneg %p223
        %p553 = pneg %p247
        %p554 = pneg %p244
        %p555 = pneg %p268
        %p556 = pneg %p265
        %p557 = pneg %p289
        %p558 = pneg %p286
        %p559 = pneg %p310
        %p560 = pneg %p307
        %p561 = pneg %p331
        %p562 = pneg %p328
        %p563 = pneg %p352
        %p564 = pneg %p349
        %p565 = pneg %p373
        %p566 = pneg %p370
        %p567 = pneg %p394
        %p568 = pneg %p391
        %p569 = pneg %p415
        %p570 = pneg %p412
        %p571 = pneg %p441
        %p572 = pneg %p438
        %s573 = sand.u32 %s428, 1
        %s574 = scalar_lea.sflag [#allocation3], %s573
        %s575 = sand.u32 %s428, 1
        %s576 = scalar_lea.vmem [#allocation2], %s575
        %p577 = scmp.lt.s32.totalorder %s32, 1
        %s578 = scalar_select %p577, %s32, 1
        %s579 = smul.addr %s578, 8
        %s580 = scalar_lea.vmem %s0, %s579
        %p581 = scmp.lt.s32.totalorder %s32, 1
        %s582 = scalar_select %p581, %s32, 1
        %s583 = scalar_lea.vmem %s1, %s582
        %v585 = vld [vmem:[%s580] sm:$0xff]
        %v586 = vld [vmem:[%s583] sm:$0x1]
        %v587 = vld [vmem:[%s2] sm:$0x1]
        %v588 = vld [vmem:[%s3] sm:$0x1]
        %vm589 = vcmask 261120
        %v590 = vsel %vm589, %v585, 0.0
        %591 = vadd.xlane.f32.xlu0 %v590
        %v592 = vpop.xlane.xlu0 %591
        %v593 = vrcp.pop 32.0
        %v594 = vmul.f32 %v592, %v593
        %v595 = vsub.f32 %v585, %v594
        %v596 = vmul.f32 %v595, %v595
        %v597 = vsel %vm589, %v596, 0.0
        %598 = vadd.xlane.f32.xlu0 %v597
        %v599 = vpop.xlane.xlu0 %598
        %v600 = vmul.f32 %v599, %v593
        %v601 = vadd.f32 %v600, 1e-12
        %v602 = vrsqrt.pop %v601
        %v603 = vmul.f32 %v595, %v602
        %v605 = vlaneseq
        %v606 = vshrl.u32 %v605, 7
        %v607 = vsub.s32 0, %v606
        %v608 = vrot.slane %v587, %v607
        %v610 = vmul.f32 %v603, %v608
        %v612 = vlaneseq
        %v613 = vshrl.u32 %v612, 7
        %v614 = vsub.s32 0, %v613
        %v615 = vrot.slane %v588, %v614
        %v617 = vadd.f32 %v610, %v615
        %v618 = vld [vmem:[%s4] sm:$0xff]
        %v619 = vld [vmem:[%s4 + $0x8] sm:$0xff]
        %v620 = vld [vmem:[%s4 + $0x10] sm:$0xff]
        %v621 = vld [vmem:[%s4 + $0x18] sm:$0xff]
        %v622 = vpack.c.bf16 %v617, %v617
        %v623 = vpack.c.bf16 %v619, %v618
        %v624 = vpack.c.bf16 %v621, %v620
        %v625 = vld [vmem:[%s5] sm:$0x1]
        %v627 = vlaneseq
        %v628 = vshrl.u32 %v627, 7
        %v629 = vsub.s32 0, %v628
        %v630 = vrot.slane %v625, %v629
        %v633 = vsel %vm589, %v622, 0
        %635 = vmatprep.subr.bf16.mxu0 0
        %636 = vmatpush1.bf16.msra.mxu0 %v623
        %637 = vmatprep.subr.bf16.mxu0 0
        %638 = vmatpush1.bf16.msra.mxu0 %v624
        %639 = vmatprep.subr.bf16.mxu0 0
        %640 = vmatpush1.bf16.msra.mxu0 0
        %641 = vmatprep.subr.bf16.mxu0 0
        %642 = vmatpush1.bf16.msra.mxu0 0
        %643 = vmatprep.subr.bf16.mxu0 0
        %644 = vmatpush1.bf16.msra.mxu0 0
        %645 = vmatprep.subr.bf16.mxu0 0
        %646 = vmatpush1.bf16.msra.mxu0 0
        %647 = vmatprep.subr.bf16.mxu0 0
        %648 = vmatpush1.bf16.msra.mxu0 0
        %649 = vmatprep.subr.bf16.mxu0 0
        %650 = vmatpush1.bf16.msra.mxu0 0
        %651 = vmatprep.subr.bf16.mxu0 0
        %652 = vmatpush1.bf16.msra.mxu0 0
        %653 = vmatprep.subr.bf16.mxu0 0
        %654 = vmatpush1.bf16.msra.mxu0 0
        %655 = vmatprep.subr.bf16.mxu0 0
        %656 = vmatpush1.bf16.msra.mxu0 0
        %657 = vmatprep.subr.bf16.mxu0 0
        %658 = vmatpush1.bf16.msra.mxu0 0
        %659 = vmatprep.subr.bf16.mxu0 0
        %660 = vmatpush1.bf16.msra.mxu0 0
        %661 = vmatprep.subr.bf16.mxu0 0
        %662 = vmatpush1.bf16.msra.mxu0 0
        %663 = vmatprep.subr.bf16.mxu0 0
        %664 = vmatpush1.bf16.msra.mxu0 0
        %665 = vmatprep.subr.bf16.mxu0 0
        %666 = vmatpush1.bf16.msra.mxu0 0
        %667 = vmatprep.mubr.bf16.mxu0 0
        %668 = vmatmul.mubr.bf16.gmra.mrb[0].mxu0 %v633
        %v669 = vpop.f32.mrb[0].mxu0
        %v670 = vadd.f32 %v630, %v669
        %v671 = vpop.f32.mrb[0].mxu0
        %v672 = vpop.f32.mrb[0].mxu0
        %v673 = vpop.f32.mrb[0].mxu0
        %674 = vdwg.mxu0
        %s675 = scalar_lea.vmem %s4, 128
        %v676 = vld [vmem:[%s675] sm:$0xff]
        %v677 = vld [vmem:[%s675 + $0x8] sm:$0xff]
        %v678 = vld [vmem:[%s675 + $0x10] sm:$0xff]
        %v679 = vld [vmem:[%s675 + $0x18] sm:$0xff]
        %v680 = vpack.c.bf16 %v677, %v676
        %v681 = vpack.c.bf16 %v679, %v678
        %s682 = scalar_lea.vmem %s5, 4
        %v683 = vld [vmem:[%s682] sm:$0x1]
        %v685 = vlaneseq
        %v686 = vshrl.u32 %v685, 7
        %v687 = vsub.s32 0, %v686
        %v688 = vrot.slane %v683, %v687
        %690 = vmatprep.subr.bf16.mxu0 0
        %691 = vmatpush1.bf16.msra.mxu0 %v680
        %692 = vmatprep.subr.bf16.mxu0 0
        %693 = vmatpush1.bf16.msra.mxu0 %v681
        %694 = vmatprep.subr.bf16.mxu0 0
        %695 = vmatpush1.bf16.msra.mxu0 0
        %696 = vmatprep.subr.bf16.mxu0 0
        %697 = vmatpush1.bf16.msra.mxu0 0
        %698 = vmatprep.subr.bf16.mxu0 0
        %699 = vmatpush1.bf16.msra.mxu0 0
        %700 = vmatprep.subr.bf16.mxu0 0
        %701 = vmatpush1.bf16.msra.mxu0 0
        %702 = vmatprep.subr.bf16.mxu0 0
        %703 = vmatpush1.bf16.msra.mxu0 0
        %704 = vmatprep.subr.bf16.mxu0 0
        %705 = vmatpush1.bf16.msra.mxu0 0
        %706 = vmatprep.subr.bf16.mxu0 0
        %707 = vmatpush1.bf16.msra.mxu0 0
        %708 = vmatprep.subr.bf16.mxu0 0
        %709 = vmatpush1.bf16.msra.mxu0 0
        %710 = vmatprep.subr.bf16.mxu0 0
        %711 = vmatpush1.bf16.msra.mxu0 0
        %712 = vmatprep.subr.bf16.mxu0 0
        %713 = vmatpush1.bf16.msra.mxu0 0
        %714 = vmatprep.subr.bf16.mxu0 0
        %715 = vmatpush1.bf16.msra.mxu0 0
        %716 = vmatprep.subr.bf16.mxu0 0
        %717 = vmatpush1.bf16.msra.mxu0 0
        %718 = vmatprep.subr.bf16.mxu0 0
        %719 = vmatpush1.bf16.msra.mxu0 0
        %720 = vmatprep.subr.bf16.mxu0 0
        %721 = vmatpush1.bf16.msra.mxu0 0
        %722 = vmatprep.mubr.bf16.mxu0 0
        %723 = vmatmul.mubr.bf16.gmra.mrb[0].mxu0 %v633
        %v724 = vpop.f32.mrb[0].mxu0
        %v725 = vadd.f32 %v688, %v724
        %v726 = vpop.f32.mrb[0].mxu0
        %v727 = vpop.f32.mrb[0].mxu0
        %v728 = vpop.f32.mrb[0].mxu0
        %729 = vdwg.mxu0
        %s730 = scalar_lea.vmem %s4, 256
        %v731 = vld [vmem:[%s730] sm:$0xff]
        %v732 = vld [vmem:[%s730 + $0x8] sm:$0xff]
        %v733 = vld [vmem:[%s730 + $0x10] sm:$0xff]
        %v734 = vld [vmem:[%s730 + $0x18] sm:$0xff]
        %v735 = vpack.c.bf16 %v732, %v731
        %v736 = vpack.c.bf16 %v734, %v733
        %s737 = scalar_lea.vmem %s5, 8
        %v738 = vld [vmem:[%s737] sm:$0x1]
        %v740 = vlaneseq
        %v741 = vshrl.u32 %v740, 7
        %v742 = vsub.s32 0, %v741
        %v743 = vrot.slane %v738, %v742
        %745 = vmatprep.subr.bf16.mxu0 0
        %746 = vmatpush1.bf16.msra.mxu0 %v735
        %747 = vmatprep.subr.bf16.mxu0 0
        %748 = vmatpush1.bf16.msra.mxu0 %v736
        %749 = vmatprep.subr.bf16.mxu0 0
        %750 = vmatpush1.bf16.msra.mxu0 0
        %751 = vmatprep.subr.bf16.mxu0 0
        %752 = vmatpush1.bf16.msra.mxu0 0
        %753 = vmatprep.subr.bf16.mxu0 0
        %754 = vmatpush1.bf16.msra.mxu0 0
        %755 = vmatprep.subr.bf16.mxu0 0
        %756 = vmatpush1.bf16.msra.mxu0 0
        %757 = vmatprep.subr.bf16.mxu0 0
        %758 = vmatpush1.bf16.msra.mxu0 0
        %759 = vmatprep.subr.bf16.mxu0 0
        %760 = vmatpush1.bf16.msra.mxu0 0
        %761 = vmatprep.subr.bf16.mxu0 0
        %762 = vmatpush1.bf16.msra.mxu0 0
        %763 = vmatprep.subr.bf16.mxu0 0
        %764 = vmatpush1.bf16.msra.mxu0 0
        %765 = vmatprep.subr.bf16.mxu0 0
        %766 = vmatpush1.bf16.msra.mxu0 0
        %767 = vmatprep.subr.bf16.mxu0 0
        %768 = vmatpush1.bf16.msra.mxu0 0
        %769 = vmatprep.subr.bf16.mxu0 0
        %770 = vmatpush1.bf16.msra.mxu0 0
        %771 = vmatprep.subr.bf16.mxu0 0
        %772 = vmatpush1.bf16.msra.mxu0 0
        %773 = vmatprep.subr.bf16.mxu0 0
        %774 = vmatpush1.bf16.msra.mxu0 0
        %775 = vmatprep.subr.bf16.mxu0 0
        %776 = vmatpush1.bf16.msra.mxu0 0
        %777 = vmatprep.mubr.bf16.mxu0 0
        %778 = vmatmul.mubr.bf16.gmra.mrb[0].mxu0 %v633
        %v779 = vpop.f32.mrb[0].mxu0
        %v780 = vadd.f32 %v743, %v779
        %v781 = vpop.f32.mrb[0].mxu0
        %v782 = vpop.f32.mrb[0].mxu0
        %v783 = vpop.f32.mrb[0].mxu0
        %784 = vdwg.mxu0
        %v785 = vpack.c.bf16 %v670, %v670
        %v786 = vpack.c.bf16 %v725, %v725
        %vm787 = vcmask 64512
        %v789 = vsel %vm787, %v785, 0
        %v792 = vsel %vm787, %v786, 0
        %794 = vmatprep.subr.bf16.mxu0 0
        %795 = vmatpush1.bf16.xpose.msra.mxu0 %v792
        %796 = vmatprep.subr.bf16.mxu0 0
        %797 = vmatpush1.bf16.xpose.msra.mxu0 0
        %798 = vmatprep.subr.bf16.mxu0 0
        %799 = vmatpush1.bf16.xpose.msra.mxu0 0
        %800 = vmatprep.subr.bf16.mxu0 0
        %801 = vmatpush1.bf16.xpose.msra.mxu0 0
        %802 = vmatprep.subr.bf16.mxu0 0
        %803 = vmatpush1.bf16.xpose.msra.mxu0 0
        %804 = vmatprep.subr.bf16.mxu0 0
        %805 = vmatpush1.bf16.xpose.msra.mxu0 0
        %806 = vmatprep.subr.bf16.mxu0 0
        %807 = vmatpush1.bf16.xpose.msra.mxu0 0
        %808 = vmatprep.subr.bf16.mxu0 0
        %809 = vmatpush1.bf16.xpose.msra.mxu0 0
        %810 = vmatprep.subr.bf16.mxu0 0
        %811 = vmatpush1.bf16.xpose.msra.mxu0 0
        %812 = vmatprep.subr.bf16.mxu0 0
        %813 = vmatpush1.bf16.xpose.msra.mxu0 0
        %814 = vmatprep.subr.bf16.mxu0 0
        %815 = vmatpush1.bf16.xpose.msra.mxu0 0
        %816 = vmatprep.subr.bf16.mxu0 0
        %817 = vmatpush1.bf16.xpose.msra.mxu0 0
        %818 = vmatprep.subr.bf16.mxu0 0
        %819 = vmatpush1.bf16.xpose.msra.mxu0 0
        %820 = vmatprep.subr.bf16.mxu0 0
        %821 = vmatpush1.bf16.xpose.msra.mxu0 0
        %822 = vmatprep.subr.bf16.mxu0 0
        %823 = vmatpush1.bf16.xpose.msra.mxu0 0
        %824 = vmatprep.subr.bf16.mxu0 0
        %825 = vmatpush1.bf16.xpose.msra.mxu0 0
        %826 = vmatprep.mubr.bf16.mxu0 0
        %827 = vmatmul.mubr.bf16.gmra.mrb[0].mxu0 %v789
        %v828 = vpop.f32.mrb[0].mxu0
        %v829 = vadd.f32 0.0, %v828
        %v830 = vpop.f32.mrb[0].mxu0
        %v831 = vpop.f32.mrb[0].mxu0
        %v832 = vpop.f32.mrb[0].mxu0
        %833 = vdwg.mxu0
        %v834 = vmul.f32 %v829, 0.35355338
        %v836 = vlaneseq
        %v837 = vshrl.u32 %v836, 7
        %v838 = vsub.s32 0, %v837
        %v839 = vrot.slane %v586, %v838
        %v841 = vadd.f32 %v834, %v839
        %v842 = vsel %vm787, %v841, -inf
        %843 = vmax.xlane.f32.xlu0 %v842
        %v844 = vpop.xlane.xlu0 %843
        %v845 = vsub.f32 %v841, %v844
        %v846 = vmul.f32 %v845, 1.442695
        %v847 = vpow.pop %v846
        %v848 = vsel %vm787, %v847, 0.0
        %849 = vadd.xlane.f32.xlu0 %v848
        %v850 = vpop.xlane.xlu0 %849
        %v851 = vrcp.pop %v850
        %v852 = vmul.f32 %v847, %v851
        %v853 = vpack.c.bf16 %v852, %v852
        %v854 = vpack.c.bf16 %v780, %v780
        %v856 = vsel %vm787, %v853, 0
        %vm858 = vcmask 1043456
        %v860 = vsel %vm858, %v854, 0
        %862 = vmatprep.subr.bf16.mxu0 0
        %863 = vmatpush1.bf16.msra.mxu0 %v860
        %864 = vmatprep.subr.bf16.mxu0 0
        %865 = vmatpush1.bf16.msra.mxu0 0
        %866 = vmatprep.subr.bf16.mxu0 0
        %867 = vmatpush1.bf16.msra.mxu0 0
        %868 = vmatprep.subr.bf16.mxu0 0
        %869 = vmatpush1.bf16.msra.mxu0 0
        %870 = vmatprep.subr.bf16.mxu0 0
        %871 = vmatpush1.bf16.msra.mxu0 0
        %872 = vmatprep.subr.bf16.mxu0 0
        %873 = vmatpush1.bf16.msra.mxu0 0
        %874 = vmatprep.subr.bf16.mxu0 0
        %875 = vmatpush1.bf16.msra.mxu0 0
        %876 = vmatprep.subr.bf16.mxu0 0
        %877 = vmatpush1.bf16.msra.mxu0 0
        %878 = vmatprep.subr.bf16.mxu0 0
        %879 = vmatpush1.bf16.msra.mxu0 0
        %880 = vmatprep.subr.bf16.mxu0 0
        %881 = vmatpush1.bf16.msra.mxu0 0
        %882 = vmatprep.subr.bf16.mxu0 0
        %883 = vmatpush1.bf16.msra.mxu0 0
        %884 = vmatprep.subr.bf16.mxu0 0
        %885 = vmatpush1.bf16.msra.mxu0 0
        %886 = vmatprep.subr.bf16.mxu0 0
        %887 = vmatpush1.bf16.msra.mxu0 0
        %888 = vmatprep.subr.bf16.mxu0 0
        %889 = vmatpush1.bf16.msra.mxu0 0
        %890 = vmatprep.subr.bf16.mxu0 0
        %891 = vmatpush1.bf16.msra.mxu0 0
        %892 = vmatprep.subr.bf16.mxu0 0
        %893 = vmatpush1.bf16.msra.mxu0 0
        %894 = vmatprep.mubr.bf16.mxu0 0
        %895 = vmatmul.mubr.bf16.gmra.mrb[0].mxu0 %v856
        %v896 = vpop.f32.mrb[0].mxu0
        %v897 = vadd.f32 0.0, %v896
        %v898 = vpop.f32.mrb[0].mxu0
        %v899 = vpop.f32.mrb[0].mxu0
        %v900 = vpop.f32.mrb[0].mxu0
        %901 = vdwg.mxu0
        %v902 = vld [vmem:[%s6] sm:$0xff]
        %v903 = vpack.c.bf16 %v897, %v897
        %v904 = vpack.c.bf16 %v902, %v902
        %s905 = scalar_lea.vmem %s4, 32
        %v906 = vld [vmem:[%s905] sm:$0xff]
        %v907 = vld [vmem:[%s905 + $0x8] sm:$0xff]
        %v908 = vld [vmem:[%s905 + $0x10] sm:$0xff]
        %v909 = vld [vmem:[%s905 + $0x18] sm:$0xff]
        %v910 = vpack.c.bf16 %v907, %v906
        %v911 = vpack.c.bf16 %v909, %v908
        %s912 = scalar_lea.vmem %s5, 1
        %v913 = vld [vmem:[%s912] sm:$0x1]
        %v915 = vlaneseq
        %v916 = vshrl.u32 %v915, 7
        %v917 = vsub.s32 0, %v916
        %v918 = vrot.slane %v913, %v917
        %920 = vmatprep.subr.bf16.mxu0 0
        %921 = vmatpush1.bf16.msra.mxu0 %v910
        %922 = vmatprep.subr.bf16.mxu0 0
        %923 = vmatpush1.bf16.msra.mxu0 %v911
        %924 = vmatprep.subr.bf16.mxu0 0
        %925 = vmatpush1.bf16.msra.mxu0 0
        %926 = vmatprep.subr.bf16.mxu0 0
        %927 = vmatpush1.bf16.msra.mxu0 0
        %928 = vmatprep.subr.bf16.mxu0 0
        %929 = vmatpush1.bf16.msra.mxu0 0
        %930 = vmatprep.subr.bf16.mxu0 0
        %931 = vmatpush1.bf16.msra.mxu0 0
        %932 = vmatprep.subr.bf16.mxu0 0
        %933 = vmatpush1.bf16.msra.mxu0 0
        %934 = vmatprep.subr.bf16.mxu0 0
        %935 = vmatpush1.bf16.msra.mxu0 0
        %936 = vmatprep.subr.bf16.mxu0 0
        %937 = vmatpush1.bf16.msra.mxu0 0
        %938 = vmatprep.subr.bf16.mxu0 0
        %939 = vmatpush1.bf16.msra.mxu0 0
        %940 = vmatprep.subr.bf16.mxu0 0
        %941 = vmatpush1.bf16.msra.mxu0 0
        %942 = vmatprep.subr.bf16.mxu0 0
        %943 = vmatpush1.bf16.msra.mxu0 0
        %944 = vmatprep.subr.bf16.mxu0 0
        %945 = vmatpush1.bf16.msra.mxu0 0
        %946 = vmatprep.subr.bf16.mxu0 0
        %947 = vmatpush1.bf16.msra.mxu0 0
        %948 = vmatprep.subr.bf16.mxu0 0
        %949 = vmatpush1.bf16.msra.mxu0 0
        %950 = vmatprep.subr.bf16.mxu0 0
        %951 = vmatpush1.bf16.msra.mxu0 0
        %952 = vmatprep.mubr.bf16.mxu0 0
        %953 = vmatmul.mubr.bf16.gmra.mrb[0].mxu0 %v633
        %v954 = vpop.f32.mrb[0].mxu0
        %v955 = vadd.f32 %v918, %v954
        %v956 = vpop.f32.mrb[0].mxu0
        %v957 = vpop.f32.mrb[0].mxu0
        %v958 = vpop.f32.mrb[0].mxu0
        %959 = vdwg.mxu0
        %s960 = scalar_lea.vmem %s4, 160
        %v961 = vld [vmem:[%s960] sm:$0xff]
        %v962 = vld [vmem:[%s960 + $0x8] sm:$0xff]
        %v963 = vld [vmem:[%s960 + $0x10] sm:$0xff]
        %v964 = vld [vmem:[%s960 + $0x18] sm:$0xff]
        %v965 = vpack.c.bf16 %v962, %v961
        %v966 = vpack.c.bf16 %v964, %v963
        %s967 = scalar_lea.vmem %s5, 5
        %v968 = vld [vmem:[%s967] sm:$0x1]
        %v970 = vlaneseq
        %v971 = vshrl.u32 %v970, 7
        %v972 = vsub.s32 0, %v971
        %v973 = vrot.slane %v968, %v972
        %975 = vmatprep.subr.bf16.mxu0 0
        %976 = vmatpush1.bf16.msra.mxu0 %v965
        %977 = vmatprep.subr.bf16.mxu0 0
        %978 = vmatpush1.bf16.msra.mxu0 %v966
        %979 = vmatprep.subr.bf16.mxu0 0
        %980 = vmatpush1.bf16.msra.mxu0 0
        %981 = vmatprep.subr.bf16.mxu0 0
        %982 = vmatpush1.bf16.msra.mxu0 0
        %983 = vmatprep.subr.bf16.mxu0 0
        %984 = vmatpush1.bf16.msra.mxu0 0
        %985 = vmatprep.subr.bf16.mxu0 0
        %986 = vmatpush1.bf16.msra.mxu0 0
        %987 = vmatprep.subr.bf16.mxu0 0
        %988 = vmatpush1.bf16.msra.mxu0 0
        %989 = vmatprep.subr.bf16.mxu0 0
        %990 = vmatpush1.bf16.msra.mxu0 0
        %991 = vmatprep.subr.bf16.mxu0 0
        %992 = vmatpush1.bf16.msra.mxu0 0
        %993 = vmatprep.subr.bf16.mxu0 0
        %994 = vmatpush1.bf16.msra.mxu0 0
        %995 = vmatprep.subr.bf16.mxu0 0
        %996 = vmatpush1.bf16.msra.mxu0 0
        %997 = vmatprep.subr.bf16.mxu0 0
        %998 = vmatpush1.bf16.msra.mxu0 0
        %999 = vmatprep.subr.bf16.mxu0 0
        %1000 = vmatpush1.bf16.msra.mxu0 0
        %1001 = vmatprep.subr.bf16.mxu0 0
        %1002 = vmatpush1.bf16.msra.mxu0 0
        %1003 = vmatprep.subr.bf16.mxu0 0
        %1004 = vmatpush1.bf16.msra.mxu0 0
        %1005 = vmatprep.subr.bf16.mxu0 0
        %1006 = vmatpush1.bf16.msra.mxu0 0
        %1007 = vmatprep.mubr.bf16.mxu0 0
        %1008 = vmatmul.mubr.bf16.gmra.mrb[0].mxu0 %v633
        %v1009 = vpop.f32.mrb[0].mxu0
        %v1010 = vadd.f32 %v973, %v1009
        %v1011 = vpop.f32.mrb[0].mxu0
        %v1012 = vpop.f32.mrb[0].mxu0
        %v1013 = vpop.f32.mrb[0].mxu0
        %1014 = vdwg.mxu0
        %s1015 = scalar_lea.vmem %s4, 288
        %v1016 = vld [vmem:[%s1015] sm:$0xff]
        %v1017 = vld [vmem:[%s1015 + $0x8] sm:$0xff]
        %v1018 = vld [vmem:[%s1015 + $0x10] sm:$0xff]
        %v1019 = vld [vmem:[%s1015 + $0x18] sm:$0xff]
        %v1020 = vpack.c.bf16 %v1017, %v1016
        %v1021 = vpack.c.bf16 %v1019, %v1018
        %s1022 = scalar_lea.vmem %s5, 9
        %v1023 = vld [vmem:[%s1022] sm:$0x1]
        %v1025 = vlaneseq
        %v1026 = vshrl.u32 %v1025, 7
        %v1027 = vsub.s32 0, %v1026
        %v1028 = vrot.slane %v1023, %v1027
        %1030 = vmatprep.subr.bf16.mxu0 0
        %1031 = vmatpush1.bf16.msra.mxu0 %v1020
        %1032 = vmatprep.subr.bf16.mxu0 0
        %1033 = vmatpush1.bf16.msra.mxu0 %v1021
        %1034 = vmatprep.subr.bf16.mxu0 0
        %1035 = vmatpush1.bf16.msra.mxu0 0
        %1036 = vmatprep.subr.bf16.mxu0 0
        %1037 = vmatpush1.bf16.msra.mxu0 0
        %1038 = vmatprep.subr.bf16.mxu0 0
        %1039 = vmatpush1.bf16.msra.mxu0 0
        %1040 = vmatprep.subr.bf16.mxu0 0
        %1041 = vmatpush1.bf16.msra.mxu0 0
        %1042 = vmatprep.subr.bf16.mxu0 0
        %1043 = vmatpush1.bf16.msra.mxu0 0
        %1044 = vmatprep.subr.bf16.mxu0 0
        %1045 = vmatpush1.bf16.msra.mxu0 0
        %1046 = vmatprep.subr.bf16.mxu0 0
        %1047 = vmatpush1.bf16.msra.mxu0 0
        %1048 = vmatprep.subr.bf16.mxu0 0
        %1049 = vmatpush1.bf16.msra.mxu0 0
        %1050 = vmatprep.subr.bf16.mxu0 0
        %1051 = vmatpush1.bf16.msra.mxu0 0
        %1052 = vmatprep.subr.bf16.mxu0 0
        %1053 = vmatpush1.bf16.msra.mxu0 0
        %1054 = vmatprep.subr.bf16.mxu0 0
        %1055 = vmatpush1.bf16.msra.mxu0 0
        %1056 = vmatprep.subr.bf16.mxu0 0
        %1057 = vmatpush1.bf16.msra.mxu0 0
        %1058 = vmatprep.subr.bf16.mxu0 0
        %1059 = vmatpush1.bf16.msra.mxu0 0
        %1060 = vmatprep.subr.bf16.mxu0 0
        %1061 = vmatpush1.bf16.msra.mxu0 0
        %1062 = vmatprep.mubr.bf16.mxu0 0
        %1063 = vmatmul.mubr.bf16.gmra.mrb[0].mxu0 %v633
        %v1064 = vpop.f32.mrb[0].mxu0
        %v1065 = vadd.f32 %v1028, %v1064
        %v1066 = vpop.f32.mrb[0].mxu0
        %v1067 = vpop.f32.mrb[0].mxu0
        %v1068 = vpop.f32.mrb[0].mxu0
        %1069 = vdwg.mxu0
        %v1070 = vpack.c.bf16 %v955, %v955
        %v1071 = vpack.c.bf16 %v1010, %v1010
        %v1073 = vsel %vm787, %v1070, 0
        %v1076 = vsel %vm787, %v1071, 0
        %1078 = vmatprep.subr.bf16.mxu0 0
        %1079 = vmatpush1.bf16.xpose.msra.mxu0 %v1076
        %1080 = vmatprep.subr.bf16.mxu0 0
        %1081 = vmatpush1.bf16.xpose.msra.mxu0 0
        %1082 = vmatprep.subr.bf16.mxu0 0
        %1083 = vmatpush1.bf16.xpose.msra.mxu0 0
        %1084 = vmatprep.subr.bf16.mxu0 0
        %1085 = vmatpush1.bf16.xpose.msra.mxu0 0
        %1086 = vmatprep.subr.bf16.mxu0 0
        %1087 = vmatpush1.bf16.xpose.msra.mxu0 0
        %1088 = vmatprep.subr.bf16.mxu0 0
        %1089 = vmatpush1.bf16.xpose.msra.mxu0 0
        %1090 = vmatprep.subr.bf16.mxu0 0
        %1091 = vmatpush1.bf16.xpose.msra.mxu0 0
        %1092 = vmatprep.subr.bf16.mxu0 0
        %1093 = vmatpush1.bf16.xpose.msra.mxu0 0
        %1094 = vmatprep.subr.bf16.mxu0 0
        %1095 = vmatpush1.bf16.xpose.msra.mxu0 0
        %1096 = vmatprep.subr.bf16.mxu0 0
        %1097 = vmatpush1.bf16.xpose.msra.mxu0 0
        %1098 = vmatprep.subr.bf16.mxu0 0
        %1099 = vmatpush1.bf16.xpose.msra.mxu0 0
        %1100 = vmatprep.subr.bf16.mxu0 0
        %1101 = vmatpush1.bf16.xpose.msra.mxu0 0
        %1102 = vmatprep.subr.bf16.mxu0 0
        %1103 = vmatpush1.bf16.xpose.msra.mxu0 0
        %1104 = vmatprep.subr.bf16.mxu0 0
        %1105 = vmatpush1.bf16.xpose.msra.mxu0 0
        %1106 = vmatprep.subr.bf16.mxu0 0
        %1107 = vmatpush1.bf16.xpose.msra.mxu0 0
        %1108 = vmatprep.subr.bf16.mxu0 0
        %1109 = vmatpush1.bf16.xpose.msra.mxu0 0
        %1110 = vmatprep.mubr.bf16.mxu0 0
        %1111 = vmatmul.mubr.bf16.gmra.mrb[0].mxu0 %v1073
        %v1112 = vpop.f32.mrb[0].mxu0
        %v1113 = vadd.f32 0.0, %v1112
        %v1114 = vpop.f32.mrb[0].mxu0
        %v1115 = vpop.f32.mrb[0].mxu0
        %v1116 = vpop.f32.mrb[0].mxu0
        %1117 = vdwg.mxu0
        %v1118 = vmul.f32 %v1113, 0.35355338
        %v1119 = vadd.f32 %v1118, %v839
        %v1120 = vsel %vm787, %v1119, -inf
        %1121 = vmax.xlane.f32.xlu0 %v1120
        %v1122 = vpop.xlane.xlu0 %1121
        %v1123 = vsub.f32 %v1119, %v1122
        %v1124 = vmul.f32 %v1123, 1.442695
        %v1125 = vpow.pop %v1124
        %v1126 = vsel %vm787, %v1125, 0.0
        %1127 = vadd.xlane.f32.xlu0 %v1126
        %v1128 = vpop.xlane.xlu0 %1127
        %v1129 = vrcp.pop %v1128
        %v1130 = vmul.f32 %v1125, %v1129
        %v1131 = vpack.c.bf16 %v1130, %v1130
        %v1132 = vpack.c.bf16 %v1065, %v1065
        %v1134 = vsel %vm787, %v1131, 0
        %v1137 = vsel %vm858, %v1132, 0
        %1139 = vmatprep.subr.bf16.mxu0 0
        %1140 = vmatpush1.bf16.msra.mxu0 %v1137
        %1141 = vmatprep.subr.bf16.mxu0 0
        %1142 = vmatpush1.bf16.msra.mxu0 0
        %1143 = vmatprep.subr.bf16.mxu0 0
        %1144 = vmatpush1.bf16.msra.mxu0 0
        %1145 = vmatprep.subr.bf16.mxu0 0
        %1146 = vmatpush1.bf16.msra.mxu0 0
        %1147 = vmatprep.subr.bf16.mxu0 0
        %1148 = vmatpush1.bf16.msra.mxu0 0
        %1149 = vmatprep.subr.bf16.mxu0 0
        %1150 = vmatpush1.bf16.msra.mxu0 0
        %1151 = vmatprep.subr.bf16.mxu0 0
        %1152 = vmatpush1.bf16.msra.mxu0 0
        %1153 = vmatprep.subr.bf16.mxu0 0
        %1154 = vmatpush1.bf16.msra.mxu0 0
        %1155 = vmatprep.subr.bf16.mxu0 0
        %1156 = vmatpush1.bf16.msra.mxu0 0
        %1157 = vmatprep.subr.bf16.mxu0 0
        %1158 = vmatpush1.bf16.msra.mxu0 0
        %1159 = vmatprep.subr.bf16.mxu0 0
        %1160 = vmatpush1.bf16.msra.mxu0 0
        %1161 = vmatprep.subr.bf16.mxu0 0
        %1162 = vmatpush1.bf16.msra.mxu0 0
        %1163 = vmatprep.subr.bf16.mxu0 0
        %1164 = vmatpush1.bf16.msra.mxu0 0
        %1165 = vmatprep.subr.bf16.mxu0 0
        %1166 = vmatpush1.bf16.msra.mxu0 0
        %1167 = vmatprep.subr.bf16.mxu0 0
        %1168 = vmatpush1.bf16.msra.mxu0 0
        %1169 = vmatprep.subr.bf16.mxu0 0
        %1170 = vmatpush1.bf16.msra.mxu0 0
        %1171 = vmatprep.mubr.bf16.mxu0 0
        %1172 = vmatmul.mubr.bf16.gmra.mrb[0].mxu0 %v1134
        %v1173 = vpop.f32.mrb[0].mxu0
        %v1174 = vadd.f32 0.0, %v1173
        %v1175 = vpop.f32.mrb[0].mxu0
        %v1176 = vpop.f32.mrb[0].mxu0
        %v1177 = vpop.f32.mrb[0].mxu0
        %1178 = vdwg.mxu0
        %s1179 = scalar_lea.vmem %s6, 8
        %v1180 = vld [vmem:[%s1179] sm:$0xff]
        %v1181 = vpack.c.bf16 %v1174, %v1174
        %v1182 = vpack.c.bf16 %v1180, %v1180
        %v1184 = vsel %vm787, %v1181, 0
        %v1187 = vsel %vm858, %v1182, 0
        %1189 = vmatprep.subr.bf16.mxu0 0
        %1190 = vmatpush1.bf16.msra.mxu0 %v1187
        %1191 = vmatprep.subr.bf16.mxu0 0
        %1192 = vmatpush1.bf16.msra.mxu0 0
        %1193 = vmatprep.subr.bf16.mxu0 0
        %1194 = vmatpush1.bf16.msra.mxu0 0
        %1195 = vmatprep.subr.bf16.mxu0 0
        %1196 = vmatpush1.bf16.msra.mxu0 0
        %1197 = vmatprep.subr.bf16.mxu0 0
        %1198 = vmatpush1.bf16.msra.mxu0 0
        %1199 = vmatprep.subr.bf16.mxu0 0
        %1200 = vmatpush1.bf16.msra.mxu0 0
        %1201 = vmatprep.subr.bf16.mxu0 0
        %1202 = vmatpush1.bf16.msra.mxu0 0
        %1203 = vmatprep.subr.bf16.mxu0 0
        %1204 = vmatpush1.bf16.msra.mxu0 0
        %1205 = vmatprep.subr.bf16.mxu0 0
        %1206 = vmatpush1.bf16.msra.mxu0 0
        %1207 = vmatprep.subr.bf16.mxu0 0
        %1208 = vmatpush1.bf16.msra.mxu0 0
        %1209 = vmatprep.subr.bf16.mxu0 0
        %1210 = vmatpush1.bf16.msra.mxu0 0
        %1211 = vmatprep.subr.bf16.mxu0 0
        %1212 = vmatpush1.bf16.msra.mxu0 0
        %1213 = vmatprep.subr.bf16.mxu0 0
        %1214 = vmatpush1.bf16.msra.mxu0 0
        %1215 = vmatprep.subr.bf16.mxu0 0
        %1216 = vmatpush1.bf16.msra.mxu0 0
        %1217 = vmatprep.subr.bf16.mxu0 0
        %1218 = vmatpush1.bf16.msra.mxu0 0
        %1219 = vmatprep.subr.bf16.mxu0 0
        %1220 = vmatpush1.bf16.msra.mxu0 0
        %1221 = vmatprep.mubr.bf16.mxu0 0
        %1222 = vmatmul.mubr.bf16.gmra.mrb[0].mxu0 %v1184
        %v1223 = vpop.f32.mrb[0].mxu0
        %v1224 = vadd.f32 0.0, %v1223
        %v1225 = vpop.f32.mrb[0].mxu0
        %v1226 = vpop.f32.mrb[0].mxu0
        %v1227 = vpop.f32.mrb[0].mxu0
        %1228 = vdwg.mxu0
        %v1230 = vsel %vm787, %v903, 0
        %v1233 = vsel %vm858, %v904, 0
        %1235 = vmatprep.subr.bf16.mxu0 0
        %1236 = vmatpush1.bf16.msra.mxu0 %v1233
        %1237 = vmatprep.subr.bf16.mxu0 0
        %1238 = vmatpush1.bf16.msra.mxu0 0
        %1239 = vmatprep.subr.bf16.mxu0 0
        %1240 = vmatpush1.bf16.msra.mxu0 0
        %1241 = vmatprep.subr.bf16.mxu0 0
        %1242 = vmatpush1.bf16.msra.mxu0 0
        %1243 = vmatprep.subr.bf16.mxu0 0
        %1244 = vmatpush1.bf16.msra.mxu0 0
        %1245 = vmatprep.subr.bf16.mxu0 0
        %1246 = vmatpush1.bf16.msra.mxu0 0
        %1247 = vmatprep.subr.bf16.mxu0 0
        %1248 = vmatpush1.bf16.msra.mxu0 0
        %1249 = vmatprep.subr.bf16.mxu0 0
        %1250 = vmatpush1.bf16.msra.mxu0 0
        %1251 = vmatprep.subr.bf16.mxu0 0
        %1252 = vmatpush1.bf16.msra.mxu0 0
        %1253 = vmatprep.subr.bf16.mxu0 0
        %1254 = vmatpush1.bf16.msra.mxu0 0
        %1255 = vmatprep.subr.bf16.mxu0 0
        %1256 = vmatpush1.bf16.msra.mxu0 0
        %1257 = vmatprep.subr.bf16.mxu0 0
        %1258 = vmatpush1.bf16.msra.mxu0 0
        %1259 = vmatprep.subr.bf16.mxu0 0
        %1260 = vmatpush1.bf16.msra.mxu0 0
        %1261 = vmatprep.subr.bf16.mxu0 0
        %1262 = vmatpush1.bf16.msra.mxu0 0
        %1263 = vmatprep.subr.bf16.mxu0 0
        %1264 = vmatpush1.bf16.msra.mxu0 0
        %1265 = vmatprep.subr.bf16.mxu0 0
        %1266 = vmatpush1.bf16.msra.mxu0 0
        %1267 = vmatprep.mubr.bf16.mxu0 0
        %1268 = vmatmul.mubr.bf16.gmra.mrb[0].mxu0 %v1230
        %v1269 = vpop.f32.mrb[0].mxu0
        %v1270 = vadd.f32 %v1224, %v1269
        %v1271 = vpop.f32.mrb[0].mxu0
        %v1272 = vpop.f32.mrb[0].mxu0
        %v1273 = vpop.f32.mrb[0].mxu0
        %1274 = vdwg.mxu0
        %s1275 = scalar_lea.vmem %s4, 64
        %v1276 = vld [vmem:[%s1275] sm:$0xff]
        %v1277 = vld [vmem:[%s1275 + $0x8] sm:$0xff]
        %v1278 = vld [vmem:[%s1275 + $0x10] sm:$0xff]
        %v1279 = vld [vmem:[%s1275 + $0x18] sm:$0xff]
        %v1280 = vpack.c.bf16 %v1277, %v1276
        %v1281 = vpack.c.bf16 %v1279, %v1278
        %s1282 = scalar_lea.vmem %s5, 2
        %v1283 = vld [vmem:[%s1282] sm:$0x1]
        %v1285 = vlaneseq
        %v1286 = vshrl.u32 %v1285, 7
        %v1287 = vsub.s32 0, %v1286
        %v1288 = vrot.slane %v1283, %v1287
        %1290 = vmatprep.subr.bf16.mxu0 0
        %1291 = vmatpush1.bf16.msra.mxu0 %v1280
        %1292 = vmatprep.subr.bf16.mxu0 0
        %1293 = vmatpush1.bf16.msra.mxu0 %v1281
        %1294 = vmatprep.subr.bf16.mxu0 0
        %1295 = vmatpush1.bf16.msra.mxu0 0
        %1296 = vmatprep.subr.bf16.mxu0 0
        %1297 = vmatpush1.bf16.msra.mxu0 0
        %1298 = vmatprep.subr.bf16.mxu0 0
        %1299 = vmatpush1.bf16.msra.mxu0 0
        %1300 = vmatprep.subr.bf16.mxu0 0
        %1301 = vmatpush1.bf16.msra.mxu0 0
        %1302 = vmatprep.subr.bf16.mxu0 0
        %1303 = vmatpush1.bf16.msra.mxu0 0
        %1304 = vmatprep.subr.bf16.mxu0 0
        %1305 = vmatpush1.bf16.msra.mxu0 0
        %1306 = vmatprep.subr.bf16.mxu0 0
        %1307 = vmatpush1.bf16.msra.mxu0 0
        %1308 = vmatprep.subr.bf16.mxu0 0
        %1309 = vmatpush1.bf16.msra.mxu0 0
        %1310 = vmatprep.subr.bf16.mxu0 0
        %1311 = vmatpush1.bf16.msra.mxu0 0
        %1312 = vmatprep.subr.bf16.mxu0 0
        %1313 = vmatpush1.bf16.msra.mxu0 0
        %1314 = vmatprep.subr.bf16.mxu0 0
        %1315 = vmatpush1.bf16.msra.mxu0 0
        %1316 = vmatprep.subr.bf16.mxu0 0
        %1317 = vmatpush1.bf16.msra.mxu0 0
        %1318 = vmatprep.subr.bf16.mxu0 0
        %1319 = vmatpush1.bf16.msra.mxu0 0
        %1320 = vmatprep.subr.bf16.mxu0 0
        %1321 = vmatpush1.bf16.msra.mxu0 0
        %1322 = vmatprep.mubr.bf16.mxu0 0
        %1323 = vmatmul.mubr.bf16.gmra.mrb[0].mxu0 %v633
        %v1324 = vpop.f32.mrb[0].mxu0
        %v1325 = vadd.f32 %v1288, %v1324
        %v1326 = vpop.f32.mrb[0].mxu0
        %v1327 = vpop.f32.mrb[0].mxu0
        %v1328 = vpop.f32.mrb[0].mxu0
        %1329 = vdwg.mxu0
        %s1330 = scalar_lea.vmem %s4, 192
        %v1331 = vld [vmem:[%s1330] sm:$0xff]
        %v1332 = vld [vmem:[%s1330 + $0x8] sm:$0xff]
        %v1333 = vld [vmem:[%s1330 + $0x10] sm:$0xff]
        %v1334 = vld [vmem:[%s1330 + $0x18] sm:$0xff]
        %v1335 = vpack.c.bf16 %v1332, %v1331
        %v1336 = vpack.c.bf16 %v1334, %v1333
        %s1337 = scalar_lea.vmem %s5, 6
        %v1338 = vld [vmem:[%s1337] sm:$0x1]
        %v1340 = vlaneseq
        %v1341 = vshrl.u32 %v1340, 7
        %v1342 = vsub.s32 0, %v1341
        %v1343 = vrot.slane %v1338, %v1342
        %1345 = vmatprep.subr.bf16.mxu0 0
        %1346 = vmatpush1.bf16.msra.mxu0 %v1335
        %1347 = vmatprep.subr.bf16.mxu0 0
        %1348 = vmatpush1.bf16.msra.mxu0 %v1336
        %1349 = vmatprep.subr.bf16.mxu0 0
        %1350 = vmatpush1.bf16.msra.mxu0 0
        %1351 = vmatprep.subr.bf16.mxu0 0
        %1352 = vmatpush1.bf16.msra.mxu0 0
        %1353 = vmatprep.subr.bf16.mxu0 0
        %1354 = vmatpush1.bf16.msra.mxu0 0
        %1355 = vmatprep.subr.bf16.mxu0 0
        %1356 = vmatpush1.bf16.msra.mxu0 0
        %1357 = vmatprep.subr.bf16.mxu0 0
        %1358 = vmatpush1.bf16.msra.mxu0 0
        %1359 = vmatprep.subr.bf16.mxu0 0
        %1360 = vmatpush1.bf16.msra.mxu0 0
        %1361 = vmatprep.subr.bf16.mxu0 0
        %1362 = vmatpush1.bf16.msra.mxu0 0
        %1363 = vmatprep.subr.bf16.mxu0 0
        %1364 = vmatpush1.bf16.msra.mxu0 0
        %1365 = vmatprep.subr.bf16.mxu0 0
        %1366 = vmatpush1.bf16.msra.mxu0 0
        %1367 = vmatprep.subr.bf16.mxu0 0
        %1368 = vmatpush1.bf16.msra.mxu0 0
        %1369 = vmatprep.subr.bf16.mxu0 0
        %1370 = vmatpush1.bf16.msra.mxu0 0
        %1371 = vmatprep.subr.bf16.mxu0 0
        %1372 = vmatpush1.bf16.msra.mxu0 0
        %1373 = vmatprep.subr.bf16.mxu0 0
        %1374 = vmatpush1.bf16.msra.mxu0 0
        %1375 = vmatprep.subr.bf16.mxu0 0
        %1376 = vmatpush1.bf16.msra.mxu0 0
        %1377 = vmatprep.mubr.bf16.mxu0 0
        %1378 = vmatmul.mubr.bf16.gmra.mrb[0].mxu0 %v633
        %v1379 = vpop.f32.mrb[0].mxu0
        %v1380 = vadd.f32 %v1343, %v1379
        %v1381 = vpop.f32.mrb[0].mxu0
        %v1382 = vpop.f32.mrb[0].mxu0
        %v1383 = vpop.f32.mrb[0].mxu0
        %1384 = vdwg.mxu0
        %s1385 = scalar_lea.vmem %s4, 320
        %v1386 = vld [vmem:[%s1385] sm:$0xff]
        %v1387 = vld [vmem:[%s1385 + $0x8] sm:$0xff]
        %v1388 = vld [vmem:[%s1385 + $0x10] sm:$0xff]
        %v1389 = vld [vmem:[%s1385 + $0x18] sm:$0xff]
        %v1390 = vpack.c.bf16 %v1387, %v1386
        %v1391 = vpack.c.bf16 %v1389, %v1388
        %s1392 = scalar_lea.vmem %s5, 10
        %v1393 = vld [vmem:[%s1392] sm:$0x1]
        %v1395 = vlaneseq
        %v1396 = vshrl.u32 %v1395, 7
        %v1397 = vsub.s32 0, %v1396
        %v1398 = vrot.slane %v1393, %v1397
        %1400 = vmatprep.subr.bf16.mxu0 0
        %1401 = vmatpush1.bf16.msra.mxu0 %v1390
        %1402 = vmatprep.subr.bf16.mxu0 0
        %1403 = vmatpush1.bf16.msra.mxu0 %v1391
        %1404 = vmatprep.subr.bf16.mxu0 0
        %1405 = vmatpush1.bf16.msra.mxu0 0
        %1406 = vmatprep.subr.bf16.mxu0 0
        %1407 = vmatpush1.bf16.msra.mxu0 0
        %1408 = vmatprep.subr.bf16.mxu0 0
        %1409 = vmatpush1.bf16.msra.mxu0 0
        %1410 = vmatprep.subr.bf16.mxu0 0
        %1411 = vmatpush1.bf16.msra.mxu0 0
        %1412 = vmatprep.subr.bf16.mxu0 0
        %1413 = vmatpush1.bf16.msra.mxu0 0
        %1414 = vmatprep.subr.bf16.mxu0 0
        %1415 = vmatpush1.bf16.msra.mxu0 0
        %1416 = vmatprep.subr.bf16.mxu0 0
        %1417 = vmatpush1.bf16.msra.mxu0 0
        %1418 = vmatprep.subr.bf16.mxu0 0
        %1419 = vmatpush1.bf16.msra.mxu0 0
        %1420 = vmatprep.subr.bf16.mxu0 0
        %1421 = vmatpush1.bf16.msra.mxu0 0
        %1422 = vmatprep.subr.bf16.mxu0 0
        %1423 = vmatpush1.bf16.msra.mxu0 0
        %1424 = vmatprep.subr.bf16.mxu0 0
        %1425 = vmatpush1.bf16.msra.mxu0 0
        %1426 = vmatprep.subr.bf16.mxu0 0
        %1427 = vmatpush1.bf16.msra.mxu0 0
        %1428 = vmatprep.subr.bf16.mxu0 0
        %1429 = vmatpush1.bf16.msra.mxu0 0
        %1430 = vmatprep.subr.bf16.mxu0 0
        %1431 = vmatpush1.bf16.msra.mxu0 0
        %1432 = vmatprep.mubr.bf16.mxu0 0
        %1433 = vmatmul.mubr.bf16.gmra.mrb[0].mxu0 %v633
        %v1434 = vpop.f32.mrb[0].mxu0
        %v1435 = vadd.f32 %v1398, %v1434
        %v1436 = vpop.f32.mrb[0].mxu0
        %v1437 = vpop.f32.mrb[0].mxu0
        %v1438 = vpop.f32.mrb[0].mxu0
        %1439 = vdwg.mxu0
        %v1440 = vpack.c.bf16 %v1325, %v1325
        %v1441 = vpack.c.bf16 %v1380, %v1380
        %v1443 = vsel %vm787, %v1440, 0
        %v1446 = vsel %vm787, %v1441, 0
        %1448 = vmatprep.subr.bf16.mxu0 0
        %1449 = vmatpush1.bf16.xpose.msra.mxu0 %v1446
        %1450 = vmatprep.subr.bf16.mxu0 0
        %1451 = vmatpush1.bf16.xpose.msra.mxu0 0
        %1452 = vmatprep.subr.bf16.mxu0 0
        %1453 = vmatpush1.bf16.xpose.msra.mxu0 0
        %1454 = vmatprep.subr.bf16.mxu0 0
        %1455 = vmatpush1.bf16.xpose.msra.mxu0 0
        %1456 = vmatprep.subr.bf16.mxu0 0
        %1457 = vmatpush1.bf16.xpose.msra.mxu0 0
        %1458 = vmatprep.subr.bf16.mxu0 0
        %1459 = vmatpush1.bf16.xpose.msra.mxu0 0
        %1460 = vmatprep.subr.bf16.mxu0 0
        %1461 = vmatpush1.bf16.xpose.msra.mxu0 0
        %1462 = vmatprep.subr.bf16.mxu0 0
        %1463 = vmatpush1.bf16.xpose.msra.mxu0 0
        %1464 = vmatprep.subr.bf16.mxu0 0
        %1465 = vmatpush1.bf16.xpose.msra.mxu0 0
        %1466 = vmatprep.subr.bf16.mxu0 0
        %1467 = vmatpush1.bf16.xpose.msra.mxu0 0
        %1468 = vmatprep.subr.bf16.mxu0 0
        %1469 = vmatpush1.bf16.xpose.msra.mxu0 0
        %1470 = vmatprep.subr.bf16.mxu0 0
        %1471 = vmatpush1.bf16.xpose.msra.mxu0 0
        %1472 = vmatprep.subr.bf16.mxu0 0
        %1473 = vmatpush1.bf16.xpose.msra.mxu0 0
        %1474 = vmatprep.subr.bf16.mxu0 0
        %1475 = vmatpush1.bf16.xpose.msra.mxu0 0
        %1476 = vmatprep.subr.bf16.mxu0 0
        %1477 = vmatpush1.bf16.xpose.msra.mxu0 0
        %1478 = vmatprep.subr.bf16.mxu0 0
        %1479 = vmatpush1.bf16.xpose.msra.mxu0 0
        %1480 = vmatprep.mubr.bf16.mxu0 0
        %1481 = vmatmul.mubr.bf16.gmra.mrb[0].mxu0 %v1443
        %v1482 = vpop.f32.mrb[0].mxu0
        %v1483 = vadd.f32 0.0, %v1482
        %v1484 = vpop.f32.mrb[0].mxu0
        %v1485 = vpop.f32.mrb[0].mxu0
        %v1486 = vpop.f32.mrb[0].mxu0
        %1487 = vdwg.mxu0
        %v1488 = vmul.f32 %v1483, 0.35355338
        %v1489 = vadd.f32 %v1488, %v839
        %v1490 = vsel %vm787, %v1489, -inf
        %1491 = vmax.xlane.f32.xlu0 %v1490
        %v1492 = vpop.xlane.xlu0 %1491
        %v1493 = vsub.f32 %v1489, %v1492
        %v1494 = vmul.f32 %v1493, 1.442695
        %v1495 = vpow.pop %v1494
        %v1496 = vsel %vm787, %v1495, 0.0
        %1497 = vadd.xlane.f32.xlu0 %v1496
        %v1498 = vpop.xlane.xlu0 %1497
        %v1499 = vrcp.pop %v1498
        %v1500 = vmul.f32 %v1495, %v1499
        %v1501 = vpack.c.bf16 %v1500, %v1500
        %v1502 = vpack.c.bf16 %v1435, %v1435
        %v1504 = vsel %vm787, %v1501, 0
        %v1507 = vsel %vm858, %v1502, 0
        %1509 = vmatprep.subr.bf16.mxu0 0
        %1510 = vmatpush1.bf16.msra.mxu0 %v1507
        %1511 = vmatprep.subr.bf16.mxu0 0
        %1512 = vmatpush1.bf16.msra.mxu0 0
        %1513 = vmatprep.subr.bf16.mxu0 0
        %1514 = vmatpush1.bf16.msra.mxu0 0
        %1515 = vmatprep.subr.bf16.mxu0 0
        %1516 = vmatpush1.bf16.msra.mxu0 0
        %1517 = vmatprep.subr.bf16.mxu0 0
        %1518 = vmatpush1.bf16.msra.mxu0 0
        %1519 = vmatprep.subr.bf16.mxu0 0
        %1520 = vmatpush1.bf16.msra.mxu0 0
        %1521 = vmatprep.subr.bf16.mxu0 0
        %1522 = vmatpush1.bf16.msra.mxu0 0
        %1523 = vmatprep.subr.bf16.mxu0 0
        %1524 = vmatpush1.bf16.msra.mxu0 0
        %1525 = vmatprep.subr.bf16.mxu0 0
        %1526 = vmatpush1.bf16.msra.mxu0 0
        %1527 = vmatprep.subr.bf16.mxu0 0
        %1528 = vmatpush1.bf16.msra.mxu0 0
        %1529 = vmatprep.subr.bf16.mxu0 0
        %1530 = vmatpush1.bf16.msra.mxu0 0
        %1531 = vmatprep.subr.bf16.mxu0 0
        %1532 = vmatpush1.bf16.msra.mxu0 0
        %1533 = vmatprep.subr.bf16.mxu0 0
        %1534 = vmatpush1.bf16.msra.mxu0 0
        %1535 = vmatprep.subr.bf16.mxu0 0
        %1536 = vmatpush1.bf16.msra.mxu0 0
        %1537 = vmatprep.subr.bf16.mxu0 0
        %1538 = vmatpush1.bf16.msra.mxu0 0
        %1539 = vmatprep.subr.bf16.mxu0 0
        %1540 = vmatpush1.bf16.msra.mxu0 0
        %1541 = vmatprep.mubr.bf16.mxu0 0
        %1542 = vmatmul.mubr.bf16.gmra.mrb[0].mxu0 %v1504
        %v1543 = vpop.f32.mrb[0].mxu0
        %v1544 = vadd.f32 0.0, %v1543
        %v1545 = vpop.f32.mrb[0].mxu0
        %v1546 = vpop.f32.mrb[0].mxu0
        %v1547 = vpop.f32.mrb[0].mxu0
        %1548 = vdwg.mxu0
        %s1549 = scalar_lea.vmem %s6, 16
        %v1550 = vld [vmem:[%s1549] sm:$0xff]
        %v1551 = vpack.c.bf16 %v1544, %v1544
        %v1552 = vpack.c.bf16 %v1550, %v1550
        %v1554 = vsel %vm787, %v1551, 0
        %v1557 = vsel %vm858, %v1552, 0
        %1559 = vmatprep.subr.bf16.mxu0 0
        %1560 = vmatpush1.bf16.msra.mxu0 %v1557
        %1561 = vmatprep.subr.bf16.mxu0 0
        %1562 = vmatpush1.bf16.msra.mxu0 0
        %1563 = vmatprep.subr.bf16.mxu0 0
        %1564 = vmatpush1.bf16.msra.mxu0 0
        %1565 = vmatprep.subr.bf16.mxu0 0
        %1566 = vmatpush1.bf16.msra.mxu0 0
        %1567 = vmatprep.subr.bf16.mxu0 0
        %1568 = vmatpush1.bf16.msra.mxu0 0
        %1569 = vmatprep.subr.bf16.mxu0 0
        %1570 = vmatpush1.bf16.msra.mxu0 0
        %1571 = vmatprep.subr.bf16.mxu0 0
        %1572 = vmatpush1.bf16.msra.mxu0 0
        %1573 = vmatprep.subr.bf16.mxu0 0
        %1574 = vmatpush1.bf16.msra.mxu0 0
        %1575 = vmatprep.subr.bf16.mxu0 0
        %1576 = vmatpush1.bf16.msra.mxu0 0
        %1577 = vmatprep.subr.bf16.mxu0 0
        %1578 = vmatpush1.bf16.msra.mxu0 0
        %1579 = vmatprep.subr.bf16.mxu0 0
        %1580 = vmatpush1.bf16.msra.mxu0 0
        %1581 = vmatprep.subr.bf16.mxu0 0
        %1582 = vmatpush1.bf16.msra.mxu0 0
        %1583 = vmatprep.subr.bf16.mxu0 0
        %1584 = vmatpush1.bf16.msra.mxu0 0
        %1585 = vmatprep.subr.bf16.mxu0 0
        %1586 = vmatpush1.bf16.msra.mxu0 0
        %1587 = vmatprep.subr.bf16.mxu0 0
        %1588 = vmatpush1.bf16.msra.mxu0 0
        %1589 = vmatprep.subr.bf16.mxu0 0
        %1590 = vmatpush1.bf16.msra.mxu0 0
        %1591 = vmatprep.mubr.bf16.mxu0 0
        %1592 = vmatmul.mubr.bf16.gmra.mrb[0].mxu0 %v1554
        %v1593 = vpop.f32.mrb[0].mxu0
        %v1594 = vadd.f32 0.0, %v1593
        %v1595 = vpop.f32.mrb[0].mxu0
        %v1596 = vpop.f32.mrb[0].mxu0
        %v1597 = vpop.f32.mrb[0].mxu0
        %1598 = vdwg.mxu0
        %v1599 = vadd.f32 %v1270, %v1594
        %s1600 = scalar_lea.vmem %s4, 96
        %v1601 = vld [vmem:[%s1600] sm:$0xff]
        %v1602 = vld [vmem:[%s1600 + $0x8] sm:$0xff]
        %v1603 = vld [vmem:[%s1600 + $0x10] sm:$0xff]
        %v1604 = vld [vmem:[%s1600 + $0x18] sm:$0xff]
        %v1605 = vpack.c.bf16 %v1602, %v1601
        %v1606 = vpack.c.bf16 %v1604, %v1603
        %s1607 = scalar_lea.vmem %s5, 3
        %v1608 = vld [vmem:[%s1607] sm:$0x1]
        %v1610 = vlaneseq
        %v1611 = vshrl.u32 %v1610, 7
        %v1612 = vsub.s32 0, %v1611
        %v1613 = vrot.slane %v1608, %v1612
        %1615 = vmatprep.subr.bf16.mxu0 0
        %1616 = vmatpush1.bf16.msra.mxu0 %v1605
        %1617 = vmatprep.subr.bf16.mxu0 0
        %1618 = vmatpush1.bf16.msra.mxu0 %v1606
        %1619 = vmatprep.subr.bf16.mxu0 0
        %1620 = vmatpush1.bf16.msra.mxu0 0
        %1621 = vmatprep.subr.bf16.mxu0 0
        %1622 = vmatpush1.bf16.msra.mxu0 0
        %1623 = vmatprep.subr.bf16.mxu0 0
        %1624 = vmatpush1.bf16.msra.mxu0 0
        %1625 = vmatprep.subr.bf16.mxu0 0
        %1626 = vmatpush1.bf16.msra.mxu0 0
        %1627 = vmatprep.subr.bf16.mxu0 0
        %1628 = vmatpush1.bf16.msra.mxu0 0
        %1629 = vmatprep.subr.bf16.mxu0 0
        %1630 = vmatpush1.bf16.msra.mxu0 0
        %1631 = vmatprep.subr.bf16.mxu0 0
        %1632 = vmatpush1.bf16.msra.mxu0 0
        %1633 = vmatprep.subr.bf16.mxu0 0
        %1634 = vmatpush1.bf16.msra.mxu0 0
        %1635 = vmatprep.subr.bf16.mxu0 0
        %1636 = vmatpush1.bf16.msra.mxu0 0
        %1637 = vmatprep.subr.bf16.mxu0 0
        %1638 = vmatpush1.bf16.msra.mxu0 0
        %1639 = vmatprep.subr.bf16.mxu0 0
        %1640 = vmatpush1.bf16.msra.mxu0 0
        %1641 = vmatprep.subr.bf16.mxu0 0
        %1642 = vmatpush1.bf16.msra.mxu0 0
        %1643 = vmatprep.subr.bf16.mxu0 0
        %1644 = vmatpush1.bf16.msra.mxu0 0
        %1645 = vmatprep.subr.bf16.mxu0 0
        %1646 = vmatpush1.bf16.msra.mxu0 0
        %1647 = vmatprep.mubr.bf16.mxu0 0
        %1648 = vmatmul.mubr.bf16.gmra.mrb[0].mxu0 %v633
        %v1649 = vpop.f32.mrb[0].mxu0
        %v1650 = vadd.f32 %v1613, %v1649
        %v1651 = vpop.f32.mrb[0].mxu0
        %v1652 = vpop.f32.mrb[0].mxu0
        %v1653 = vpop.f32.mrb[0].mxu0
        %1654 = vdwg.mxu0
        %s1655 = scalar_lea.vmem %s4, 224
        %v1656 = vld [vmem:[%s1655] sm:$0xff]
        %v1657 = vld [vmem:[%s1655 + $0x8] sm:$0xff]
        %v1658 = vld [vmem:[%s1655 + $0x10] sm:$0xff]
        %v1659 = vld [vmem:[%s1655 + $0x18] sm:$0xff]
        %v1660 = vpack.c.bf16 %v1657, %v1656
        %v1661 = vpack.c.bf16 %v1659, %v1658
        %s1662 = scalar_lea.vmem %s5, 7
        %v1663 = vld [vmem:[%s1662] sm:$0x1]
        %v1665 = vlaneseq
        %v1666 = vshrl.u32 %v1665, 7
        %v1667 = vsub.s32 0, %v1666
        %v1668 = vrot.slane %v1663, %v1667
        %1670 = vmatprep.subr.bf16.mxu0 0
        %1671 = vmatpush1.bf16.msra.mxu0 %v1660
        %1672 = vmatprep.subr.bf16.mxu0 0
        %1673 = vmatpush1.bf16.msra.mxu0 %v1661
        %1674 = vmatprep.subr.bf16.mxu0 0
        %1675 = vmatpush1.bf16.msra.mxu0 0
        %1676 = vmatprep.subr.bf16.mxu0 0
        %1677 = vmatpush1.bf16.msra.mxu0 0
        %1678 = vmatprep.subr.bf16.mxu0 0
        %1679 = vmatpush1.bf16.msra.mxu0 0
        %1680 = vmatprep.subr.bf16.mxu0 0
        %1681 = vmatpush1.bf16.msra.mxu0 0
        %1682 = vmatprep.subr.bf16.mxu0 0
        %1683 = vmatpush1.bf16.msra.mxu0 0
        %1684 = vmatprep.subr.bf16.mxu0 0
        %1685 = vmatpush1.bf16.msra.mxu0 0
        %1686 = vmatprep.subr.bf16.mxu0 0
        %1687 = vmatpush1.bf16.msra.mxu0 0
        %1688 = vmatprep.subr.bf16.mxu0 0
        %1689 = vmatpush1.bf16.msra.mxu0 0
        %1690 = vmatprep.subr.bf16.mxu0 0
        %1691 = vmatpush1.bf16.msra.mxu0 0
        %1692 = vmatprep.subr.bf16.mxu0 0
        %1693 = vmatpush1.bf16.msra.mxu0 0
        %1694 = vmatprep.subr.bf16.mxu0 0
        %1695 = vmatpush1.bf16.msra.mxu0 0
        %1696 = vmatprep.subr.bf16.mxu0 0
        %1697 = vmatpush1.bf16.msra.mxu0 0
        %1698 = vmatprep.subr.bf16.mxu0 0
        %1699 = vmatpush1.bf16.msra.mxu0 0
        %1700 = vmatprep.subr.bf16.mxu0 0
        %1701 = vmatpush1.bf16.msra.mxu0 0
        %1702 = vmatprep.mubr.bf16.mxu0 0
        %1703 = vmatmul.mubr.bf16.gmra.mrb[0].mxu0 %v633
        %v1704 = vpop.f32.mrb[0].mxu0
        %v1705 = vadd.f32 %v1668, %v1704
        %v1706 = vpop.f32.mrb[0].mxu0
        %v1707 = vpop.f32.mrb[0].mxu0
        %v1708 = vpop.f32.mrb[0].mxu0
        %1709 = vdwg.mxu0
        %s1710 = scalar_lea.vmem %s4, 352
        %v1711 = vld [vmem:[%s1710] sm:$0xff]
        %v1712 = vld [vmem:[%s1710 + $0x8] sm:$0xff]
        %v1713 = vld [vmem:[%s1710 + $0x10] sm:$0xff]
        %v1714 = vld [vmem:[%s1710 + $0x18] sm:$0xff]
        %v1715 = vpack.c.bf16 %v1712, %v1711
        %v1716 = vpack.c.bf16 %v1714, %v1713
        %s1717 = scalar_lea.vmem %s5, 11
        %v1718 = vld [vmem:[%s1717] sm:$0x1]
        %v1720 = vlaneseq
        %v1721 = vshrl.u32 %v1720, 7
        %v1722 = vsub.s32 0, %v1721
        %v1723 = vrot.slane %v1718, %v1722
        %1725 = vmatprep.subr.bf16.mxu0 0
        %1726 = vmatpush1.bf16.msra.mxu0 %v1715
        %1727 = vmatprep.subr.bf16.mxu0 0
        %1728 = vmatpush1.bf16.msra.mxu0 %v1716
        %1729 = vmatprep.subr.bf16.mxu0 0
        %1730 = vmatpush1.bf16.msra.mxu0 0
        %1731 = vmatprep.subr.bf16.mxu0 0
        %1732 = vmatpush1.bf16.msra.mxu0 0
        %1733 = vmatprep.subr.bf16.mxu0 0
        %1734 = vmatpush1.bf16.msra.mxu0 0
        %1735 = vmatprep.subr.bf16.mxu0 0
        %1736 = vmatpush1.bf16.msra.mxu0 0
        %1737 = vmatprep.subr.bf16.mxu0 0
        %1738 = vmatpush1.bf16.msra.mxu0 0
        %1739 = vmatprep.subr.bf16.mxu0 0
        %1740 = vmatpush1.bf16.msra.mxu0 0
        %1741 = vmatprep.subr.bf16.mxu0 0
        %1742 = vmatpush1.bf16.msra.mxu0 0
        %1743 = vmatprep.subr.bf16.mxu0 0
        %1744 = vmatpush1.bf16.msra.mxu0 0
        %1745 = vmatprep.subr.bf16.mxu0 0
        %1746 = vmatpush1.bf16.msra.mxu0 0
        %1747 = vmatprep.subr.bf16.mxu0 0
        %1748 = vmatpush1.bf16.msra.mxu0 0
        %1749 = vmatprep.subr.bf16.mxu0 0
        %1750 = vmatpush1.bf16.msra.mxu0 0
        %1751 = vmatprep.subr.bf16.mxu0 0
        %1752 = vmatpush1.bf16.msra.mxu0 0
        %1753 = vmatprep.subr.bf16.mxu0 0
        %1754 = vmatpush1.bf16.msra.mxu0 0
        %1755 = vmatprep.subr.bf16.mxu0 0
        %1756 = vmatpush1.bf16.msra.mxu0 0
        %1757 = vmatprep.mubr.bf16.mxu0 0
        %1758 = vmatmul.mubr.bf16.gmra.mrb[0].mxu0 %v633
        %v1759 = vpop.f32.mrb[0].mxu0
        %v1760 = vadd.f32 %v1723, %v1759
        %v1761 = vpop.f32.mrb[0].mxu0
        %v1762 = vpop.f32.mrb[0].mxu0
        %v1763 = vpop.f32.mrb[0].mxu0
        %1764 = vdwg.mxu0
        %v1765 = vpack.c.bf16 %v1650, %v1650
        %v1766 = vpack.c.bf16 %v1705, %v1705
        %v1768 = vsel %vm787, %v1765, 0
        %v1771 = vsel %vm787, %v1766, 0
        %1773 = vmatprep.subr.bf16.mxu0 0
        %1774 = vmatpush1.bf16.xpose.msra.mxu0 %v1771
        %1775 = vmatprep.subr.bf16.mxu0 0
        %1776 = vmatpush1.bf16.xpose.msra.mxu0 0
        %1777 = vmatprep.subr.bf16.mxu0 0
        %1778 = vmatpush1.bf16.xpose.msra.mxu0 0
        %1779 = vmatprep.subr.bf16.mxu0 0
        %1780 = vmatpush1.bf16.xpose.msra.mxu0 0
        %1781 = vmatprep.subr.bf16.mxu0 0
        %1782 = vmatpush1.bf16.xpose.msra.mxu0 0
        %1783 = vmatprep.subr.bf16.mxu0 0
        %1784 = vmatpush1.bf16.xpose.msra.mxu0 0
        %1785 = vmatprep.subr.bf16.mxu0 0
        %1786 = vmatpush1.bf16.xpose.msra.mxu0 0
        %1787 = vmatprep.subr.bf16.mxu0 0
        %1788 = vmatpush1.bf16.xpose.msra.mxu0 0
        %1789 = vmatprep.subr.bf16.mxu0 0
        %1790 = vmatpush1.bf16.xpose.msra.mxu0 0
        %1791 = vmatprep.subr.bf16.mxu0 0
        %1792 = vmatpush1.bf16.xpose.msra.mxu0 0
        %1793 = vmatprep.subr.bf16.mxu0 0
        %1794 = vmatpush1.bf16.xpose.msra.mxu0 0
        %1795 = vmatprep.subr.bf16.mxu0 0
        %1796 = vmatpush1.bf16.xpose.msra.mxu0 0
        %1797 = vmatprep.subr.bf16.mxu0 0
        %1798 = vmatpush1.bf16.xpose.msra.mxu0 0
        %1799 = vmatprep.subr.bf16.mxu0 0
        %1800 = vmatpush1.bf16.xpose.msra.mxu0 0
        %1801 = vmatprep.subr.bf16.mxu0 0
        %1802 = vmatpush1.bf16.xpose.msra.mxu0 0
        %1803 = vmatprep.subr.bf16.mxu0 0
        %1804 = vmatpush1.bf16.xpose.msra.mxu0 0
        %1805 = vmatprep.mubr.bf16.mxu0 0
        %1806 = vmatmul.mubr.bf16.gmra.mrb[0].mxu0 %v1768
        %v1807 = vpop.f32.mrb[0].mxu0
        %v1808 = vadd.f32 0.0, %v1807
        %v1809 = vpop.f32.mrb[0].mxu0
        %v1810 = vpop.f32.mrb[0].mxu0
        %v1811 = vpop.f32.mrb[0].mxu0
        %1812 = vdwg.mxu0
        %v1813 = vmul.f32 %v1808, 0.35355338
        %v1814 = vadd.f32 %v1813, %v839
        %v1815 = vsel %vm787, %v1814, -inf
        %1816 = vmax.xlane.f32.xlu0 %v1815
        %v1817 = vpop.xlane.xlu0 %1816
        %v1818 = vsub.f32 %v1814, %v1817
        %v1819 = vmul.f32 %v1818, 1.442695
        %v1820 = vpow.pop %v1819
        %v1821 = vsel %vm787, %v1820, 0.0
        %1822 = vadd.xlane.f32.xlu0 %v1821
        %v1823 = vpop.xlane.xlu0 %1822
        %v1824 = vrcp.pop %v1823
        %v1825 = vmul.f32 %v1820, %v1824
        %v1826 = vpack.c.bf16 %v1825, %v1825
        %v1827 = vpack.c.bf16 %v1760, %v1760
        %v1829 = vsel %vm787, %v1826, 0
        %v1832 = vsel %vm858, %v1827, 0
        %1834 = vmatprep.subr.bf16.mxu0 0
        %1835 = vmatpush1.bf16.msra.mxu0 %v1832
        %1836 = vmatprep.subr.bf16.mxu0 0
        %1837 = vmatpush1.bf16.msra.mxu0 0
        %1838 = vmatprep.subr.bf16.mxu0 0
        %1839 = vmatpush1.bf16.msra.mxu0 0
        %1840 = vmatprep.subr.bf16.mxu0 0
        %1841 = vmatpush1.bf16.msra.mxu0 0
        %1842 = vmatprep.subr.bf16.mxu0 0
        %1843 = vmatpush1.bf16.msra.mxu0 0
        %1844 = vmatprep.subr.bf16.mxu0 0
        %1845 = vmatpush1.bf16.msra.mxu0 0
        %1846 = vmatprep.subr.bf16.mxu0 0
        %1847 = vmatpush1.bf16.msra.mxu0 0
        %1848 = vmatprep.subr.bf16.mxu0 0
        %1849 = vmatpush1.bf16.msra.mxu0 0
        %1850 = vmatprep.subr.bf16.mxu0 0
        %1851 = vmatpush1.bf16.msra.mxu0 0
        %1852 = vmatprep.subr.bf16.mxu0 0
        %1853 = vmatpush1.bf16.msra.mxu0 0
        %1854 = vmatprep.subr.bf16.mxu0 0
        %1855 = vmatpush1.bf16.msra.mxu0 0
        %1856 = vmatprep.subr.bf16.mxu0 0
        %1857 = vmatpush1.bf16.msra.mxu0 0
        %1858 = vmatprep.subr.bf16.mxu0 0
        %1859 = vmatpush1.bf16.msra.mxu0 0
        %1860 = vmatprep.subr.bf16.mxu0 0
        %1861 = vmatpush1.bf16.msra.mxu0 0
        %1862 = vmatprep.subr.bf16.mxu0 0
        %1863 = vmatpush1.bf16.msra.mxu0 0
        %1864 = vmatprep.subr.bf16.mxu0 0
        %1865 = vmatpush1.bf16.msra.mxu0 0
        %1866 = vmatprep.mubr.bf16.mxu0 0
        %1867 = vmatmul.mubr.bf16.gmra.mrb[0].mxu0 %v1829
        %v1868 = vpop.f32.mrb[0].mxu0
        %v1869 = vadd.f32 0.0, %v1868
        %v1870 = vpop.f32.mrb[0].mxu0
        %v1871 = vpop.f32.mrb[0].mxu0
        %v1872 = vpop.f32.mrb[0].mxu0
        %1873 = vdwg.mxu0
        %s1874 = scalar_lea.vmem %s6, 24
        %v1875 = vld [vmem:[%s1874] sm:$0xff]
        %v1876 = vpack.c.bf16 %v1869, %v1869
        %v1877 = vpack.c.bf16 %v1875, %v1875
        %v1879 = vsel %vm787, %v1876, 0
        %v1882 = vsel %vm858, %v1877, 0
        %1884 = vmatprep.subr.bf16.mxu0 0
        %1885 = vmatpush1.bf16.msra.mxu0 %v1882
        %1886 = vmatprep.subr.bf16.mxu0 0
        %1887 = vmatpush1.bf16.msra.mxu0 0
        %1888 = vmatprep.subr.bf16.mxu0 0
        %1889 = vmatpush1.bf16.msra.mxu0 0
        %1890 = vmatprep.subr.bf16.mxu0 0
        %1891 = vmatpush1.bf16.msra.mxu0 0
        %1892 = vmatprep.subr.bf16.mxu0 0
        %1893 = vmatpush1.bf16.msra.mxu0 0
        %1894 = vmatprep.subr.bf16.mxu0 0
        %1895 = vmatpush1.bf16.msra.mxu0 0
        %1896 = vmatprep.subr.bf16.mxu0 0
        %1897 = vmatpush1.bf16.msra.mxu0 0
        %1898 = vmatprep.subr.bf16.mxu0 0
        %1899 = vmatpush1.bf16.msra.mxu0 0
        %1900 = vmatprep.subr.bf16.mxu0 0
        %1901 = vmatpush1.bf16.msra.mxu0 0
        %1902 = vmatprep.subr.bf16.mxu0 0
        %1903 = vmatpush1.bf16.msra.mxu0 0
        %1904 = vmatprep.subr.bf16.mxu0 0
        %1905 = vmatpush1.bf16.msra.mxu0 0
        %1906 = vmatprep.subr.bf16.mxu0 0
        %1907 = vmatpush1.bf16.msra.mxu0 0
        %1908 = vmatprep.subr.bf16.mxu0 0
        %1909 = vmatpush1.bf16.msra.mxu0 0
        %1910 = vmatprep.subr.bf16.mxu0 0
        %1911 = vmatpush1.bf16.msra.mxu0 0
        %1912 = vmatprep.subr.bf16.mxu0 0
        %1913 = vmatpush1.bf16.msra.mxu0 0
        %1914 = vmatprep.subr.bf16.mxu0 0
        %1915 = vmatpush1.bf16.msra.mxu0 0
        %1916 = vmatprep.mubr.bf16.mxu0 0
        %1917 = vmatmul.mubr.bf16.gmra.mrb[0].mxu0 %v1879
        %v1918 = vpop.f32.mrb[0].mxu0
        %v1919 = vadd.f32 0.0, %v1918
        %v1920 = vpop.f32.mrb[0].mxu0
        %v1921 = vpop.f32.mrb[0].mxu0
        %v1922 = vpop.f32.mrb[0].mxu0
        %1923 = vdwg.mxu0
        %v1924 = vadd.f32 %v1599, %v1919
        %v1925 = vld [vmem:[%s7] sm:$0x1]
        %v1927 = vlaneseq
        %v1928 = vshrl.u32 %v1927, 7
        %v1929 = vsub.s32 0, %v1928
        %v1930 = vrot.slane %v1925, %v1929
        %v1932 = vadd.f32 %v1924, %v1930
        %v1933 = vadd.f32 %v617, %v1932
        %v1934 = vld [vmem:[%s8] sm:$0x1]
        %v1935 = vld [vmem:[%s9] sm:$0x1]
        %v1936 = vsel %vm589, %v1933, 0.0
        %1937 = vadd.xlane.f32.xlu0 %v1936
        %v1938 = vpop.xlane.xlu0 %1937
        %v1939 = vmul.f32 %v1938, %v593
        %v1940 = vsub.f32 %v1933, %v1939
        %v1941 = vmul.f32 %v1940, %v1940
        %v1942 = vsel %vm589, %v1941, 0.0
        %1943 = vadd.xlane.f32.xlu0 %v1942
        %v1944 = vpop.xlane.xlu0 %1943
        %v1945 = vmul.f32 %v1944, %v593
        %v1946 = vadd.f32 %v1945, 1e-12
        %v1947 = vrsqrt.pop %v1946
        %v1948 = vmul.f32 %v1940, %v1947
        %v1950 = vlaneseq
        %v1951 = vshrl.u32 %v1950, 7
        %v1952 = vsub.s32 0, %v1951
        %v1953 = vrot.slane %v1934, %v1952
        %v1955 = vmul.f32 %v1948, %v1953
        %v1957 = vlaneseq
        %v1958 = vshrl.u32 %v1957, 7
        %v1959 = vsub.s32 0, %v1958
        %v1960 = vrot.slane %v1935, %v1959
        %v1962 = vadd.f32 %v1955, %v1960
        %v1963 = vld [vmem:[%s10] sm:$0xff]
        %v1964 = vld [vmem:[%s10 + $0x8] sm:$0xff]
        %v1965 = vld [vmem:[%s10 + $0x10] sm:$0xff]
        %v1966 = vld [vmem:[%s10 + $0x18] sm:$0xff]
        %v1967 = vpack.c.bf16 %v1962, %v1962
        %v1968 = vpack.c.bf16 %v1964, %v1963
        %v1969 = vpack.c.bf16 %v1966, %v1965
        %v1970 = vld [vmem:[%s11] sm:$0x1]
        %v1972 = vlaneseq
        %v1973 = vshrl.u32 %v1972, 7
        %v1974 = vsub.s32 0, %v1973
        %v1975 = vrot.slane %v1970, %v1974
        %v1978 = vsel %vm589, %v1967, 0
        %1980 = vmatprep.subr.bf16.mxu0 0
        %1981 = vmatpush1.bf16.msra.mxu0 %v1968
        %1982 = vmatprep.subr.bf16.mxu0 0
        %1983 = vmatpush1.bf16.msra.mxu0 %v1969
        %1984 = vmatprep.subr.bf16.mxu0 0
        %1985 = vmatpush1.bf16.msra.mxu0 0
        %1986 = vmatprep.subr.bf16.mxu0 0
        %1987 = vmatpush1.bf16.msra.mxu0 0
        %1988 = vmatprep.subr.bf16.mxu0 0
        %1989 = vmatpush1.bf16.msra.mxu0 0
        %1990 = vmatprep.subr.bf16.mxu0 0
        %1991 = vmatpush1.bf16.msra.mxu0 0
        %1992 = vmatprep.subr.bf16.mxu0 0
        %1993 = vmatpush1.bf16.msra.mxu0 0
        %1994 = vmatprep.subr.bf16.mxu0 0
        %1995 = vmatpush1.bf16.msra.mxu0 0
        %1996 = vmatprep.subr.bf16.mxu0 0
        %1997 = vmatpush1.bf16.msra.mxu0 0
        %1998 = vmatprep.subr.bf16.mxu0 0
        %1999 = vmatpush1.bf16.msra.mxu0 0
        %2000 = vmatprep.subr.bf16.mxu0 0
        %2001 = vmatpush1.bf16.msra.mxu0 0
        %2002 = vmatprep.subr.bf16.mxu0 0
        %2003 = vmatpush1.bf16.msra.mxu0 0
        %2004 = vmatprep.subr.bf16.mxu0 0
        %2005 = vmatpush1.bf16.msra.mxu0 0
        %2006 = vmatprep.subr.bf16.mxu0 0
        %2007 = vmatpush1.bf16.msra.mxu0 0
        %2008 = vmatprep.subr.bf16.mxu0 0
        %2009 = vmatpush1.bf16.msra.mxu0 0
        %2010 = vmatprep.subr.bf16.mxu0 0
        %2011 = vmatpush1.bf16.msra.mxu0 0
        %2012 = vmatprep.mubr.bf16.mxu0 0
        %2013 = vmatmul.mubr.bf16.gmra.mrb[0].mxu0 %v1978
        %v2014 = vpop.f32.mrb[0].mxu0
        %v2015 = vadd.f32 %v1975, %v2014
        %v2016 = vpop.f32.mrb[0].mxu0
        %v2017 = vpop.f32.mrb[0].mxu0
        %v2018 = vpop.f32.mrb[0].mxu0
        %2019 = vdwg.mxu0
        %v2020 = vmul.f32 %v2015, 0.5
        %v2021 = vmul.f32 %v2015, 0.044715
        %v2022 = vmul.f32 %v2021, %v2015
        %v2023 = vmul.f32 %v2022, %v2015
        %v2024 = vadd.f32 %v2015, %v2023
        %v2025 = vmul.f32 %v2024, 0.7978846
        %v2026 = vtanh.pop %v2025
        %v2027 = vadd.f32 %v2026, 1.0
        %v2028 = vmul.f32 %v2020, %v2027
        %v2029 = vld [vmem:[%s12] sm:$0xff]
        %v2030 = vld [vmem:[%s12 + $0x8] sm:$0xff]
        %v2031 = vld [vmem:[%s12 + $0x10] sm:$0xff]
        %v2032 = vld [vmem:[%s12 + $0x18] sm:$0xff]
        %v2033 = vld [vmem:[%s12 + $0x20] sm:$0xff]
        %v2034 = vld [vmem:[%s12 + $0x28] sm:$0xff]
        %v2035 = vld [vmem:[%s12 + $0x30] sm:$0xff]
        %v2036 = vld [vmem:[%s12 + $0x38] sm:$0xff]
        %v2037 = vld [vmem:[%s12 + $0x40] sm:$0xff]
        %v2038 = vld [vmem:[%s12 + $0x48] sm:$0xff]
        %v2039 = vld [vmem:[%s12 + $0x50] sm:$0xff]
        %v2040 = vld [vmem:[%s12 + $0x58] sm:$0xff]
        %v2041 = vld [vmem:[%s12 + $0x60] sm:$0xff]
        %v2042 = vld [vmem:[%s12 + $0x68] sm:$0xff]
        %v2043 = vld [vmem:[%s12 + $0x70] sm:$0xff]
        %v2044 = vld [vmem:[%s12 + $0x78] sm:$0xff]
        %v2045 = vpack.c.bf16 %v2028, %v2028
        %v2046 = vpack.c.bf16 %v2030, %v2029
        %v2047 = vpack.c.bf16 %v2032, %v2031
        %v2048 = vpack.c.bf16 %v2034, %v2033
        %v2049 = vpack.c.bf16 %v2036, %v2035
        %v2050 = vpack.c.bf16 %v2038, %v2037
        %v2051 = vpack.c.bf16 %v2040, %v2039
        %v2052 = vpack.c.bf16 %v2042, %v2041
        %v2053 = vpack.c.bf16 %v2044, %v2043
        %v2054 = vld [vmem:[%s13] sm:$0x1]
        %v2056 = vlaneseq
        %v2057 = vshrl.u32 %v2056, 7
        %v2058 = vsub.s32 0, %v2057
        %v2059 = vrot.slane %v2054, %v2058
        %2061 = vmatprep.subr.bf16.mxu0 0
        %2062 = vmatpush1.bf16.msra.mxu0 %v2046
        %2063 = vmatprep.subr.bf16.mxu0 0
        %2064 = vmatpush1.bf16.msra.mxu0 %v2047
        %2065 = vmatprep.subr.bf16.mxu0 0
        %2066 = vmatpush1.bf16.msra.mxu0 %v2048
        %2067 = vmatprep.subr.bf16.mxu0 0
        %2068 = vmatpush1.bf16.msra.mxu0 %v2049
        %2069 = vmatprep.subr.bf16.mxu0 0
        %2070 = vmatpush1.bf16.msra.mxu0 %v2050
        %2071 = vmatprep.subr.bf16.mxu0 0
        %2072 = vmatpush1.bf16.msra.mxu0 %v2051
        %2073 = vmatprep.subr.bf16.mxu0 0
        %2074 = vmatpush1.bf16.msra.mxu0 %v2052
        %2075 = vmatprep.subr.bf16.mxu0 0
        %2076 = vmatpush1.bf16.msra.mxu0 %v2053
        %2077 = vmatprep.subr.bf16.mxu0 0
        %2078 = vmatpush1.bf16.msra.mxu0 0
        %2079 = vmatprep.subr.bf16.mxu0 0
        %2080 = vmatpush1.bf16.msra.mxu0 0
        %2081 = vmatprep.subr.bf16.mxu0 0
        %2082 = vmatpush1.bf16.msra.mxu0 0
        %2083 = vmatprep.subr.bf16.mxu0 0
        %2084 = vmatpush1.bf16.msra.mxu0 0
        %2085 = vmatprep.subr.bf16.mxu0 0
        %2086 = vmatpush1.bf16.msra.mxu0 0
        %2087 = vmatprep.subr.bf16.mxu0 0
        %2088 = vmatpush1.bf16.msra.mxu0 0
        %2089 = vmatprep.subr.bf16.mxu0 0
        %2090 = vmatpush1.bf16.msra.mxu0 0
        %2091 = vmatprep.subr.bf16.mxu0 0
        %2092 = vmatpush1.bf16.msra.mxu0 0
        %2093 = vmatprep.mubr.bf16.mxu0 0
        %2094 = vmatmul.mubr.bf16.gmra.mrb[0].mxu0 %v2045
        %v2095 = vpop.f32.mrb[0].mxu0
        %v2096 = vadd.f32 %v2059, %v2095
        %v2097 = vpop.f32.mrb[0].mxu0
        %v2098 = vpop.f32.mrb[0].mxu0
        %v2099 = vpop.f32.mrb[0].mxu0
        %2100 = vdwg.mxu0
        %v2101 = vadd.f32 %v1962, %v2096
        %v2102 = vld [vmem:[%s14] sm:$0x1]
        %v2103 = vld [vmem:[%s15] sm:$0x1]
        %v2104 = vsel %vm589, %v2101, 0.0
        %2105 = vadd.xlane.f32.xlu0 %v2104
        %v2106 = vpop.xlane.xlu0 %2105
        %v2107 = vmul.f32 %v2106, %v593
        %v2108 = vsub.f32 %v2101, %v2107
        %v2109 = vmul.f32 %v2108, %v2108
        %v2110 = vsel %vm589, %v2109, 0.0
        %2111 = vadd.xlane.f32.xlu0 %v2110
        %v2112 = vpop.xlane.xlu0 %2111
        %v2113 = vmul.f32 %v2112, %v593
        %v2114 = vadd.f32 %v2113, 1e-12
        %v2115 = vrsqrt.pop %v2114
        %v2116 = vmul.f32 %v2108, %v2115
        %v2118 = vlaneseq
        %v2119 = vshrl.u32 %v2118, 7
        %v2120 = vsub.s32 0, %v2119
        %v2121 = vrot.slane %v2102, %v2120
        %v2123 = vmul.f32 %v2116, %v2121
        %v2125 = vlaneseq
        %v2126 = vshrl.u32 %v2125, 7
        %v2127 = vsub.s32 0, %v2126
        %v2128 = vrot.slane %v2103, %v2127
        %v2130 = vadd.f32 %v2123, %v2128
        %s2131 = scalar_lea.vmem %s4, 384
        %v2132 = vld [vmem:[%s2131] sm:$0xff]
        %v2133 = vld [vmem:[%s2131 + $0x8] sm:$0xff]
        %v2134 = vld [vmem:[%s2131 + $0x10] sm:$0xff]
        %v2135 = vld [vmem:[%s2131 + $0x18] sm:$0xff]
        %v2136 = vpack.c.bf16 %v2130, %v2130
        %v2137 = vpack.c.bf16 %v2133, %v2132
        %v2138 = vpack.c.bf16 %v2135, %v2134
        %s2139 = scalar_lea.vmem %s5, 12
        %v2140 = vld [vmem:[%s2139] sm:$0x1]
        %v2142 = vlaneseq
        %v2143 = vshrl.u32 %v2142, 7
        %v2144 = vsub.s32 0, %v2143
        %v2145 = vrot.slane %v2140, %v2144
        %v2148 = vsel %vm589, %v2136, 0
        %2150 = vmatprep.subr.bf16.mxu0 0
        %2151 = vmatpush1.bf16.msra.mxu0 %v2137
        %2152 = vmatprep.subr.bf16.mxu0 0
        %2153 = vmatpush1.bf16.msra.mxu0 %v2138
        %2154 = vmatprep.subr.bf16.mxu0 0
        %2155 = vmatpush1.bf16.msra.mxu0 0
        %2156 = vmatprep.subr.bf16.mxu0 0
        %2157 = vmatpush1.bf16.msra.mxu0 0
        %2158 = vmatprep.subr.bf16.mxu0 0
        %2159 = vmatpush1.bf16.msra.mxu0 0
        %2160 = vmatprep.subr.bf16.mxu0 0
        %2161 = vmatpush1.bf16.msra.mxu0 0
        %2162 = vmatprep.subr.bf16.mxu0 0
        %2163 = vmatpush1.bf16.msra.mxu0 0
        %2164 = vmatprep.subr.bf16.mxu0 0
        %2165 = vmatpush1.bf16.msra.mxu0 0
        %2166 = vmatprep.subr.bf16.mxu0 0
        %2167 = vmatpush1.bf16.msra.mxu0 0
        %2168 = vmatprep.subr.bf16.mxu0 0
        %2169 = vmatpush1.bf16.msra.mxu0 0
        %2170 = vmatprep.subr.bf16.mxu0 0
        %2171 = vmatpush1.bf16.msra.mxu0 0
        %2172 = vmatprep.subr.bf16.mxu0 0
        %2173 = vmatpush1.bf16.msra.mxu0 0
        %2174 = vmatprep.subr.bf16.mxu0 0
        %2175 = vmatpush1.bf16.msra.mxu0 0
        %2176 = vmatprep.subr.bf16.mxu0 0
        %2177 = vmatpush1.bf16.msra.mxu0 0
        %2178 = vmatprep.subr.bf16.mxu0 0
        %2179 = vmatpush1.bf16.msra.mxu0 0
        %2180 = vmatprep.subr.bf16.mxu0 0
        %2181 = vmatpush1.bf16.msra.mxu0 0
        %2182 = vmatprep.mubr.bf16.mxu0 0
        %2183 = vmatmul.mubr.bf16.gmra.mrb[0].mxu0 %v2148
        %v2184 = vpop.f32.mrb[0].mxu0
        %v2185 = vadd.f32 %v2145, %v2184
        %v2186 = vpop.f32.mrb[0].mxu0
        %v2187 = vpop.f32.mrb[0].mxu0
        %v2188 = vpop.f32.mrb[0].mxu0
        %2189 = vdwg.mxu0
        %s2190 = scalar_lea.vmem %s4, 512
        %v2191 = vld [vmem:[%s2190] sm:$0xff]
        %v2192 = vld [vmem:[%s2190 + $0x8] sm:$0xff]
        %v2193 = vld [vmem:[%s2190 + $0x10] sm:$0xff]
        %v2194 = vld [vmem:[%s2190 + $0x18] sm:$0xff]
        %v2195 = vpack.c.bf16 %v2192, %v2191
        %v2196 = vpack.c.bf16 %v2194, %v2193
        %s2197 = scalar_lea.vmem %s5, 16
        %v2198 = vld [vmem:[%s2197] sm:$0x1]
        %v2200 = vlaneseq
        %v2201 = vshrl.u32 %v2200, 7
        %v2202 = vsub.s32 0, %v2201
        %v2203 = vrot.slane %v2198, %v2202
        %2205 = vmatprep.subr.bf16.mxu0 0
        %2206 = vmatpush1.bf16.msra.mxu0 %v2195
        %2207 = vmatprep.subr.bf16.mxu0 0
        %2208 = vmatpush1.bf16.msra.mxu0 %v2196
        %2209 = vmatprep.subr.bf16.mxu0 0
        %2210 = vmatpush1.bf16.msra.mxu0 0
        %2211 = vmatprep.subr.bf16.mxu0 0
        %2212 = vmatpush1.bf16.msra.mxu0 0
        %2213 = vmatprep.subr.bf16.mxu0 0
        %2214 = vmatpush1.bf16.msra.mxu0 0
        %2215 = vmatprep.subr.bf16.mxu0 0
        %2216 = vmatpush1.bf16.msra.mxu0 0
        %2217 = vmatprep.subr.bf16.mxu0 0
        %2218 = vmatpush1.bf16.msra.mxu0 0
        %2219 = vmatprep.subr.bf16.mxu0 0
        %2220 = vmatpush1.bf16.msra.mxu0 0
        %2221 = vmatprep.subr.bf16.mxu0 0
        %2222 = vmatpush1.bf16.msra.mxu0 0
        %2223 = vmatprep.subr.bf16.mxu0 0
        %2224 = vmatpush1.bf16.msra.mxu0 0
        %2225 = vmatprep.subr.bf16.mxu0 0
        %2226 = vmatpush1.bf16.msra.mxu0 0
        %2227 = vmatprep.subr.bf16.mxu0 0
        %2228 = vmatpush1.bf16.msra.mxu0 0
        %2229 = vmatprep.subr.bf16.mxu0 0
        %2230 = vmatpush1.bf16.msra.mxu0 0
        %2231 = vmatprep.subr.bf16.mxu0 0
        %2232 = vmatpush1.bf16.msra.mxu0 0
        %2233 = vmatprep.subr.bf16.mxu0 0
        %2234 = vmatpush1.bf16.msra.mxu0 0
        %2235 = vmatprep.subr.bf16.mxu0 0
        %2236 = vmatpush1.bf16.msra.mxu0 0
        %2237 = vmatprep.mubr.bf16.mxu0 0
        %2238 = vmatmul.mubr.bf16.gmra.mrb[0].mxu0 %v2148
        %v2239 = vpop.f32.mrb[0].mxu0
        %v2240 = vadd.f32 %v2203, %v2239
        %v2241 = vpop.f32.mrb[0].mxu0
        %v2242 = vpop.f32.mrb[0].mxu0
        %v2243 = vpop.f32.mrb[0].mxu0
        %2244 = vdwg.mxu0
        %s2245 = scalar_lea.vmem %s4, 640
        %v2246 = vld [vmem:[%s2245] sm:$0xff]
        %v2247 = vld [vmem:[%s2245 + $0x8] sm:$0xff]
        %v2248 = vld [vmem:[%s2245 + $0x10] sm:$0xff]
        %v2249 = vld [vmem:[%s2245 + $0x18] sm:$0xff]
        %v2250 = vpack.c.bf16 %v2247, %v2246
        %v2251 = vpack.c.bf16 %v2249, %v2248
        %s2252 = scalar_lea.vmem %s5, 20
        %v2253 = vld [vmem:[%s2252] sm:$0x1]
        %v2255 = vlaneseq
        %v2256 = vshrl.u32 %v2255, 7
        %v2257 = vsub.s32 0, %v2256
        %v2258 = vrot.slane %v2253, %v2257
        %2260 = vmatprep.subr.bf16.mxu0 0
        %2261 = vmatpush1.bf16.msra.mxu0 %v2250
        %2262 = vmatprep.subr.bf16.mxu0 0
        %2263 = vmatpush1.bf16.msra.mxu0 %v2251
        %2264 = vmatprep.subr.bf16.mxu0 0
        %2265 = vmatpush1.bf16.msra.mxu0 0
        %2266 = vmatprep.subr.bf16.mxu0 0
        %2267 = vmatpush1.bf16.msra.mxu0 0
        %2268 = vmatprep.subr.bf16.mxu0 0
        %2269 = vmatpush1.bf16.msra.mxu0 0
        %2270 = vmatprep.subr.bf16.mxu0 0
        %2271 = vmatpush1.bf16.msra.mxu0 0
        %2272 = vmatprep.subr.bf16.mxu0 0
        %2273 = vmatpush1.bf16.msra.mxu0 0
        %2274 = vmatprep.subr.bf16.mxu0 0
        %2275 = vmatpush1.bf16.msra.mxu0 0
        %2276 = vmatprep.subr.bf16.mxu0 0
        %2277 = vmatpush1.bf16.msra.mxu0 0
        %2278 = vmatprep.subr.bf16.mxu0 0
        %2279 = vmatpush1.bf16.msra.mxu0 0
        %2280 = vmatprep.subr.bf16.mxu0 0
        %2281 = vmatpush1.bf16.msra.mxu0 0
        %2282 = vmatprep.subr.bf16.mxu0 0
        %2283 = vmatpush1.bf16.msra.mxu0 0
        %2284 = vmatprep.subr.bf16.mxu0 0
        %2285 = vmatpush1.bf16.msra.mxu0 0
        %2286 = vmatprep.subr.bf16.mxu0 0
        %2287 = vmatpush1.bf16.msra.mxu0 0
        %2288 = vmatprep.subr.bf16.mxu0 0
        %2289 = vmatpush1.bf16.msra.mxu0 0
        %2290 = vmatprep.subr.bf16.mxu0 0
        %2291 = vmatpush1.bf16.msra.mxu0 0
        %2292 = vmatprep.mubr.bf16.mxu0 0
        %2293 = vmatmul.mubr.bf16.gmra.mrb[0].mxu0 %v2148
        %v2294 = vpop.f32.mrb[0].mxu0
        %v2295 = vadd.f32 %v2258, %v2294
        %v2296 = vpop.f32.mrb[0].mxu0
        %v2297 = vpop.f32.mrb[0].mxu0
        %v2298 = vpop.f32.mrb[0].mxu0
        %2299 = vdwg.mxu0
        %v2300 = vpack.c.bf16 %v2185, %v2185
        %v2301 = vpack.c.bf16 %v2240, %v2240
        %v2303 = vsel %vm787, %v2300, 0
        %v2306 = vsel %vm787, %v2301, 0
        %2308 = vmatprep.subr.bf16.mxu0 0
        %2309 = vmatpush1.bf16.xpose.msra.mxu0 %v2306
        %2310 = vmatprep.subr.bf16.mxu0 0
        %2311 = vmatpush1.bf16.xpose.msra.mxu0 0
        %2312 = vmatprep.subr.bf16.mxu0 0
        %2313 = vmatpush1.bf16.xpose.msra.mxu0 0
        %2314 = vmatprep.subr.bf16.mxu0 0
        %2315 = vmatpush1.bf16.xpose.msra.mxu0 0
        %2316 = vmatprep.subr.bf16.mxu0 0
        %2317 = vmatpush1.bf16.xpose.msra.mxu0 0
        %2318 = vmatprep.subr.bf16.mxu0 0
        %2319 = vmatpush1.bf16.xpose.msra.mxu0 0
        %2320 = vmatprep.subr.bf16.mxu0 0
        %2321 = vmatpush1.bf16.xpose.msra.mxu0 0
        %2322 = vmatprep.subr.bf16.mxu0 0
        %2323 = vmatpush1.bf16.xpose.msra.mxu0 0
        %2324 = vmatprep.subr.bf16.mxu0 0
        %2325 = vmatpush1.bf16.xpose.msra.mxu0 0
        %2326 = vmatprep.subr.bf16.mxu0 0
        %2327 = vmatpush1.bf16.xpose.msra.mxu0 0
        %2328 = vmatprep.subr.bf16.mxu0 0
        %2329 = vmatpush1.bf16.xpose.msra.mxu0 0
        %2330 = vmatprep.subr.bf16.mxu0 0
        %2331 = vmatpush1.bf16.xpose.msra.mxu0 0
        %2332 = vmatprep.subr.bf16.mxu0 0
        %2333 = vmatpush1.bf16.xpose.msra.mxu0 0
        %2334 = vmatprep.subr.bf16.mxu0 0
        %2335 = vmatpush1.bf16.xpose.msra.mxu0 0
        %2336 = vmatprep.subr.bf16.mxu0 0
        %2337 = vmatpush1.bf16.xpose.msra.mxu0 0
        %2338 = vmatprep.subr.bf16.mxu0 0
        %2339 = vmatpush1.bf16.xpose.msra.mxu0 0
        %2340 = vmatprep.mubr.bf16.mxu0 0
        %2341 = vmatmul.mubr.bf16.gmra.mrb[0].mxu0 %v2303
        %v2342 = vpop.f32.mrb[0].mxu0
        %v2343 = vadd.f32 0.0, %v2342
        %v2344 = vpop.f32.mrb[0].mxu0
        %v2345 = vpop.f32.mrb[0].mxu0
        %v2346 = vpop.f32.mrb[0].mxu0
        %2347 = vdwg.mxu0
        %v2348 = vmul.f32 %v2343, 0.35355338
        %v2349 = vadd.f32 %v2348, %v839
        %v2350 = vsel %vm787, %v2349, -inf
        %2351 = vmax.xlane.f32.xlu0 %v2350
        %v2352 = vpop.xlane.xlu0 %2351
        %v2353 = vsub.f32 %v2349, %v2352
        %v2354 = vmul.f32 %v2353, 1.442695
        %v2355 = vpow.pop %v2354
        %v2356 = vsel %vm787, %v2355, 0.0
        %2357 = vadd.xlane.f32.xlu0 %v2356
        %v2358 = vpop.xlane.xlu0 %2357
        %v2359 = vrcp.pop %v2358
        %v2360 = vmul.f32 %v2355, %v2359
        %v2361 = vpack.c.bf16 %v2360, %v2360
        %v2362 = vpack.c.bf16 %v2295, %v2295
        %v2364 = vsel %vm787, %v2361, 0
        %v2367 = vsel %vm858, %v2362, 0
        %2369 = vmatprep.subr.bf16.mxu0 0
        %2370 = vmatpush1.bf16.msra.mxu0 %v2367
        %2371 = vmatprep.subr.bf16.mxu0 0
        %2372 = vmatpush1.bf16.msra.mxu0 0
        %2373 = vmatprep.subr.bf16.mxu0 0
        %2374 = vmatpush1.bf16.msra.mxu0 0
        %2375 = vmatprep.subr.bf16.mxu0 0
        %2376 = vmatpush1.bf16.msra.mxu0 0
        %2377 = vmatprep.subr.bf16.mxu0 0
        %2378 = vmatpush1.bf16.msra.mxu0 0
        %2379 = vmatprep.subr.bf16.mxu0 0
        %2380 = vmatpush1.bf16.msra.mxu0 0
        %2381 = vmatprep.subr.bf16.mxu0 0
        %2382 = vmatpush1.bf16.msra.mxu0 0
        %2383 = vmatprep.subr.bf16.mxu0 0
        %2384 = vmatpush1.bf16.msra.mxu0 0
        %2385 = vmatprep.subr.bf16.mxu0 0
        %2386 = vmatpush1.bf16.msra.mxu0 0
        %2387 = vmatprep.subr.bf16.mxu0 0
        %2388 = vmatpush1.bf16.msra.mxu0 0
        %2389 = vmatprep.subr.bf16.mxu0 0
        %2390 = vmatpush1.bf16.msra.mxu0 0
        %2391 = vmatprep.subr.bf16.mxu0 0
        %2392 = vmatpush1.bf16.msra.mxu0 0
        %2393 = vmatprep.subr.bf16.mxu0 0
        %2394 = vmatpush1.bf16.msra.mxu0 0
        %2395 = vmatprep.subr.bf16.mxu0 0
        %2396 = vmatpush1.bf16.msra.mxu0 0
        %2397 = vmatprep.subr.bf16.mxu0 0
        %2398 = vmatpush1.bf16.msra.mxu0 0
        %2399 = vmatprep.subr.bf16.mxu0 0
        %2400 = vmatpush1.bf16.msra.mxu0 0
        %2401 = vmatprep.mubr.bf16.mxu0 0
        %2402 = vmatmul.mubr.bf16.gmra.mrb[0].mxu0 %v2364
        %v2403 = vpop.f32.mrb[0].mxu0
        %v2404 = vadd.f32 0.0, %v2403
        %v2405 = vpop.f32.mrb[0].mxu0
        %v2406 = vpop.f32.mrb[0].mxu0
        %v2407 = vpop.f32.mrb[0].mxu0
        %2408 = vdwg.mxu0
        %s2409 = scalar_lea.vmem %s6, 32
        %v2410 = vld [vmem:[%s2409] sm:$0xff]
        %v2411 = vpack.c.bf16 %v2404, %v2404
        %v2412 = vpack.c.bf16 %v2410, %v2410
        %s2413 = scalar_lea.vmem %s4, 416
        %v2414 = vld [vmem:[%s2413] sm:$0xff]
        %v2415 = vld [vmem:[%s2413 + $0x8] sm:$0xff]
        %v2416 = vld [vmem:[%s2413 + $0x10] sm:$0xff]
        %v2417 = vld [vmem:[%s2413 + $0x18] sm:$0xff]
        %v2418 = vpack.c.bf16 %v2415, %v2414
        %v2419 = vpack.c.bf16 %v2417, %v2416
        %s2420 = scalar_lea.vmem %s5, 13
        %v2421 = vld [vmem:[%s2420] sm:$0x1]
        %v2423 = vlaneseq
        %v2424 = vshrl.u32 %v2423, 7
        %v2425 = vsub.s32 0, %v2424
        %v2426 = vrot.slane %v2421, %v2425
        %2428 = vmatprep.subr.bf16.mxu0 0
        %2429 = vmatpush1.bf16.msra.mxu0 %v2418
        %2430 = vmatprep.subr.bf16.mxu0 0
        %2431 = vmatpush1.bf16.msra.mxu0 %v2419
        %2432 = vmatprep.subr.bf16.mxu0 0
        %2433 = vmatpush1.bf16.msra.mxu0 0
        %2434 = vmatprep.subr.bf16.mxu0 0
        %2435 = vmatpush1.bf16.msra.mxu0 0
        %2436 = vmatprep.subr.bf16.mxu0 0
        %2437 = vmatpush1.bf16.msra.mxu0 0
        %2438 = vmatprep.subr.bf16.mxu0 0
        %2439 = vmatpush1.bf16.msra.mxu0 0
        %2440 = vmatprep.subr.bf16.mxu0 0
        %2441 = vmatpush1.bf16.msra.mxu0 0
        %2442 = vmatprep.subr.bf16.mxu0 0
        %2443 = vmatpush1.bf16.msra.mxu0 0
        %2444 = vmatprep.subr.bf16.mxu0 0
        %2445 = vmatpush1.bf16.msra.mxu0 0
        %2446 = vmatprep.subr.bf16.mxu0 0
        %2447 = vmatpush1.bf16.msra.mxu0 0
        %2448 = vmatprep.subr.bf16.mxu0 0
        %2449 = vmatpush1.bf16.msra.mxu0 0
        %2450 = vmatprep.subr.bf16.mxu0 0
        %2451 = vmatpush1.bf16.msra.mxu0 0
        %2452 = vmatprep.subr.bf16.mxu0 0
        %2453 = vmatpush1.bf16.msra.mxu0 0
        %2454 = vmatprep.subr.bf16.mxu0 0
        %2455 = vmatpush1.bf16.msra.mxu0 0
        %2456 = vmatprep.subr.bf16.mxu0 0
        %2457 = vmatpush1.bf16.msra.mxu0 0
        %2458 = vmatprep.subr.bf16.mxu0 0
        %2459 = vmatpush1.bf16.msra.mxu0 0
        %2460 = vmatprep.mubr.bf16.mxu0 0
        %2461 = vmatmul.mubr.bf16.gmra.mrb[0].mxu0 %v2148
        %v2462 = vpop.f32.mrb[0].mxu0
        %v2463 = vadd.f32 %v2426, %v2462
        %v2464 = vpop.f32.mrb[0].mxu0
        %v2465 = vpop.f32.mrb[0].mxu0
        %v2466 = vpop.f32.mrb[0].mxu0
        %2467 = vdwg.mxu0
        %s2468 = scalar_lea.vmem %s4, 544
        %v2469 = vld [vmem:[%s2468] sm:$0xff]
        %v2470 = vld [vmem:[%s2468 + $0x8] sm:$0xff]
        %v2471 = vld [vmem:[%s2468 + $0x10] sm:$0xff]
        %v2472 = vld [vmem:[%s2468 + $0x18] sm:$0xff]
        %v2473 = vpack.c.bf16 %v2470, %v2469
        %v2474 = vpack.c.bf16 %v2472, %v2471
        %s2475 = scalar_lea.vmem %s5, 17
        %v2476 = vld [vmem:[%s2475] sm:$0x1]
        %v2478 = vlaneseq
        %v2479 = vshrl.u32 %v2478, 7
        %v2480 = vsub.s32 0, %v2479
        %v2481 = vrot.slane %v2476, %v2480
        %2483 = vmatprep.subr.bf16.mxu0 0
        %2484 = vmatpush1.bf16.msra.mxu0 %v2473
        %2485 = vmatprep.subr.bf16.mxu0 0
        %2486 = vmatpush1.bf16.msra.mxu0 %v2474
        %2487 = vmatprep.subr.bf16.mxu0 0
        %2488 = vmatpush1.bf16.msra.mxu0 0
        %2489 = vmatprep.subr.bf16.mxu0 0
        %2490 = vmatpush1.bf16.msra.mxu0 0
        %2491 = vmatprep.subr.bf16.mxu0 0
        %2492 = vmatpush1.bf16.msra.mxu0 0
        %2493 = vmatprep.subr.bf16.mxu0 0
        %2494 = vmatpush1.bf16.msra.mxu0 0
        %2495 = vmatprep.subr.bf16.mxu0 0
        %2496 = vmatpush1.bf16.msra.mxu0 0
        %2497 = vmatprep.subr.bf16.mxu0 0
        %2498 = vmatpush1.bf16.msra.mxu0 0
        %2499 = vmatprep.subr.bf16.mxu0 0
        %2500 = vmatpush1.bf16.msra.mxu0 0
        %2501 = vmatprep.subr.bf16.mxu0 0
        %2502 = vmatpush1.bf16.msra.mxu0 0
        %2503 = vmatprep.subr.bf16.mxu0 0
        %2504 = vmatpush1.bf16.msra.mxu0 0
        %2505 = vmatprep.subr.bf16.mxu0 0
        %2506 = vmatpush1.bf16.msra.mxu0 0
        %2507 = vmatprep.subr.bf16.mxu0 0
        %2508 = vmatpush1.bf16.msra.mxu0 0
        %2509 = vmatprep.subr.bf16.mxu0 0
        %2510 = vmatpush1.bf16.msra.mxu0 0
        %2511 = vmatprep.subr.bf16.mxu0 0
        %2512 = vmatpush1.bf16.msra.mxu0 0
        %2513 = vmatprep.subr.bf16.mxu0 0
        %2514 = vmatpush1.bf16.msra.mxu0 0
        %2515 = vmatprep.mubr.bf16.mxu0 0
        %2516 = vmatmul.mubr.bf16.gmra.mrb[0].mxu0 %v2148
        %v2517 = vpop.f32.mrb[0].mxu0
        %v2518 = vadd.f32 %v2481, %v2517
        %v2519 = vpop.f32.mrb[0].mxu0
        %v2520 = vpop.f32.mrb[0].mxu0
        %v2521 = vpop.f32.mrb[0].mxu0
        %2522 = vdwg.mxu0
        %s2523 = scalar_lea.vmem %s4, 672
        %v2524 = vld [vmem:[%s2523] sm:$0xff]
        %v2525 = vld [vmem:[%s2523 + $0x8] sm:$0xff]
        %v2526 = vld [vmem:[%s2523 + $0x10] sm:$0xff]
        %v2527 = vld [vmem:[%s2523 + $0x18] sm:$0xff]
        %v2528 = vpack.c.bf16 %v2525, %v2524
        %v2529 = vpack.c.bf16 %v2527, %v2526
        %s2530 = scalar_lea.vmem %s5, 21
        %v2531 = vld [vmem:[%s2530] sm:$0x1]
        %v2533 = vlaneseq
        %v2534 = vshrl.u32 %v2533, 7
        %v2535 = vsub.s32 0, %v2534
        %v2536 = vrot.slane %v2531, %v2535
        %2538 = vmatprep.subr.bf16.mxu0 0
        %2539 = vmatpush1.bf16.msra.mxu0 %v2528
        %2540 = vmatprep.subr.bf16.mxu0 0
        %2541 = vmatpush1.bf16.msra.mxu0 %v2529
        %2542 = vmatprep.subr.bf16.mxu0 0
        %2543 = vmatpush1.bf16.msra.mxu0 0
        %2544 = vmatprep.subr.bf16.mxu0 0
        %2545 = vmatpush1.bf16.msra.mxu0 0
        %2546 = vmatprep.subr.bf16.mxu0 0
        %2547 = vmatpush1.bf16.msra.mxu0 0
        %2548 = vmatprep.subr.bf16.mxu0 0
        %2549 = vmatpush1.bf16.msra.mxu0 0
        %2550 = vmatprep.subr.bf16.mxu0 0
        %2551 = vmatpush1.bf16.msra.mxu0 0
        %2552 = vmatprep.subr.bf16.mxu0 0
        %2553 = vmatpush1.bf16.msra.mxu0 0
        %2554 = vmatprep.subr.bf16.mxu0 0
        %2555 = vmatpush1.bf16.msra.mxu0 0
        %2556 = vmatprep.subr.bf16.mxu0 0
        %2557 = vmatpush1.bf16.msra.mxu0 0
        %2558 = vmatprep.subr.bf16.mxu0 0
        %2559 = vmatpush1.bf16.msra.mxu0 0
        %2560 = vmatprep.subr.bf16.mxu0 0
        %2561 = vmatpush1.bf16.msra.mxu0 0
        %2562 = vmatprep.subr.bf16.mxu0 0
        %2563 = vmatpush1.bf16.msra.mxu0 0
        %2564 = vmatprep.subr.bf16.mxu0 0
        %2565 = vmatpush1.bf16.msra.mxu0 0
        %2566 = vmatprep.subr.bf16.mxu0 0
        %2567 = vmatpush1.bf16.msra.mxu0 0
        %2568 = vmatprep.subr.bf16.mxu0 0
        %2569 = vmatpush1.bf16.msra.mxu0 0
        %2570 = vmatprep.mubr.bf16.mxu0 0
        %2571 = vmatmul.mubr.bf16.gmra.mrb[0].mxu0 %v2148
        %v2572 = vpop.f32.mrb[0].mxu0
        %v2573 = vadd.f32 %v2536, %v2572
        %v2574 = vpop.f32.mrb[0].mxu0
        %v2575 = vpop.f32.mrb[0].mxu0
        %v2576 = vpop.f32.mrb[0].mxu0
        %2577 = vdwg.mxu0
        %v2578 = vpack.c.bf16 %v2463, %v2463
        %v2579 = vpack.c.bf16 %v2518, %v2518
        %v2581 = vsel %vm787, %v2578, 0
        %v2584 = vsel %vm787, %v2579, 0
        %2586 = vmatprep.subr.bf16.mxu0 0
        %2587 = vmatpush1.bf16.xpose.msra.mxu0 %v2584
        %2588 = vmatprep.subr.bf16.mxu0 0
        %2589 = vmatpush1.bf16.xpose.msra.mxu0 0
        %2590 = vmatprep.subr.bf16.mxu0 0
        %2591 = vmatpush1.bf16.xpose.msra.mxu0 0
        %2592 = vmatprep.subr.bf16.mxu0 0
        %2593 = vmatpush1.bf16.xpose.msra.mxu0 0
        %2594 = vmatprep.subr.bf16.mxu0 0
        %2595 = vmatpush1.bf16.xpose.msra.mxu0 0
        %2596 = vmatprep.subr.bf16.mxu0 0
        %2597 = vmatpush1.bf16.xpose.msra.mxu0 0
        %2598 = vmatprep.subr.bf16.mxu0 0
        %2599 = vmatpush1.bf16.xpose.msra.mxu0 0
        %2600 = vmatprep.subr.bf16.mxu0 0
        %2601 = vmatpush1.bf16.xpose.msra.mxu0 0
        %2602 = vmatprep.subr.bf16.mxu0 0
        %2603 = vmatpush1.bf16.xpose.msra.mxu0 0
        %2604 = vmatprep.subr.bf16.mxu0 0
        %2605 = vmatpush1.bf16.xpose.msra.mxu0 0
        %2606 = vmatprep.subr.bf16.mxu0 0
        %2607 = vmatpush1.bf16.xpose.msra.mxu0 0
        %2608 = vmatprep.subr.bf16.mxu0 0
        %2609 = vmatpush1.bf16.xpose.msra.mxu0 0
        %2610 = vmatprep.subr.bf16.mxu0 0
        %2611 = vmatpush1.bf16.xpose.msra.mxu0 0
        %2612 = vmatprep.subr.bf16.mxu0 0
        %2613 = vmatpush1.bf16.xpose.msra.mxu0 0
        %2614 = vmatprep.subr.bf16.mxu0 0
        %2615 = vmatpush1.bf16.xpose.msra.mxu0 0
        %2616 = vmatprep.subr.bf16.mxu0 0
        %2617 = vmatpush1.bf16.xpose.msra.mxu0 0
        %2618 = vmatprep.mubr.bf16.mxu0 0
        %2619 = vmatmul.mubr.bf16.gmra.mrb[0].mxu0 %v2581
        %v2620 = vpop.f32.mrb[0].mxu0
        %v2621 = vadd.f32 0.0, %v2620
        %v2622 = vpop.f32.mrb[0].mxu0
        %v2623 = vpop.f32.mrb[0].mxu0
        %v2624 = vpop.f32.mrb[0].mxu0
        %2625 = vdwg.mxu0
        %v2626 = vmul.f32 %v2621, 0.35355338
        %v2627 = vadd.f32 %v2626, %v839
        %v2628 = vsel %vm787, %v2627, -inf
        %2629 = vmax.xlane.f32.xlu0 %v2628
        %v2630 = vpop.xlane.xlu0 %2629
        %v2631 = vsub.f32 %v2627, %v2630
        %v2632 = vmul.f32 %v2631, 1.442695
        %v2633 = vpow.pop %v2632
        %v2634 = vsel %vm787, %v2633, 0.0
        %2635 = vadd.xlane.f32.xlu0 %v2634
        %v2636 = vpop.xlane.xlu0 %2635
        %v2637 = vrcp.pop %v2636
        %v2638 = vmul.f32 %v2633, %v2637
        %v2639 = vpack.c.bf16 %v2638, %v2638
        %v2640 = vpack.c.bf16 %v2573, %v2573
        %v2642 = vsel %vm787, %v2639, 0
        %v2645 = vsel %vm858, %v2640, 0
        %2647 = vmatprep.subr.bf16.mxu0 0
        %2648 = vmatpush1.bf16.msra.mxu0 %v2645
        %2649 = vmatprep.subr.bf16.mxu0 0
        %2650 = vmatpush1.bf16.msra.mxu0 0
        %2651 = vmatprep.subr.bf16.mxu0 0
        %2652 = vmatpush1.bf16.msra.mxu0 0
        %2653 = vmatprep.subr.bf16.mxu0 0
        %2654 = vmatpush1.bf16.msra.mxu0 0
        %2655 = vmatprep.subr.bf16.mxu0 0
        %2656 = vmatpush1.bf16.msra.mxu0 0
        %2657 = vmatprep.subr.bf16.mxu0 0
        %2658 = vmatpush1.bf16.msra.mxu0 0
        %2659 = vmatprep.subr.bf16.mxu0 0
        %2660 = vmatpush1.bf16.msra.mxu0 0
        %2661 = vmatprep.subr.bf16.mxu0 0
        %2662 = vmatpush1.bf16.msra.mxu0 0
        %2663 = vmatprep.subr.bf16.mxu0 0
        %2664 = vmatpush1.bf16.msra.mxu0 0
        %2665 = vmatprep.subr.bf16.mxu0 0
        %2666 = vmatpush1.bf16.msra.mxu0 0
        %2667 = vmatprep.subr.bf16.mxu0 0
        %2668 = vmatpush1.bf16.msra.mxu0 0
        %2669 = vmatprep.subr.bf16.mxu0 0
        %2670 = vmatpush1.bf16.msra.mxu0 0
        %2671 = vmatprep.subr.bf16.mxu0 0
        %2672 = vmatpush1.bf16.msra.mxu0 0
        %2673 = vmatprep.subr.bf16.mxu0 0
        %2674 = vmatpush1.bf16.msra.mxu0 0
        %2675 = vmatprep.subr.bf16.mxu0 0
        %2676 = vmatpush1.bf16.msra.mxu0 0
        %2677 = vmatprep.subr.bf16.mxu0 0
        %2678 = vmatpush1.bf16.msra.mxu0 0
        %2679 = vmatprep.mubr.bf16.mxu0 0
        %2680 = vmatmul.mubr.bf16.gmra.mrb[0].mxu0 %v2642
        %v2681 = vpop.f32.mrb[0].mxu0
        %v2682 = vadd.f32 0.0, %v2681
        %v2683 = vpop.f32.mrb[0].mxu0
        %v2684 = vpop.f32.mrb[0].mxu0
        %v2685 = vpop.f32.mrb[0].mxu0
        %2686 = vdwg.mxu0
        %s2687 = scalar_lea.vmem %s6, 40
        %v2688 = vld [vmem:[%s2687] sm:$0xff]
        %v2689 = vpack.c.bf16 %v2682, %v2682
        %v2690 = vpack.c.bf16 %v2688, %v2688
        %v2692 = vsel %vm787, %v2689, 0
        %v2695 = vsel %vm858, %v2690, 0
        %2697 = vmatprep.subr.bf16.mxu0 0
        %2698 = vmatpush1.bf16.msra.mxu0 %v2695
        %2699 = vmatprep.subr.bf16.mxu0 0
        %2700 = vmatpush1.bf16.msra.mxu0 0
        %2701 = vmatprep.subr.bf16.mxu0 0
        %2702 = vmatpush1.bf16.msra.mxu0 0
        %2703 = vmatprep.subr.bf16.mxu0 0
        %2704 = vmatpush1.bf16.msra.mxu0 0
        %2705 = vmatprep.subr.bf16.mxu0 0
        %2706 = vmatpush1.bf16.msra.mxu0 0
        %2707 = vmatprep.subr.bf16.mxu0 0
        %2708 = vmatpush1.bf16.msra.mxu0 0
        %2709 = vmatprep.subr.bf16.mxu0 0
        %2710 = vmatpush1.bf16.msra.mxu0 0
        %2711 = vmatprep.subr.bf16.mxu0 0
        %2712 = vmatpush1.bf16.msra.mxu0 0
        %2713 = vmatprep.subr.bf16.mxu0 0
        %2714 = vmatpush1.bf16.msra.mxu0 0
        %2715 = vmatprep.subr.bf16.mxu0 0
        %2716 = vmatpush1.bf16.msra.mxu0 0
        %2717 = vmatprep.subr.bf16.mxu0 0
        %2718 = vmatpush1.bf16.msra.mxu0 0
        %2719 = vmatprep.subr.bf16.mxu0 0
        %2720 = vmatpush1.bf16.msra.mxu0 0
        %2721 = vmatprep.subr.bf16.mxu0 0
        %2722 = vmatpush1.bf16.msra.mxu0 0
        %2723 = vmatprep.subr.bf16.mxu0 0
        %2724 = vmatpush1.bf16.msra.mxu0 0
        %2725 = vmatprep.subr.bf16.mxu0 0
        %2726 = vmatpush1.bf16.msra.mxu0 0
        %2727 = vmatprep.subr.bf16.mxu0 0
        %2728 = vmatpush1.bf16.msra.mxu0 0
        %2729 = vmatprep.mubr.bf16.mxu0 0
        %2730 = vmatmul.mubr.bf16.gmra.mrb[0].mxu0 %v2692
        %v2731 = vpop.f32.mrb[0].mxu0
        %v2732 = vadd.f32 0.0, %v2731
        %v2733 = vpop.f32.mrb[0].mxu0
        %v2734 = vpop.f32.mrb[0].mxu0
        %v2735 = vpop.f32.mrb[0].mxu0
        %2736 = vdwg.mxu0
        %v2738 = vsel %vm787, %v2411, 0
        %v2741 = vsel %vm858, %v2412, 0
        %2743 = vmatprep.subr.bf16.mxu0 0
        %2744 = vmatpush1.bf16.msra.mxu0 %v2741
        %2745 = vmatprep.subr.bf16.mxu0 0
        %2746 = vmatpush1.bf16.msra.mxu0 0
        %2747 = vmatprep.subr.bf16.mxu0 0
        %2748 = vmatpush1.bf16.msra.mxu0 0
        %2749 = vmatprep.subr.bf16.mxu0 0
        %2750 = vmatpush1.bf16.msra.mxu0 0
        %2751 = vmatprep.subr.bf16.mxu0 0
        %2752 = vmatpush1.bf16.msra.mxu0 0
        %2753 = vmatprep.subr.bf16.mxu0 0
        %2754 = vmatpush1.bf16.msra.mxu0 0
        %2755 = vmatprep.subr.bf16.mxu0 0
        %2756 = vmatpush1.bf16.msra.mxu0 0
        %2757 = vmatprep.subr.bf16.mxu0 0
        %2758 = vmatpush1.bf16.msra.mxu0 0
        %2759 = vmatprep.subr.bf16.mxu0 0
        %2760 = vmatpush1.bf16.msra.mxu0 0
        %2761 = vmatprep.subr.bf16.mxu0 0
        %2762 = vmatpush1.bf16.msra.mxu0 0
        %2763 = vmatprep.subr.bf16.mxu0 0
        %2764 = vmatpush1.bf16.msra.mxu0 0
        %2765 = vmatprep.subr.bf16.mxu0 0
        %2766 = vmatpush1.bf16.msra.mxu0 0
        %2767 = vmatprep.subr.bf16.mxu0 0
        %2768 = vmatpush1.bf16.msra.mxu0 0
        %2769 = vmatprep.subr.bf16.mxu0 0
        %2770 = vmatpush1.bf16.msra.mxu0 0
        %2771 = vmatprep.subr.bf16.mxu0 0
        %2772 = vmatpush1.bf16.msra.mxu0 0
        %2773 = vmatprep.subr.bf16.mxu0 0
        %2774 = vmatpush1.bf16.msra.mxu0 0
        %2775 = vmatprep.mubr.bf16.mxu0 0
        %2776 = vmatmul.mubr.bf16.gmra.mrb[0].mxu0 %v2738
        %v2777 = vpop.f32.mrb[0].mxu0
        %v2778 = vadd.f32 %v2732, %v2777
        %v2779 = vpop.f32.mrb[0].mxu0
        %v2780 = vpop.f32.mrb[0].mxu0
        %v2781 = vpop.f32.mrb[0].mxu0
        %2782 = vdwg.mxu0
        %s2783 = scalar_lea.vmem %s4, 448
        %v2784 = vld [vmem:[%s2783] sm:$0xff]
        %v2785 = vld [vmem:[%s2783 + $0x8] sm:$0xff]
        %v2786 = vld [vmem:[%s2783 + $0x10] sm:$0xff]
        %v2787 = vld [vmem:[%s2783 + $0x18] sm:$0xff]
        %v2788 = vpack.c.bf16 %v2785, %v2784
        %v2789 = vpack.c.bf16 %v2787, %v2786
        %s2790 = scalar_lea.vmem %s5, 14
        %v2791 = vld [vmem:[%s2790] sm:$0x1]
        %v2793 = vlaneseq
        %v2794 = vshrl.u32 %v2793, 7
        %v2795 = vsub.s32 0, %v2794
        %v2796 = vrot.slane %v2791, %v2795
        %2798 = vmatprep.subr.bf16.mxu0 0
        %2799 = vmatpush1.bf16.msra.mxu0 %v2788
        %2800 = vmatprep.subr.bf16.mxu0 0
        %2801 = vmatpush1.bf16.msra.mxu0 %v2789
        %2802 = vmatprep.subr.bf16.mxu0 0
        %2803 = vmatpush1.bf16.msra.mxu0 0
        %2804 = vmatprep.subr.bf16.mxu0 0
        %2805 = vmatpush1.bf16.msra.mxu0 0
        %2806 = vmatprep.subr.bf16.mxu0 0
        %2807 = vmatpush1.bf16.msra.mxu0 0
        %2808 = vmatprep.subr.bf16.mxu0 0
        %2809 = vmatpush1.bf16.msra.mxu0 0
        %2810 = vmatprep.subr.bf16.mxu0 0
        %2811 = vmatpush1.bf16.msra.mxu0 0
        %2812 = vmatprep.subr.bf16.mxu0 0
        %2813 = vmatpush1.bf16.msra.mxu0 0
        %2814 = vmatprep.subr.bf16.mxu0 0
        %2815 = vmatpush1.bf16.msra.mxu0 0
        %2816 = vmatprep.subr.bf16.mxu0 0
        %2817 = vmatpush1.bf16.msra.mxu0 0
        %2818 = vmatprep.subr.bf16.mxu0 0
        %2819 = vmatpush1.bf16.msra.mxu0 0
        %2820 = vmatprep.subr.bf16.mxu0 0
        %2821 = vmatpush1.bf16.msra.mxu0 0
        %2822 = vmatprep.subr.bf16.mxu0 0
        %2823 = vmatpush1.bf16.msra.mxu0 0
        %2824 = vmatprep.subr.bf16.mxu0 0
        %2825 = vmatpush1.bf16.msra.mxu0 0
        %2826 = vmatprep.subr.bf16.mxu0 0
        %2827 = vmatpush1.bf16.msra.mxu0 0
        %2828 = vmatprep.subr.bf16.mxu0 0
        %2829 = vmatpush1.bf16.msra.mxu0 0
        %2830 = vmatprep.mubr.bf16.mxu0 0
        %2831 = vmatmul.mubr.bf16.gmra.mrb[0].mxu0 %v2148
        %v2832 = vpop.f32.mrb[0].mxu0
        %v2833 = vadd.f32 %v2796, %v2832
        %v2834 = vpop.f32.mrb[0].mxu0
        %v2835 = vpop.f32.mrb[0].mxu0
        %v2836 = vpop.f32.mrb[0].mxu0
        %2837 = vdwg.mxu0
        %s2838 = scalar_lea.vmem %s4, 576
        %v2839 = vld [vmem:[%s2838] sm:$0xff]
        %v2840 = vld [vmem:[%s2838 + $0x8] sm:$0xff]
        %v2841 = vld [vmem:[%s2838 + $0x10] sm:$0xff]
        %v2842 = vld [vmem:[%s2838 + $0x18] sm:$0xff]
        %v2843 = vpack.c.bf16 %v2840, %v2839
        %v2844 = vpack.c.bf16 %v2842, %v2841
        %s2845 = scalar_lea.vmem %s5, 18
        %v2846 = vld [vmem:[%s2845] sm:$0x1]
        %v2848 = vlaneseq
        %v2849 = vshrl.u32 %v2848, 7
        %v2850 = vsub.s32 0, %v2849
        %v2851 = vrot.slane %v2846, %v2850
        %2853 = vmatprep.subr.bf16.mxu0 0
        %2854 = vmatpush1.bf16.msra.mxu0 %v2843
        %2855 = vmatprep.subr.bf16.mxu0 0
        %2856 = vmatpush1.bf16.msra.mxu0 %v2844
        %2857 = vmatprep.subr.bf16.mxu0 0
        %2858 = vmatpush1.bf16.msra.mxu0 0
        %2859 = vmatprep.subr.bf16.mxu0 0
        %2860 = vmatpush1.bf16.msra.mxu0 0
        %2861 = vmatprep.subr.bf16.mxu0 0
        %2862 = vmatpush1.bf16.msra.mxu0 0
        %2863 = vmatprep.subr.bf16.mxu0 0
        %2864 = vmatpush1.bf16.msra.mxu0 0
        %2865 = vmatprep.subr.bf16.mxu0 0
        %2866 = vmatpush1.bf16.msra.mxu0 0
        %2867 = vmatprep.subr.bf16.mxu0 0
        %2868 = vmatpush1.bf16.msra.mxu0 0
        %2869 = vmatprep.subr.bf16.mxu0 0
        %2870 = vmatpush1.bf16.msra.mxu0 0
        %2871 = vmatprep.subr.bf16.mxu0 0
        %2872 = vmatpush1.bf16.msra.mxu0 0
        %2873 = vmatprep.subr.bf16.mxu0 0
        %2874 = vmatpush1.bf16.msra.mxu0 0
        %2875 = vmatprep.subr.bf16.mxu0 0
        %2876 = vmatpush1.bf16.msra.mxu0 0
        %2877 = vmatprep.subr.bf16.mxu0 0
        %2878 = vmatpush1.bf16.msra.mxu0 0
        %2879 = vmatprep.subr.bf16.mxu0 0
        %2880 = vmatpush1.bf16.msra.mxu0 0
        %2881 = vmatprep.subr.bf16.mxu0 0
        %2882 = vmatpush1.bf16.msra.mxu0 0
        %2883 = vmatprep.subr.bf16.mxu0 0
        %2884 = vmatpush1.bf16.msra.mxu0 0
        %2885 = vmatprep.mubr.bf16.mxu0 0
        %2886 = vmatmul.mubr.bf16.gmra.mrb[0].mxu0 %v2148
        %v2887 = vpop.f32.mrb[0].mxu0
        %v2888 = vadd.f32 %v2851, %v2887
        %v2889 = vpop.f32.mrb[0].mxu0
        %v2890 = vpop.f32.mrb[0].mxu0
        %v2891 = vpop.f32.mrb[0].mxu0
        %2892 = vdwg.mxu0
        %s2893 = scalar_lea.vmem %s4, 704
        %v2894 = vld [vmem:[%s2893] sm:$0xff]
        %v2895 = vld [vmem:[%s2893 + $0x8] sm:$0xff]
        %v2896 = vld [vmem:[%s2893 + $0x10] sm:$0xff]
        %v2897 = vld [vmem:[%s2893 + $0x18] sm:$0xff]
        %v2898 = vpack.c.bf16 %v2895, %v2894
        %v2899 = vpack.c.bf16 %v2897, %v2896
        %s2900 = scalar_lea.vmem %s5, 22
        %v2901 = vld [vmem:[%s2900] sm:$0x1]
        %v2903 = vlaneseq
        %v2904 = vshrl.u32 %v2903, 7
        %v2905 = vsub.s32 0, %v2904
        %v2906 = vrot.slane %v2901, %v2905
        %2908 = vmatprep.subr.bf16.mxu0 0
        %2909 = vmatpush1.bf16.msra.mxu0 %v2898
        %2910 = vmatprep.subr.bf16.mxu0 0
        %2911 = vmatpush1.bf16.msra.mxu0 %v2899
        %2912 = vmatprep.subr.bf16.mxu0 0
        %2913 = vmatpush1.bf16.msra.mxu0 0
        %2914 = vmatprep.subr.bf16.mxu0 0
        %2915 = vmatpush1.bf16.msra.mxu0 0
        %2916 = vmatprep.subr.bf16.mxu0 0
        %2917 = vmatpush1.bf16.msra.mxu0 0
        %2918 = vmatprep.subr.bf16.mxu0 0
        %2919 = vmatpush1.bf16.msra.mxu0 0
        %2920 = vmatprep.subr.bf16.mxu0 0
        %2921 = vmatpush1.bf16.msra.mxu0 0
        %2922 = vmatprep.subr.bf16.mxu0 0
        %2923 = vmatpush1.bf16.msra.mxu0 0
        %2924 = vmatprep.subr.bf16.mxu0 0
        %2925 = vmatpush1.bf16.msra.mxu0 0
        %2926 = vmatprep.subr.bf16.mxu0 0
        %2927 = vmatpush1.bf16.msra.mxu0 0
        %2928 = vmatprep.subr.bf16.mxu0 0
        %2929 = vmatpush1.bf16.msra.mxu0 0
        %2930 = vmatprep.subr.bf16.mxu0 0
        %2931 = vmatpush1.bf16.msra.mxu0 0
        %2932 = vmatprep.subr.bf16.mxu0 0
        %2933 = vmatpush1.bf16.msra.mxu0 0
        %2934 = vmatprep.subr.bf16.mxu0 0
        %2935 = vmatpush1.bf16.msra.mxu0 0
        %2936 = vmatprep.subr.bf16.mxu0 0
        %2937 = vmatpush1.bf16.msra.mxu0 0
        %2938 = vmatprep.subr.bf16.mxu0 0
        %2939 = vmatpush1.bf16.msra.mxu0 0
        %2940 = vmatprep.mubr.bf16.mxu0 0
        %2941 = vmatmul.mubr.bf16.gmra.mrb[0].mxu0 %v2148
        %v2942 = vpop.f32.mrb[0].mxu0
        %v2943 = vadd.f32 %v2906, %v2942
        %v2944 = vpop.f32.mrb[0].mxu0
        %v2945 = vpop.f32.mrb[0].mxu0
        %v2946 = vpop.f32.mrb[0].mxu0
        %2947 = vdwg.mxu0
        %v2948 = vpack.c.bf16 %v2833, %v2833
        %v2949 = vpack.c.bf16 %v2888, %v2888
        %v2951 = vsel %vm787, %v2948, 0
        %v2954 = vsel %vm787, %v2949, 0
        %2956 = vmatprep.subr.bf16.mxu0 0
        %2957 = vmatpush1.bf16.xpose.msra.mxu0 %v2954
        %2958 = vmatprep.subr.bf16.mxu0 0
        %2959 = vmatpush1.bf16.xpose.msra.mxu0 0
        %2960 = vmatprep.subr.bf16.mxu0 0
        %2961 = vmatpush1.bf16.xpose.msra.mxu0 0
        %2962 = vmatprep.subr.bf16.mxu0 0
        %2963 = vmatpush1.bf16.xpose.msra.mxu0 0
        %2964 = vmatprep.subr.bf16.mxu0 0
        %2965 = vmatpush1.bf16.xpose.msra.mxu0 0
        %2966 = vmatprep.subr.bf16.mxu0 0
        %2967 = vmatpush1.bf16.xpose.msra.mxu0 0
        %2968 = vmatprep.subr.bf16.mxu0 0
        %2969 = vmatpush1.bf16.xpose.msra.mxu0 0
        %2970 = vmatprep.subr.bf16.mxu0 0
        %2971 = vmatpush1.bf16.xpose.msra.mxu0 0
        %2972 = vmatprep.subr.bf16.mxu0 0
        %2973 = vmatpush1.bf16.xpose.msra.mxu0 0
        %2974 = vmatprep.subr.bf16.mxu0 0
        %2975 = vmatpush1.bf16.xpose.msra.mxu0 0
        %2976 = vmatprep.subr.bf16.mxu0 0
        %2977 = vmatpush1.bf16.xpose.msra.mxu0 0
        %2978 = vmatprep.subr.bf16.mxu0 0
        %2979 = vmatpush1.bf16.xpose.msra.mxu0 0
        %2980 = vmatprep.subr.bf16.mxu0 0
        %2981 = vmatpush1.bf16.xpose.msra.mxu0 0
        %2982 = vmatprep.subr.bf16.mxu0 0
        %2983 = vmatpush1.bf16.xpose.msra.mxu0 0
        %2984 = vmatprep.subr.bf16.mxu0 0
        %2985 = vmatpush1.bf16.xpose.msra.mxu0 0
        %2986 = vmatprep.subr.bf16.mxu0 0
        %2987 = vmatpush1.bf16.xpose.msra.mxu0 0
        %2988 = vmatprep.mubr.bf16.mxu0 0
        %2989 = vmatmul.mubr.bf16.gmra.mrb[0].mxu0 %v2951
        %v2990 = vpop.f32.mrb[0].mxu0
        %v2991 = vadd.f32 0.0, %v2990
        %v2992 = vpop.f32.mrb[0].mxu0
        %v2993 = vpop.f32.mrb[0].mxu0
        %v2994 = vpop.f32.mrb[0].mxu0
        %2995 = vdwg.mxu0
        %v2996 = vmul.f32 %v2991, 0.35355338
        %v2997 = vadd.f32 %v2996, %v839
        %v2998 = vsel %vm787, %v2997, -inf
        %2999 = vmax.xlane.f32.xlu0 %v2998
        %v3000 = vpop.xlane.xlu0 %2999
        %v3001 = vsub.f32 %v2997, %v3000
        %v3002 = vmul.f32 %v3001, 1.442695
        %v3003 = vpow.pop %v3002
        %v3004 = vsel %vm787, %v3003, 0.0
        %3005 = vadd.xlane.f32.xlu0 %v3004
        %v3006 = vpop.xlane.xlu0 %3005
        %v3007 = vrcp.pop %v3006
        %v3008 = vmul.f32 %v3003, %v3007
        %v3009 = vpack.c.bf16 %v3008, %v3008
        %v3010 = vpack.c.bf16 %v2943, %v2943
        %v3012 = vsel %vm787, %v3009, 0
        %v3015 = vsel %vm858, %v3010, 0
        %3017 = vmatprep.subr.bf16.mxu0 0
        %3018 = vmatpush1.bf16.msra.mxu0 %v3015
        %3019 = vmatprep.subr.bf16.mxu0 0
        %3020 = vmatpush1.bf16.msra.mxu0 0
        %3021 = vmatprep.subr.bf16.mxu0 0
        %3022 = vmatpush1.bf16.msra.mxu0 0
        %3023 = vmatprep.subr.bf16.mxu0 0
        %3024 = vmatpush1.bf16.msra.mxu0 0
        %3025 = vmatprep.subr.bf16.mxu0 0
        %3026 = vmatpush1.bf16.msra.mxu0 0
        %3027 = vmatprep.subr.bf16.mxu0 0
        %3028 = vmatpush1.bf16.msra.mxu0 0
        %3029 = vmatprep.subr.bf16.mxu0 0
        %3030 = vmatpush1.bf16.msra.mxu0 0
        %3031 = vmatprep.subr.bf16.mxu0 0
        %3032 = vmatpush1.bf16.msra.mxu0 0
        %3033 = vmatprep.subr.bf16.mxu0 0
        %3034 = vmatpush1.bf16.msra.mxu0 0
        %3035 = vmatprep.subr.bf16.mxu0 0
        %3036 = vmatpush1.bf16.msra.mxu0 0
        %3037 = vmatprep.subr.bf16.mxu0 0
        %3038 = vmatpush1.bf16.msra.mxu0 0
        %3039 = vmatprep.subr.bf16.mxu0 0
        %3040 = vmatpush1.bf16.msra.mxu0 0
        %3041 = vmatprep.subr.bf16.mxu0 0
        %3042 = vmatpush1.bf16.msra.mxu0 0
        %3043 = vmatprep.subr.bf16.mxu0 0
        %3044 = vmatpush1.bf16.msra.mxu0 0
        %3045 = vmatprep.subr.bf16.mxu0 0
        %3046 = vmatpush1.bf16.msra.mxu0 0
        %3047 = vmatprep.subr.bf16.mxu0 0
        %3048 = vmatpush1.bf16.msra.mxu0 0
        %3049 = vmatprep.mubr.bf16.mxu0 0
        %3050 = vmatmul.mubr.bf16.gmra.mrb[0].mxu0 %v3012
        %v3051 = vpop.f32.mrb[0].mxu0
        %v3052 = vadd.f32 0.0, %v3051
        %v3053 = vpop.f32.mrb[0].mxu0
        %v3054 = vpop.f32.mrb[0].mxu0
        %v3055 = vpop.f32.mrb[0].mxu0
        %3056 = vdwg.mxu0
        %s3057 = scalar_lea.vmem %s6, 48
        %v3058 = vld [vmem:[%s3057] sm:$0xff]
        %v3059 = vpack.c.bf16 %v3052, %v3052
        %v3060 = vpack.c.bf16 %v3058, %v3058
        %v3062 = vsel %vm787, %v3059, 0
        %v3065 = vsel %vm858, %v3060, 0
        %3067 = vmatprep.subr.bf16.mxu0 0
        %3068 = vmatpush1.bf16.msra.mxu0 %v3065
        %3069 = vmatprep.subr.bf16.mxu0 0
        %3070 = vmatpush1.bf16.msra.mxu0 0
        %3071 = vmatprep.subr.bf16.mxu0 0
        %3072 = vmatpush1.bf16.msra.mxu0 0
        %3073 = vmatprep.subr.bf16.mxu0 0
        %3074 = vmatpush1.bf16.msra.mxu0 0
        %3075 = vmatprep.subr.bf16.mxu0 0
        %3076 = vmatpush1.bf16.msra.mxu0 0
        %3077 = vmatprep.subr.bf16.mxu0 0
        %3078 = vmatpush1.bf16.msra.mxu0 0
        %3079 = vmatprep.subr.bf16.mxu0 0
        %3080 = vmatpush1.bf16.msra.mxu0 0
        %3081 = vmatprep.subr.bf16.mxu0 0
        %3082 = vmatpush1.bf16.msra.mxu0 0
        %3083 = vmatprep.subr.bf16.mxu0 0
        %3084 = vmatpush1.bf16.msra.mxu0 0
        %3085 = vmatprep.subr.bf16.mxu0 0
        %3086 = vmatpush1.bf16.msra.mxu0 0
        %3087 = vmatprep.subr.bf16.mxu0 0
        %3088 = vmatpush1.bf16.msra.mxu0 0
        %3089 = vmatprep.subr.bf16.mxu0 0
        %3090 = vmatpush1.bf16.msra.mxu0 0
        %3091 = vmatprep.subr.bf16.mxu0 0
        %3092 = vmatpush1.bf16.msra.mxu0 0
        %3093 = vmatprep.subr.bf16.mxu0 0
        %3094 = vmatpush1.bf16.msra.mxu0 0
        %3095 = vmatprep.subr.bf16.mxu0 0
        %3096 = vmatpush1.bf16.msra.mxu0 0
        %3097 = vmatprep.subr.bf16.mxu0 0
        %3098 = vmatpush1.bf16.msra.mxu0 0
        %3099 = vmatprep.mubr.bf16.mxu0 0
        %3100 = vmatmul.mubr.bf16.gmra.mrb[0].mxu0 %v3062
        %v3101 = vpop.f32.mrb[0].mxu0
        %v3102 = vadd.f32 0.0, %v3101
        %v3103 = vpop.f32.mrb[0].mxu0
        %v3104 = vpop.f32.mrb[0].mxu0
        %v3105 = vpop.f32.mrb[0].mxu0
        %3106 = vdwg.mxu0
        %v3107 = vadd.f32 %v2778, %v3102
        %s3108 = scalar_lea.vmem %s4, 480
        %v3109 = vld [vmem:[%s3108] sm:$0xff]
        %v3110 = vld [vmem:[%s3108 + $0x8] sm:$0xff]
        %v3111 = vld [vmem:[%s3108 + $0x10] sm:$0xff]
        %v3112 = vld [vmem:[%s3108 + $0x18] sm:$0xff]
        %v3113 = vpack.c.bf16 %v3110, %v3109
        %v3114 = vpack.c.bf16 %v3112, %v3111
        %s3115 = scalar_lea.vmem %s5, 15
        %v3116 = vld [vmem:[%s3115] sm:$0x1]
        %v3118 = vlaneseq
        %v3119 = vshrl.u32 %v3118, 7
        %v3120 = vsub.s32 0, %v3119
        %v3121 = vrot.slane %v3116, %v3120
        %3123 = vmatprep.subr.bf16.mxu0 0
        %3124 = vmatpush1.bf16.msra.mxu0 %v3113
        %3125 = vmatprep.subr.bf16.mxu0 0
        %3126 = vmatpush1.bf16.msra.mxu0 %v3114
        %3127 = vmatprep.subr.bf16.mxu0 0
        %3128 = vmatpush1.bf16.msra.mxu0 0
        %3129 = vmatprep.subr.bf16.mxu0 0
        %3130 = vmatpush1.bf16.msra.mxu0 0
        %3131 = vmatprep.subr.bf16.mxu0 0
        %3132 = vmatpush1.bf16.msra.mxu0 0
        %3133 = vmatprep.subr.bf16.mxu0 0
        %3134 = vmatpush1.bf16.msra.mxu0 0
        %3135 = vmatprep.subr.bf16.mxu0 0
        %3136 = vmatpush1.bf16.msra.mxu0 0
        %3137 = vmatprep.subr.bf16.mxu0 0
        %3138 = vmatpush1.bf16.msra.mxu0 0
        %3139 = vmatprep.subr.bf16.mxu0 0
        %3140 = vmatpush1.bf16.msra.mxu0 0
        %3141 = vmatprep.subr.bf16.mxu0 0
        %3142 = vmatpush1.bf16.msra.mxu0 0
        %3143 = vmatprep.subr.bf16.mxu0 0
        %3144 = vmatpush1.bf16.msra.mxu0 0
        %3145 = vmatprep.subr.bf16.mxu0 0
        %3146 = vmatpush1.bf16.msra.mxu0 0
        %3147 = vmatprep.subr.bf16.mxu0 0
        %3148 = vmatpush1.bf16.msra.mxu0 0
        %3149 = vmatprep.subr.bf16.mxu0 0
        %3150 = vmatpush1.bf16.msra.mxu0 0
        %3151 = vmatprep.subr.bf16.mxu0 0
        %3152 = vmatpush1.bf16.msra.mxu0 0
        %3153 = vmatprep.subr.bf16.mxu0 0
        %3154 = vmatpush1.bf16.msra.mxu0 0
        %3155 = vmatprep.mubr.bf16.mxu0 0
        %3156 = vmatmul.mubr.bf16.gmra.mrb[0].mxu0 %v2148
        %v3157 = vpop.f32.mrb[0].mxu0
        %v3158 = vadd.f32 %v3121, %v3157
        %v3159 = vpop.f32.mrb[0].mxu0
        %v3160 = vpop.f32.mrb[0].mxu0
        %v3161 = vpop.f32.mrb[0].mxu0
        %3162 = vdwg.mxu0
        %s3163 = scalar_lea.vmem %s4, 608
        %v3164 = vld [vmem:[%s3163] sm:$0xff]
        %v3165 = vld [vmem:[%s3163 + $0x8] sm:$0xff]
        %v3166 = vld [vmem:[%s3163 + $0x10] sm:$0xff]
        %v3167 = vld [vmem:[%s3163 + $0x18] sm:$0xff]
        %v3168 = vpack.c.bf16 %v3165, %v3164
        %v3169 = vpack.c.bf16 %v3167, %v3166
        %s3170 = scalar_lea.vmem %s5, 19
        %v3171 = vld [vmem:[%s3170] sm:$0x1]
        %v3173 = vlaneseq
        %v3174 = vshrl.u32 %v3173, 7
        %v3175 = vsub.s32 0, %v3174
        %v3176 = vrot.slane %v3171, %v3175
        %3178 = vmatprep.subr.bf16.mxu0 0
        %3179 = vmatpush1.bf16.msra.mxu0 %v3168
        %3180 = vmatprep.subr.bf16.mxu0 0
        %3181 = vmatpush1.bf16.msra.mxu0 %v3169
        %3182 = vmatprep.subr.bf16.mxu0 0
        %3183 = vmatpush1.bf16.msra.mxu0 0
        %3184 = vmatprep.subr.bf16.mxu0 0
        %3185 = vmatpush1.bf16.msra.mxu0 0
        %3186 = vmatprep.subr.bf16.mxu0 0
        %3187 = vmatpush1.bf16.msra.mxu0 0
        %3188 = vmatprep.subr.bf16.mxu0 0
        %3189 = vmatpush1.bf16.msra.mxu0 0
        %3190 = vmatprep.subr.bf16.mxu0 0
        %3191 = vmatpush1.bf16.msra.mxu0 0
        %3192 = vmatprep.subr.bf16.mxu0 0
        %3193 = vmatpush1.bf16.msra.mxu0 0
        %3194 = vmatprep.subr.bf16.mxu0 0
        %3195 = vmatpush1.bf16.msra.mxu0 0
        %3196 = vmatprep.subr.bf16.mxu0 0
        %3197 = vmatpush1.bf16.msra.mxu0 0
        %3198 = vmatprep.subr.bf16.mxu0 0
        %3199 = vmatpush1.bf16.msra.mxu0 0
        %3200 = vmatprep.subr.bf16.mxu0 0
        %3201 = vmatpush1.bf16.msra.mxu0 0
        %3202 = vmatprep.subr.bf16.mxu0 0
        %3203 = vmatpush1.bf16.msra.mxu0 0
        %3204 = vmatprep.subr.bf16.mxu0 0
        %3205 = vmatpush1.bf16.msra.mxu0 0
        %3206 = vmatprep.subr.bf16.mxu0 0
        %3207 = vmatpush1.bf16.msra.mxu0 0
        %3208 = vmatprep.subr.bf16.mxu0 0
        %3209 = vmatpush1.bf16.msra.mxu0 0
        %3210 = vmatprep.mubr.bf16.mxu0 0
        %3211 = vmatmul.mubr.bf16.gmra.mrb[0].mxu0 %v2148
        %v3212 = vpop.f32.mrb[0].mxu0
        %v3213 = vadd.f32 %v3176, %v3212
        %v3214 = vpop.f32.mrb[0].mxu0
        %v3215 = vpop.f32.mrb[0].mxu0
        %v3216 = vpop.f32.mrb[0].mxu0
        %3217 = vdwg.mxu0
        %s3218 = scalar_lea.vmem %s4, 736
        %v3219 = vld [vmem:[%s3218] sm:$0xff]
        %v3220 = vld [vmem:[%s3218 + $0x8] sm:$0xff]
        %v3221 = vld [vmem:[%s3218 + $0x10] sm:$0xff]
        %v3222 = vld [vmem:[%s3218 + $0x18] sm:$0xff]
        %v3223 = vpack.c.bf16 %v3220, %v3219
        %v3224 = vpack.c.bf16 %v3222, %v3221
        %s3225 = scalar_lea.vmem %s5, 23
        %v3226 = vld [vmem:[%s3225] sm:$0x1]
        %v3228 = vlaneseq
        %v3229 = vshrl.u32 %v3228, 7
        %v3230 = vsub.s32 0, %v3229
        %v3231 = vrot.slane %v3226, %v3230
        %3233 = vmatprep.subr.bf16.mxu0 0
        %3234 = vmatpush1.bf16.msra.mxu0 %v3223
        %3235 = vmatprep.subr.bf16.mxu0 0
        %3236 = vmatpush1.bf16.msra.mxu0 %v3224
        %3237 = vmatprep.subr.bf16.mxu0 0
        %3238 = vmatpush1.bf16.msra.mxu0 0
        %3239 = vmatprep.subr.bf16.mxu0 0
        %3240 = vmatpush1.bf16.msra.mxu0 0
        %3241 = vmatprep.subr.bf16.mxu0 0
        %3242 = vmatpush1.bf16.msra.mxu0 0
        %3243 = vmatprep.subr.bf16.mxu0 0
        %3244 = vmatpush1.bf16.msra.mxu0 0
        %3245 = vmatprep.subr.bf16.mxu0 0
        %3246 = vmatpush1.bf16.msra.mxu0 0
        %3247 = vmatprep.subr.bf16.mxu0 0
        %3248 = vmatpush1.bf16.msra.mxu0 0
        %3249 = vmatprep.subr.bf16.mxu0 0
        %3250 = vmatpush1.bf16.msra.mxu0 0
        %3251 = vmatprep.subr.bf16.mxu0 0
        %3252 = vmatpush1.bf16.msra.mxu0 0
        %3253 = vmatprep.subr.bf16.mxu0 0
        %3254 = vmatpush1.bf16.msra.mxu0 0
        %3255 = vmatprep.subr.bf16.mxu0 0
        %3256 = vmatpush1.bf16.msra.mxu0 0
        %3257 = vmatprep.subr.bf16.mxu0 0
        %3258 = vmatpush1.bf16.msra.mxu0 0
        %3259 = vmatprep.subr.bf16.mxu0 0
        %3260 = vmatpush1.bf16.msra.mxu0 0
        %3261 = vmatprep.subr.bf16.mxu0 0
        %3262 = vmatpush1.bf16.msra.mxu0 0
        %3263 = vmatprep.subr.bf16.mxu0 0
        %3264 = vmatpush1.bf16.msra.mxu0 0
        %3265 = vmatprep.mubr.bf16.mxu0 0
        %3266 = vmatmul.mubr.bf16.gmra.mrb[0].mxu0 %v2148
        %v3267 = vpop.f32.mrb[0].mxu0
        %v3268 = vadd.f32 %v3231, %v3267
        %v3269 = vpop.f32.mrb[0].mxu0
        %v3270 = vpop.f32.mrb[0].mxu0
        %v3271 = vpop.f32.mrb[0].mxu0
        %3272 = vdwg.mxu0
        %v3273 = vpack.c.bf16 %v3158, %v3158
        %v3274 = vpack.c.bf16 %v3213, %v3213
        %v3276 = vsel %vm787, %v3273, 0
        %v3279 = vsel %vm787, %v3274, 0
        %3281 = vmatprep.subr.bf16.mxu0 0
        %3282 = vmatpush1.bf16.xpose.msra.mxu0 %v3279
        %3283 = vmatprep.subr.bf16.mxu0 0
        %3284 = vmatpush1.bf16.xpose.msra.mxu0 0
        %3285 = vmatprep.subr.bf16.mxu0 0
        %3286 = vmatpush1.bf16.xpose.msra.mxu0 0
        %3287 = vmatprep.subr.bf16.mxu0 0
        %3288 = vmatpush1.bf16.xpose.msra.mxu0 0
        %3289 = vmatprep.subr.bf16.mxu0 0
        %3290 = vmatpush1.bf16.xpose.msra.mxu0 0
        %3291 = vmatprep.subr.bf16.mxu0 0
        %3292 = vmatpush1.bf16.xpose.msra.mxu0 0
        %3293 = vmatprep.subr.bf16.mxu0 0
        %3294 = vmatpush1.bf16.xpose.msra.mxu0 0
        %3295 = vmatprep.subr.bf16.mxu0 0
        %3296 = vmatpush1.bf16.xpose.msra.mxu0 0
        %3297 = vmatprep.subr.bf16.mxu0 0
        %3298 = vmatpush1.bf16.xpose.msra.mxu0 0
        %3299 = vmatprep.subr.bf16.mxu0 0
        %3300 = vmatpush1.bf16.xpose.msra.mxu0 0
        %3301 = vmatprep.subr.bf16.mxu0 0
        %3302 = vmatpush1.bf16.xpose.msra.mxu0 0
        %3303 = vmatprep.subr.bf16.mxu0 0
        %3304 = vmatpush1.bf16.xpose.msra.mxu0 0
        %3305 = vmatprep.subr.bf16.mxu0 0
        %3306 = vmatpush1.bf16.xpose.msra.mxu0 0
        %3307 = vmatprep.subr.bf16.mxu0 0
        %3308 = vmatpush1.bf16.xpose.msra.mxu0 0
        %3309 = vmatprep.subr.bf16.mxu0 0
        %3310 = vmatpush1.bf16.xpose.msra.mxu0 0
        %3311 = vmatprep.subr.bf16.mxu0 0
        %3312 = vmatpush1.bf16.xpose.msra.mxu0 0
        %3313 = vmatprep.mubr.bf16.mxu0 0
        %3314 = vmatmul.mubr.bf16.gmra.mrb[0].mxu0 %v3276
        %v3315 = vpop.f32.mrb[0].mxu0
        %v3316 = vadd.f32 0.0, %v3315
        %v3317 = vpop.f32.mrb[0].mxu0
        %v3318 = vpop.f32.mrb[0].mxu0
        %v3319 = vpop.f32.mrb[0].mxu0
        %3320 = vdwg.mxu0
        %v3321 = vmul.f32 %v3316, 0.35355338
        %v3322 = vadd.f32 %v3321, %v839
        %v3323 = vsel %vm787, %v3322, -inf
        %3324 = vmax.xlane.f32.xlu0 %v3323
        %v3325 = vpop.xlane.xlu0 %3324
        %v3326 = vsub.f32 %v3322, %v3325
        %v3327 = vmul.f32 %v3326, 1.442695
        %v3328 = vpow.pop %v3327
        %v3329 = vsel %vm787, %v3328, 0.0
        %3330 = vadd.xlane.f32.xlu0 %v3329
        %v3331 = vpop.xlane.xlu0 %3330
        %v3332 = vrcp.pop %v3331
        %v3333 = vmul.f32 %v3328, %v3332
        %v3334 = vpack.c.bf16 %v3333, %v3333
        %v3335 = vpack.c.bf16 %v3268, %v3268
        %v3337 = vsel %vm787, %v3334, 0
        %v3340 = vsel %vm858, %v3335, 0
        %3342 = vmatprep.subr.bf16.mxu0 0
        %3343 = vmatpush1.bf16.msra.mxu0 %v3340
        %3344 = vmatprep.subr.bf16.mxu0 0
        %3345 = vmatpush1.bf16.msra.mxu0 0
        %3346 = vmatprep.subr.bf16.mxu0 0
        %3347 = vmatpush1.bf16.msra.mxu0 0
        %3348 = vmatprep.subr.bf16.mxu0 0
        %3349 = vmatpush1.bf16.msra.mxu0 0
        %3350 = vmatprep.subr.bf16.mxu0 0
        %3351 = vmatpush1.bf16.msra.mxu0 0
        %3352 = vmatprep.subr.bf16.mxu0 0
        %3353 = vmatpush1.bf16.msra.mxu0 0
        %3354 = vmatprep.subr.bf16.mxu0 0
        %3355 = vmatpush1.bf16.msra.mxu0 0
        %3356 = vmatprep.subr.bf16.mxu0 0
        %3357 = vmatpush1.bf16.msra.mxu0 0
        %3358 = vmatprep.subr.bf16.mxu0 0
        %3359 = vmatpush1.bf16.msra.mxu0 0
        %3360 = vmatprep.subr.bf16.mxu0 0
        %3361 = vmatpush1.bf16.msra.mxu0 0
        %3362 = vmatprep.subr.bf16.mxu0 0
        %3363 = vmatpush1.bf16.msra.mxu0 0
        %3364 = vmatprep.subr.bf16.mxu0 0
        %3365 = vmatpush1.bf16.msra.mxu0 0
        %3366 = vmatprep.subr.bf16.mxu0 0
        %3367 = vmatpush1.bf16.msra.mxu0 0
        %3368 = vmatprep.subr.bf16.mxu0 0
        %3369 = vmatpush1.bf16.msra.mxu0 0
        %3370 = vmatprep.subr.bf16.mxu0 0
        %3371 = vmatpush1.bf16.msra.mxu0 0
        %3372 = vmatprep.subr.bf16.mxu0 0
        %3373 = vmatpush1.bf16.msra.mxu0 0
        %3374 = vmatprep.mubr.bf16.mxu0 0
        %3375 = vmatmul.mubr.bf16.gmra.mrb[0].mxu0 %v3337
        %v3376 = vpop.f32.mrb[0].mxu0
        %v3377 = vadd.f32 0.0, %v3376
        %v3378 = vpop.f32.mrb[0].mxu0
        %v3379 = vpop.f32.mrb[0].mxu0
        %v3380 = vpop.f32.mrb[0].mxu0
        %3381 = vdwg.mxu0
        %s3382 = scalar_lea.vmem %s6, 56
        %v3383 = vld [vmem:[%s3382] sm:$0xff]
        %v3384 = vpack.c.bf16 %v3377, %v3377
        %v3385 = vpack.c.bf16 %v3383, %v3383
        %v3387 = vsel %vm787, %v3384, 0
        %v3390 = vsel %vm858, %v3385, 0
        %3392 = vmatprep.subr.bf16.mxu0 0
        %3393 = vmatpush1.bf16.msra.mxu0 %v3390
        %3394 = vmatprep.subr.bf16.mxu0 0
        %3395 = vmatpush1.bf16.msra.mxu0 0
        %3396 = vmatprep.subr.bf16.mxu0 0
        %3397 = vmatpush1.bf16.msra.mxu0 0
        %3398 = vmatprep.subr.bf16.mxu0 0
        %3399 = vmatpush1.bf16.msra.mxu0 0
        %3400 = vmatprep.subr.bf16.mxu0 0
        %3401 = vmatpush1.bf16.msra.mxu0 0
        %3402 = vmatprep.subr.bf16.mxu0 0
        %3403 = vmatpush1.bf16.msra.mxu0 0
        %3404 = vmatprep.subr.bf16.mxu0 0
        %3405 = vmatpush1.bf16.msra.mxu0 0
        %3406 = vmatprep.subr.bf16.mxu0 0
        %3407 = vmatpush1.bf16.msra.mxu0 0
        %3408 = vmatprep.subr.bf16.mxu0 0
        %3409 = vmatpush1.bf16.msra.mxu0 0
        %3410 = vmatprep.subr.bf16.mxu0 0
        %3411 = vmatpush1.bf16.msra.mxu0 0
        %3412 = vmatprep.subr.bf16.mxu0 0
        %3413 = vmatpush1.bf16.msra.mxu0 0
        %3414 = vmatprep.subr.bf16.mxu0 0
        %3415 = vmatpush1.bf16.msra.mxu0 0
        %3416 = vmatprep.subr.bf16.mxu0 0
        %3417 = vmatpush1.bf16.msra.mxu0 0
        %3418 = vmatprep.subr.bf16.mxu0 0
        %3419 = vmatpush1.bf16.msra.mxu0 0
        %3420 = vmatprep.subr.bf16.mxu0 0
        %3421 = vmatpush1.bf16.msra.mxu0 0
        %3422 = vmatprep.subr.bf16.mxu0 0
        %3423 = vmatpush1.bf16.msra.mxu0 0
        %3424 = vmatprep.mubr.bf16.mxu0 0
        %3425 = vmatmul.mubr.bf16.gmra.mrb[0].mxu0 %v3387
        %v3426 = vpop.f32.mrb[0].mxu0
        %v3427 = vadd.f32 0.0, %v3426
        %v3428 = vpop.f32.mrb[0].mxu0
        %v3429 = vpop.f32.mrb[0].mxu0
        %v3430 = vpop.f32.mrb[0].mxu0
        %3431 = vdwg.mxu0
        %v3432 = vadd.f32 %v3107, %v3427
        %s3433 = scalar_lea.vmem %s7, 1
        %v3434 = vld [vmem:[%s3433] sm:$0x1]
        %v3436 = vlaneseq
        %v3437 = vshrl.u32 %v3436, 7
        %v3438 = vsub.s32 0, %v3437
        %v3439 = vrot.slane %v3434, %v3438
        %v3441 = vadd.f32 %v3432, %v3439
        %v3442 = vadd.f32 %v2130, %v3441
        %s3443 = scalar_lea.vmem %s8, 1
        %v3444 = vld [vmem:[%s3443] sm:$0x1]
        %s3445 = scalar_lea.vmem %s9, 1
        %v3446 = vld [vmem:[%s3445] sm:$0x1]
        %v3447 = vsel %vm589, %v3442, 0.0
        %3448 = vadd.xlane.f32.xlu0 %v3447
        %v3449 = vpop.xlane.xlu0 %3448
        %v3450 = vmul.f32 %v3449, %v593
        %v3451 = vsub.f32 %v3442, %v3450
        %v3452 = vmul.f32 %v3451, %v3451
        %v3453 = vsel %vm589, %v3452, 0.0
        %3454 = vadd.xlane.f32.xlu0 %v3453
        %v3455 = vpop.xlane.xlu0 %3454
        %v3456 = vmul.f32 %v3455, %v593
        %v3457 = vadd.f32 %v3456, 1e-12
        %v3458 = vrsqrt.pop %v3457
        %v3459 = vmul.f32 %v3451, %v3458
        %v3461 = vlaneseq
        %v3462 = vshrl.u32 %v3461, 7
        %v3463 = vsub.s32 0, %v3462
        %v3464 = vrot.slane %v3444, %v3463
        %v3466 = vmul.f32 %v3459, %v3464
        %v3468 = vlaneseq
        %v3469 = vshrl.u32 %v3468, 7
        %v3470 = vsub.s32 0, %v3469
        %v3471 = vrot.slane %v3446, %v3470
        %v3473 = vadd.f32 %v3466, %v3471
        %s3474 = scalar_lea.vmem %s10, 32
        %v3475 = vld [vmem:[%s3474] sm:$0xff]
        %v3476 = vld [vmem:[%s3474 + $0x8] sm:$0xff]
        %v3477 = vld [vmem:[%s3474 + $0x10] sm:$0xff]
        %v3478 = vld [vmem:[%s3474 + $0x18] sm:$0xff]
        %v3479 = vpack.c.bf16 %v3473, %v3473
        %v3480 = vpack.c.bf16 %v3476, %v3475
        %v3481 = vpack.c.bf16 %v3478, %v3477
        %s3482 = scalar_lea.vmem %s11, 1
        %v3483 = vld [vmem:[%s3482] sm:$0x1]
        %v3485 = vlaneseq
        %v3486 = vshrl.u32 %v3485, 7
        %v3487 = vsub.s32 0, %v3486
        %v3488 = vrot.slane %v3483, %v3487
        %v3491 = vsel %vm589, %v3479, 0
        %3493 = vmatprep.subr.bf16.mxu0 0
        %3494 = vmatpush1.bf16.msra.mxu0 %v3480
        %3495 = vmatprep.subr.bf16.mxu0 0
        %3496 = vmatpush1.bf16.msra.mxu0 %v3481
        %3497 = vmatprep.subr.bf16.mxu0 0
        %3498 = vmatpush1.bf16.msra.mxu0 0
        %3499 = vmatprep.subr.bf16.mxu0 0
        %3500 = vmatpush1.bf16.msra.mxu0 0
        %3501 = vmatprep.subr.bf16.mxu0 0
        %3502 = vmatpush1.bf16.msra.mxu0 0
        %3503 = vmatprep.subr.bf16.mxu0 0
        %3504 = vmatpush1.bf16.msra.mxu0 0
        %3505 = vmatprep.subr.bf16.mxu0 0
        %3506 = vmatpush1.bf16.msra.mxu0 0
        %3507 = vmatprep.subr.bf16.mxu0 0
        %3508 = vmatpush1.bf16.msra.mxu0 0
        %3509 = vmatprep.subr.bf16.mxu0 0
        %3510 = vmatpush1.bf16.msra.mxu0 0
        %3511 = vmatprep.subr.bf16.mxu0 0
        %3512 = vmatpush1.bf16.msra.mxu0 0
        %3513 = vmatprep.subr.bf16.mxu0 0
        %3514 = vmatpush1.bf16.msra.mxu0 0
        %3515 = vmatprep.subr.bf16.mxu0 0
        %3516 = vmatpush1.bf16.msra.mxu0 0
        %3517 = vmatprep.subr.bf16.mxu0 0
        %3518 = vmatpush1.bf16.msra.mxu0 0
        %3519 = vmatprep.subr.bf16.mxu0 0
        %3520 = vmatpush1.bf16.msra.mxu0 0
        %3521 = vmatprep.subr.bf16.mxu0 0
        %3522 = vmatpush1.bf16.msra.mxu0 0
        %3523 = vmatprep.subr.bf16.mxu0 0
        %3524 = vmatpush1.bf16.msra.mxu0 0
        %3525 = vmatprep.mubr.bf16.mxu0 0
        %3526 = vmatmul.mubr.bf16.gmra.mrb[0].mxu0 %v3491
        %v3527 = vpop.f32.mrb[0].mxu0
        %v3528 = vadd.f32 %v3488, %v3527
        %v3529 = vpop.f32.mrb[0].mxu0
        %v3530 = vpop.f32.mrb[0].mxu0
        %v3531 = vpop.f32.mrb[0].mxu0
        %3532 = vdwg.mxu0
        %v3533 = vmul.f32 %v3528, 0.5
        %v3534 = vmul.f32 %v3528, 0.044715
        %v3535 = vmul.f32 %v3534, %v3528
        %v3536 = vmul.f32 %v3535, %v3528
        %v3537 = vadd.f32 %v3528, %v3536
        %v3538 = vmul.f32 %v3537, 0.7978846
        %v3539 = vtanh.pop %v3538
        %v3540 = vadd.f32 %v3539, 1.0
        %v3541 = vmul.f32 %v3533, %v3540
        %s3542 = scalar_lea.vmem %s12, 128
        %v3543 = vld [vmem:[%s3542] sm:$0xff]
        %v3544 = vld [vmem:[%s3542 + $0x8] sm:$0xff]
        %v3545 = vld [vmem:[%s3542 + $0x10] sm:$0xff]
        %v3546 = vld [vmem:[%s3542 + $0x18] sm:$0xff]
        %v3547 = vld [vmem:[%s3542 + $0x20] sm:$0xff]
        %v3548 = vld [vmem:[%s3542 + $0x28] sm:$0xff]
        %v3549 = vld [vmem:[%s3542 + $0x30] sm:$0xff]
        %v3550 = vld [vmem:[%s3542 + $0x38] sm:$0xff]
        %v3551 = vld [vmem:[%s3542 + $0x40] sm:$0xff]
        %v3552 = vld [vmem:[%s3542 + $0x48] sm:$0xff]
        %v3553 = vld [vmem:[%s3542 + $0x50] sm:$0xff]
        %v3554 = vld [vmem:[%s3542 + $0x58] sm:$0xff]
        %v3555 = vld [vmem:[%s3542 + $0x60] sm:$0xff]
        %v3556 = vld [vmem:[%s3542 + $0x68] sm:$0xff]
        %v3557 = vld [vmem:[%s3542 + $0x70] sm:$0xff]
        %v3558 = vld [vmem:[%s3542 + $0x78] sm:$0xff]
        %v3559 = vpack.c.bf16 %v3541, %v3541
        %v3560 = vpack.c.bf16 %v3544, %v3543
        %v3561 = vpack.c.bf16 %v3546, %v3545
        %v3562 = vpack.c.bf16 %v3548, %v3547
        %v3563 = vpack.c.bf16 %v3550, %v3549
        %v3564 = vpack.c.bf16 %v3552, %v3551
        %v3565 = vpack.c.bf16 %v3554, %v3553
        %v3566 = vpack.c.bf16 %v3556, %v3555
        %v3567 = vpack.c.bf16 %v3558, %v3557
        %s3568 = scalar_lea.vmem %s13, 1
        %v3569 = vld [vmem:[%s3568] sm:$0x1]
        %v3571 = vlaneseq
        %v3572 = vshrl.u32 %v3571, 7
        %v3573 = vsub.s32 0, %v3572
        %v3574 = vrot.slane %v3569, %v3573
        %3576 = vmatprep.subr.bf16.mxu0 0
        %3577 = vmatpush1.bf16.msra.mxu0 %v3560
        %3578 = vmatprep.subr.bf16.mxu0 0
        %3579 = vmatpush1.bf16.msra.mxu0 %v3561
        %3580 = vmatprep.subr.bf16.mxu0 0
        %3581 = vmatpush1.bf16.msra.mxu0 %v3562
        %3582 = vmatprep.subr.bf16.mxu0 0
        %3583 = vmatpush1.bf16.msra.mxu0 %v3563
        %3584 = vmatprep.subr.bf16.mxu0 0
        %3585 = vmatpush1.bf16.msra.mxu0 %v3564
        %3586 = vmatprep.subr.bf16.mxu0 0
        %3587 = vmatpush1.bf16.msra.mxu0 %v3565
        %3588 = vmatprep.subr.bf16.mxu0 0
        %3589 = vmatpush1.bf16.msra.mxu0 %v3566
        %3590 = vmatprep.subr.bf16.mxu0 0
        %3591 = vmatpush1.bf16.msra.mxu0 %v3567
        %3592 = vmatprep.subr.bf16.mxu0 0
        %3593 = vmatpush1.bf16.msra.mxu0 0
        %3594 = vmatprep.subr.bf16.mxu0 0
        %3595 = vmatpush1.bf16.msra.mxu0 0
        %3596 = vmatprep.subr.bf16.mxu0 0
        %3597 = vmatpush1.bf16.msra.mxu0 0
        %3598 = vmatprep.subr.bf16.mxu0 0
        %3599 = vmatpush1.bf16.msra.mxu0 0
        %3600 = vmatprep.subr.bf16.mxu0 0
        %3601 = vmatpush1.bf16.msra.mxu0 0
        %3602 = vmatprep.subr.bf16.mxu0 0
        %3603 = vmatpush1.bf16.msra.mxu0 0
        %3604 = vmatprep.subr.bf16.mxu0 0
        %3605 = vmatpush1.bf16.msra.mxu0 0
        %3606 = vmatprep.subr.bf16.mxu0 0
        %3607 = vmatpush1.bf16.msra.mxu0 0
        %3608 = vmatprep.mubr.bf16.mxu0 0
        %3609 = vmatmul.mubr.bf16.gmra.mrb[0].mxu0 %v3559
        %v3610 = vpop.f32.mrb[0].mxu0
        %v3611 = vadd.f32 %v3574, %v3610
        %v3612 = vpop.f32.mrb[0].mxu0
        %v3613 = vpop.f32.mrb[0].mxu0
        %v3614 = vpop.f32.mrb[0].mxu0
        %3615 = vdwg.mxu0
        %v3616 = vadd.f32 %v3473, %v3611
        %s3617 = scalar_lea.vmem %s14, 1
        %v3618 = vld [vmem:[%s3617] sm:$0x1]
        %s3619 = scalar_lea.vmem %s15, 1
        %v3620 = vld [vmem:[%s3619] sm:$0x1]
        %v3621 = vsel %vm589, %v3616, 0.0
        %3622 = vadd.xlane.f32.xlu0 %v3621
        %v3623 = vpop.xlane.xlu0 %3622
        %v3624 = vmul.f32 %v3623, %v593
        %v3625 = vsub.f32 %v3616, %v3624
        %v3626 = vmul.f32 %v3625, %v3625
        %v3627 = vsel %vm589, %v3626, 0.0
        %3628 = vadd.xlane.f32.xlu0 %v3627
        %v3629 = vpop.xlane.xlu0 %3628
        %v3630 = vmul.f32 %v3629, %v593
        %v3631 = vadd.f32 %v3630, 1e-12
        %v3632 = vrsqrt.pop %v3631
        %v3633 = vmul.f32 %v3625, %v3632
        %v3635 = vlaneseq
        %v3636 = vshrl.u32 %v3635, 7
        %v3637 = vsub.s32 0, %v3636
        %v3638 = vrot.slane %v3618, %v3637
        %v3640 = vmul.f32 %v3633, %v3638
        %v3642 = vlaneseq
        %v3643 = vshrl.u32 %v3642, 7
        %v3644 = vsub.s32 0, %v3643
        %v3645 = vrot.slane %v3620, %v3644
        %v3647 = vadd.f32 %v3640, %v3645
        %v3648 = vld [vmem:[%s16] sm:$0xff]
        %v3649 = vld [vmem:[%s16 + $0x8] sm:$0xff]
        %v3650 = vld [vmem:[%s16 + $0x10] sm:$0xff]
        %v3651 = vld [vmem:[%s16 + $0x18] sm:$0xff]
        %v3652 = vpack.c.bf16 %v3647, %v3647
        %v3653 = vpack.c.bf16 %v3649, %v3648
        %v3654 = vpack.c.bf16 %v3651, %v3650
        %v3655 = vld [vmem:[%s17] sm:$0x1]
        %v3657 = vsel %vm589, %v3652, 0
        %3659 = vmatprep.subr.bf16.mxu0 0
        %3660 = vmatpush1.bf16.msra.mxu0 %v3653
        %3661 = vmatprep.subr.bf16.mxu0 0
        %3662 = vmatpush1.bf16.msra.mxu0 %v3654
        %3663 = vmatprep.subr.bf16.mxu0 0
        %3664 = vmatpush1.bf16.msra.mxu0 0
        %3665 = vmatprep.subr.bf16.mxu0 0
        %3666 = vmatpush1.bf16.msra.mxu0 0
        %3667 = vmatprep.subr.bf16.mxu0 0
        %3668 = vmatpush1.bf16.msra.mxu0 0
        %3669 = vmatprep.subr.bf16.mxu0 0
        %3670 = vmatpush1.bf16.msra.mxu0 0
        %3671 = vmatprep.subr.bf16.mxu0 0
        %3672 = vmatpush1.bf16.msra.mxu0 0
        %3673 = vmatprep.subr.bf16.mxu0 0
        %3674 = vmatpush1.bf16.msra.mxu0 0
        %3675 = vmatprep.subr.bf16.mxu0 0
        %3676 = vmatpush1.bf16.msra.mxu0 0
        %3677 = vmatprep.subr.bf16.mxu0 0
        %3678 = vmatpush1.bf16.msra.mxu0 0
        %3679 = vmatprep.subr.bf16.mxu0 0
        %3680 = vmatpush1.bf16.msra.mxu0 0
        %3681 = vmatprep.subr.bf16.mxu0 0
        %3682 = vmatpush1.bf16.msra.mxu0 0
        %3683 = vmatprep.subr.bf16.mxu0 0
        %3684 = vmatpush1.bf16.msra.mxu0 0
        %3685 = vmatprep.subr.bf16.mxu0 0
        %3686 = vmatpush1.bf16.msra.mxu0 0
        %3687 = vmatprep.subr.bf16.mxu0 0
        %3688 = vmatpush1.bf16.msra.mxu0 0
        %3689 = vmatprep.subr.bf16.mxu0 0
        %3690 = vmatpush1.bf16.msra.mxu0 0
        %3691 = vmatprep.mubr.bf16.mxu0 0
        %3692 = vmatmul.mubr.bf16.gmra.mrb[0].mxu0 %v3657
        %v3693 = vpop.f32.mrb[0].mxu0
        %v3694 = vadd.f32 %v3655, %v3693
        %v3695 = vpop.f32.mrb[0].mxu0
        %v3696 = vpop.f32.mrb[0].mxu0
        %v3697 = vpop.f32.mrb[0].mxu0
        %3698 = vdwg.mxu0
        %v3699 = vtanh.pop %v3694
        %vm3700 = vcmask 253952
        %3701 = vst.msk [vmem:[%s576] sm:$0x1] %vm3700, %v3699
        %s3702 = sand.u32 %s428, 1
        %s3703 = scalar_lea.sflag [#allocation3], %s3702
        %s3704 = sand.u32 %s428, 1
        %s3705 = scalar_lea.vmem [#allocation2], %s3704
        // Predicated region
        $region93: #{text_encoder_forward.1} parent=91 // pred_check
          %p3706 = pneg %p438
        $region94: #{text_encoder_forward.1} parent=91 // pred_check_branch
          %3708 = sbr.rel (%p3706) target = $region96
        $region95: #{text_encoder_forward.1} parent=91 // pred_region
          %s3710 = ssub.s32 16, 16
          %3711 = vsyncadd %s3703, %s3710
          %s3712 = smul.addr %s32, 16
          %s3713 = scalar_lea.hbm %s18, %s3712
          %s3715 = sshll.u32 %s3705, 4
          %s3716 = int_to_ptr.vmem [resolvable:$true] %s3715
          %3718 = dma.vmem_to_hbm [thread:$0]  %s3716, 16, %s3713, %s3703
        $region96: #{text_encoder_forward.1} parent=91 // pred_fallthru
          _
      $region92: #{text_encoder_forward.1} parent=5 // pred_fallthru
        _
      %p3719 = scmp.le.s32.totalorder 2, %s27
      // Predicated region
      $region97: #{text_encoder_forward.1} parent=5 // pred_check
        %p3720 = pneg %p3719
      $region98: #{text_encoder_forward.1} parent=5 // pred_check_branch
        %3722 = sbr.rel (%p3720) target = $region100
      $region99: #{text_encoder_forward.1} parent=5 // pred_region
        %s3723 = ssub.s32 %s27, 2
        // Predicated region
        $region101: #{text_encoder_forward.1} parent=99 // pred_check
          %p3724 = pneg %p444
        $region102: #{text_encoder_forward.1} parent=99 // pred_check_branch
          %3726 = sbr.rel (%p3724) target = $region104
        $region103: #{text_encoder_forward.1} parent=99 // pred_region
          %s3727 = sand.u32 %s429, 1
          %s3728 = scalar_lea.sflag [#allocation3], %s3727
          %s3729 = sand.u32 %s429, 1
          %s3730 = scalar_lea.vmem [#allocation2], %s3729
          %3731 = dma.done %s3728, 16
        $region104: #{text_encoder_forward.1} parent=99 // pred_fallthru
          _
      $region100: #{text_encoder_forward.1} parent=5 // pred_fallthru
        _
    $region6: #{text_encoder_forward.1} parent=1 // loop_footer
      %s31 = sadd.s32 1, %s27
    $region7: #{text_encoder_forward.1} parent=1 // loop_footer_branch
      %26 = sbr.rel target = $region3
    $region8: #{text_encoder_forward.1} parent=1 // loop_exit
      _
    %3732 = vsyncpa [#allocation3], 1
    %s3733 = scalar_lea.sflag [#allocation3], 1
    %3734 = vsyncpa %s3733, 1

</llo_original>
